<compile_context>
chip_gen: v6e
topology: v6e:2x2x1
jax: 0.10.0
libtpu: 0.0.40
codegen_flags: <defaults>
</compile_context>

<pallas_src>
import jax
import jax.numpy as jnp
import numpy as np
from jax.experimental import pallas as pl
from jax.experimental.pallas import tpu as pltpu

# ---------------- config (mirrors cfg.* of the PyTorch module) ----------------
BATCH = 2
SEQ_LEN = 5            # input time length (<= receptive field so output T == 1)
NUM_NODES = 8
INPUT_DIM = 1          # use_norm path requires input_dim == 1 (squeeze(-1))
RESIDUAL_CH = 16
DILATION_CH = 16
SKIP_CH = 32
END_CH = 32
HORIZON = 4
EMBED_DIM = 4
BLOCKS = 2
LAYERS = 2
KERNEL_SIZE = 2
DROPOUT = 0.3          # eval mode -> identity
GCN_BOOL = True
ADDAPTADJ = True
USE_NORM = True
SUPPORTS_LEN = 1       # adaptive adjacency only (supports is None at init)
ORDER = 2
BN_EPS = 1e-5

BN_ROWS = BATCH * NUM_NODES            # rows of the merged (batch*node) state


def _receptive_field():
    rf = 1
    for _ in range(BLOCKS):
        add = KERNEL_SIZE - 1
        for _ in range(LAYERS):
            rf += add
            add *= 2
    return rf


RECEPTIVE_FIELD = _receptive_field()

DILATIONS = []
for _b in range(BLOCKS):
    _d = 1
    for _l in range(LAYERS):
        DILATIONS.append(_d)
        _d *= 2

N_LAYERS = BLOCKS * LAYERS
_VMEM = pl.BlockSpec(memory_space=pltpu.MemorySpace.VMEM)

PARAM_LANES = 128      # every packed piece is <= 128 lanes wide


# ------------------------- packed-parameter layout -----------------------------


def _round8(n):
    return ((n + 7) // 8) * 8


def _build_layout():
    """Static (row_start, n_rows, n_cols) for every piece of the packed buffer.
    Each piece starts on an 8-aligned sublane row and at lane 0."""
    layout = {}
    row = 0

    def add(name, nrows, ncols):
        nonlocal row
        assert ncols <= PARAM_LANES
        layout[name] = (row, nrows, ncols)
        row += _round8(nrows)

    C, D = RESIDUAL_CH, DILATION_CH
    add("n2t", NUM_NODES, EMBED_DIM)
    add("n1t", EMBED_DIM, NUM_NODES)
    add("wstart", SEQ_LEN, RECEPTIVE_FIELD * C)
    add("bstart", BN_ROWS, RECEPTIVE_FIELD * C)
    tc = RECEPTIVE_FIELD
    for l in range(N_LAYERS):
        d = DILATIONS[l]
        t_out = tc - d * (KERNEL_SIZE - 1)
        add(f"wf{l}", tc * C, t_out * D)
        add(f"wg{l}", tc * C, t_out * D)
        add(f"bf{l}", BN_ROWS, t_out * D)
        add(f"bg{l}", BN_ROWS, t_out * D)
        add(f"wskip{l}", t_out * D, SKIP_CH)
        add(f"bskip{l}", BN_ROWS, SKIP_CH)
        if l < N_LAYERS - 1:
            # last layer's gcn/residual/bn output is dead (only `skip` feeds the head)
            add(f"w0{l}", t_out * D, t_out * C)
            add(f"w1{l}", t_out * D, t_out * C)
            add(f"w2{l}", t_out * D, t_out * C)
            add(f"wres{l}", tc * C, t_out * C)
            add(f"bcomb{l}", BN_ROWS, t_out * C)
        tc = t_out
    assert tc == 1, "final time length must be 1 (seq_len <= receptive field)"
    add("wend1", SKIP_CH, END_CH)
    add("bend1", BN_ROWS, END_CH)
    add("wend2", END_CH, HORIZON)
    add("bend2", BN_ROWS, HORIZON)
    return layout, row


LAYOUT, PARAM_ROWS = _build_layout()


# ------------------------------- fused kernel ---------------------------------


def _slab(params_ref, name):
    r, nr, nc = LAYOUT[name]
    return params_ref[r:r + nr, :nc]          # static, 8-aligned row slice, lane 0


def _gwnet_kernel(x_ref, params_ref, out_ref):
    f32 = jnp.float32

    # --- adaptive adjacency (transposed): at[w,v] = softmax_dim1(relu(n1@n2))[v,w]
    # nodevecs are packed pre-transposed so no in-kernel transpose is needed.
    mt = jnp.dot(_slab(params_ref, "n2t"), _slab(params_ref, "n1t"),
                 preferred_element_type=f32)                    # (N,N) == (n1@n2)^T
    rt = jnp.maximum(mt, 0.0)
    rt = rt - jnp.max(rt, axis=0, keepdims=True)
    et = jnp.exp(rt)
    at = et * pl.reciprocal(jnp.sum(et, axis=0, keepdims=True), approx=True)

    # block-diagonal kron(I_B, at): all batch elements share one full-width matmul
    zn = jnp.zeros((NUM_NODES, NUM_NODES), f32)
    at_bd = jnp.concatenate(
        [jnp.concatenate([at if c == r else zn for c in range(BATCH)], axis=1)
         for r in range(BATCH)], axis=0)                        # (B*N, B*N)

    # --- use_norm: per-(b,n) over time; var unbiased=False, eps INSIDE the sqrt
    xr = x_ref[...]                                             # (B*N, T)
    mean = jnp.mean(xr, axis=-1, keepdims=True)
    xc = xr - mean
    std = jnp.sqrt(jnp.mean(xc * xc, axis=-1, keepdims=True) + 1e-5)
    xn = xc / std

    # --- left zero-pad to receptive field + start 1x1 conv (pad folded into wstart)
    x = (jnp.dot(xn, _slab(params_ref, "wstart"), preferred_element_type=f32)
         + _slab(params_ref, "bstart"))                         # (B*N, RF*C)

    skip = jnp.zeros((BN_ROWS, SKIP_CH), f32)
    for l in range(N_LAYERS):
        # gated dilated (1,2) conv: dilation time-shift baked into banded weights,
        # so there are no lane slices and only 2 dots per layer here.
        fa = (jnp.dot(x, _slab(params_ref, f"wf{l}"), preferred_element_type=f32)
              + _slab(params_ref, f"bf{l}"))
        ga = (jnp.dot(x, _slab(params_ref, f"wg{l}"), preferred_element_type=f32)
              + _slab(params_ref, f"bg{l}"))
        xg = jnp.tanh(fa) * pl.reciprocal(1.0 + jnp.exp(-ga), approx=True)

        # skip 1x1 conv: only the last time slot survives to the head (T_final == 1);
        # the weight is zero except that block, so full xg is used (no lane slice).
        skip = (skip
                + jnp.dot(xg, _slab(params_ref, f"wskip{l}"), preferred_element_type=f32)
                + _slab(params_ref, f"bskip{l}"))

        if l < N_LAYERS - 1:
            # mixprop gcn (order 2, single adaptive support).  The concat is folded
            # into W0/W1/W2; the eval BatchNorm affine and the right-aligned residual
            # selection are folded into the weights (wres) and bias (bcomb).
            # TODO(synk): F.dropout training-mode randomness not reproduced (eval => identity).
            x1 = jnp.dot(at_bd, xg, preferred_element_type=f32)
            x2 = jnp.dot(at_bd, x1, preferred_element_type=f32)
            x = (jnp.dot(xg, _slab(params_ref, f"w0{l}"), preferred_element_type=f32)
                 + jnp.dot(x1, _slab(params_ref, f"w1{l}"), preferred_element_type=f32)
                 + jnp.dot(x2, _slab(params_ref, f"w2{l}"), preferred_element_type=f32)
                 + jnp.dot(x, _slab(params_ref, f"wres{l}"), preferred_element_type=f32)
                 + _slab(params_ref, f"bcomb{l}"))

    # --- output head: relu(skip) -> end_conv_1 -> relu -> end_conv_2
    h = jnp.maximum(skip, 0.0)
    h = jnp.maximum(
        jnp.dot(h, _slab(params_ref, "wend1"), preferred_element_type=f32)
        + _slab(params_ref, "bend1"), 0.0)
    h = (jnp.dot(h, _slab(params_ref, "wend2"), preferred_element_type=f32)
         + _slab(params_ref, "bend2"))

    # --- de-normalize (per (b,n) std/mean broadcast across all horizon steps)
    out_ref[...] = h * std + mean


# ------------------------------ parameter setup ------------------------------


def init_params(key):
    keys = iter(jax.random.split(key, 256))

    def nrm(shape, scale=0.1):
        return jax.random.normal(next(keys), shape, jnp.float32) * scale

    p = {}
    p["w_start"] = nrm((INPUT_DIM, RESIDUAL_CH), 0.3)
    p["b_start"] = nrm((RESIDUAL_CH,))
    p["nodevec1"] = jax.random.normal(next(keys), (NUM_NODES, EMBED_DIM), jnp.float32)
    p["nodevec2"] = jax.random.normal(next(keys), (EMBED_DIM, NUM_NODES), jnp.float32)

    gcn_cin = (ORDER * SUPPORTS_LEN + 1) * DILATION_CH
    layers = []
    for _ in range(N_LAYERS):
        lp = {}
        # dilated (1,2) conv taps as two (C_in, C_out) matrices each:
        # wf0/wg0 == weight[..., 0] (applied to x[t]), wf1/wg1 == weight[..., 1] (x[t+d])
        lp["wf0"] = nrm((RESIDUAL_CH, DILATION_CH))
        lp["wf1"] = nrm((RESIDUAL_CH, DILATION_CH))
        lp["bf"] = nrm((DILATION_CH,))
        lp["wg0"] = nrm((RESIDUAL_CH, DILATION_CH))
        lp["wg1"] = nrm((RESIDUAL_CH, DILATION_CH))
        lp["bg"] = nrm((DILATION_CH,))
        lp["w_skip"] = nrm((DILATION_CH, SKIP_CH))
        lp["b_skip"] = nrm((SKIP_CH,))
        lp["w_mlp"] = nrm((gcn_cin, RESIDUAL_CH))
        lp["b_mlp"] = nrm((RESIDUAL_CH,))
        # TODO(synk): residual_convs[i] is constructed in the module but never used on
        # the gcn_bool path, so it is not materialized here.
        # BatchNorm2d folded (eval): y = gamma*(x-rm)/sqrt(rv+eps) + beta
        gamma = 1.0 + nrm((RESIDUAL_CH,))
        beta = nrm((RESIDUAL_CH,))
        rmean = nrm((RESIDUAL_CH,))
        rvar = 1.0 + 0.1 * jax.random.uniform(next(keys), (RESIDUAL_CH,), jnp.float32)
        scale = gamma / jnp.sqrt(rvar + BN_EPS)
        lp["bn_scale"] = scale
        lp["bn_shift"] = beta - rmean * scale
        layers.append(lp)
    p["layers"] = layers
    p["w_end1"] = nrm((SKIP_CH, END_CH))
    p["b_end1"] = nrm((END_CH,))
    p["w_end2"] = nrm((END_CH, HORIZON))
    p["b_end2"] = nrm((HORIZON,))
    return p


def prepare_params(p):
    """One-time offline expansion: pack every weight (time-packed kron, banded
    dilation, zero-padded skip, folded BN/residual, 16-row biases) into a single
    (PARAM_ROWS, 128) f32 slab -> the kernel needs exactly one parameter DMA."""
    assert SEQ_LEN <= RECEPTIVE_FIELD
    C, D = RESIDUAL_CH, DILATION_CH
    buf = np.zeros((PARAM_ROWS, PARAM_LANES), np.float32)

    def put(name, arr):
        arr = np.asarray(arr, np.float32)
        r, nr, nc = LAYOUT[name]
        assert arr.shape == (nr, nc), (name, arr.shape, (nr, nc))
        buf[r:r + nr, :nc] = arr

    def bias_rows(vec):
        return np.tile(np.asarray(vec, np.float32)[None, :], (BN_ROWS, 1))

    put("n2t", np.asarray(p["nodevec2"]).T)
    put("n1t", np.asarray(p["nodevec1"]).T)

    wstart_full = np.kron(np.eye(RECEPTIVE_FIELD, dtype=np.float32),
                          np.asarray(p["w_start"]))               # (RF, RF*C)
    put("wstart", wstart_full[RECEPTIVE_FIELD - SEQ_LEN:, :])     # encodes F.pad(rf-T, 0)
    put("bstart", bias_rows(np.tile(np.asarray(p["b_start"]), RECEPTIVE_FIELD)))

    tc = RECEPTIVE_FIELD
    for l in range(N_LAYERS):
        lp = p["layers"][l]
        d = DILATIONS[l]
        t_out = tc - d * (KERNEL_SIZE - 1)
        # banded dilated-conv weights: tap0 on the (t,t) block, tap1 on the (t+d,t) block
        s0 = np.eye(tc, t_out, k=0, dtype=np.float32)
        sd = np.eye(tc, t_out, k=-d, dtype=np.float32)
        put(f"wf{l}", np.kron(s0, np.asarray(lp["wf0"])) + np.kron(sd, np.asarray(lp["wf1"])))
        put(f"wg{l}", np.kron(s0, np.asarray(lp["wg0"])) + np.kron(sd, np.asarray(lp["wg1"])))
        put(f"bf{l}", bias_rows(np.tile(np.asarray(lp["bf"]), t_out)))
        put(f"bg{l}", bias_rows(np.tile(np.asarray(lp["bg"]), t_out)))
        # skip conv expanded so only the last time slot contributes
        wskip = np.zeros((t_out * D, SKIP_CH), np.float32)
        wskip[(t_out - 1) * D:, :] = np.asarray(lp["w_skip"])
        put(f"wskip{l}", wskip)
        put(f"bskip{l}", bias_rows(lp["b_skip"]))
        if l < N_LAYERS - 1:
            scale = np.asarray(lp["bn_scale"])
            shift = np.asarray(lp["bn_shift"])
            wm = np.asarray(lp["w_mlp"])          # rows: [x | A^T x | A^T A^T x]
            eye_t = np.eye(t_out, dtype=np.float32)
            put(f"w0{l}", np.kron(eye_t, wm[0:D] * scale[None, :]))
            put(f"w1{l}", np.kron(eye_t, wm[D:2 * D] * scale[None, :]))
            put(f"w2{l}", np.kron(eye_t, wm[2 * D:] * scale[None, :]))
            # residual selection (right-aligned time shift) with the BN scale baked in
            put(f"wres{l}", np.kron(sd, np.diag(scale)))
            put(f"bcomb{l}",
                bias_rows(np.tile(np.asarray(lp["b_mlp"]) * scale + shift, t_out)))
        tc = t_out
    assert tc == 1

    put("wend1", p["w_end1"])
    put("bend1", bias_rows(p["b_end1"]))
    put("wend2", p["w_end2"])
    put("bend2", bias_rows(p["b_end2"]))
    return jnp.asarray(buf)


# --------------------------------- forward -----------------------------------


def gwnet_forward(params_packed, inp):
    """inp: (B, T, N, input_dim) — same data as the PyTorch call (`placeholder` unused)."""
    B, T, N, Din = inp.shape
    assert (B, T, N, Din) == (BATCH, SEQ_LEN, NUM_NODES, INPUT_DIM)
    assert USE_NORM and GCN_BOOL and ADDAPTADJ and Din == 1

    # (B, T, N, 1) -> (B*N, T): tiny XLA layout glue; everything else is one kernel.
    x2d = jnp.transpose(inp[..., 0], (0, 2, 1)).reshape(B * N, T)

    out2d = pl.pallas_call(
        _gwnet_kernel,
        out_shape=jax.ShapeDtypeStruct((B * N, HORIZON), jnp.float32),
        in_specs=[_VMEM, _VMEM],          # 2 DMAs total: input rows + packed params
        out_specs=_VMEM,
    )(x2d, params_packed)

    # (B*N, HORIZON) -> (B, HORIZON, N, 1)
    return jnp.transpose(out2d.reshape(B, N, HORIZON), (0, 2, 1))[..., None]


# ----------------------------------- main -------------------------------------

if __name__ == "__main__":
    key = jax.random.PRNGKey(0)
    pkey, xkey = jax.random.split(key)
    params = init_params(pkey)
    packed = prepare_params(params)        # one-time weight expansion (outside jit)
    inp = jax.random.normal(xkey, (BATCH, SEQ_LEN, NUM_NODES, INPUT_DIM), jnp.float32)
    # `placeholder` arg of the PyTorch forward is unused.

    fwd = jax.jit(gwnet_forward)
    out = jax.block_until_ready(fwd(packed, inp))

    assert out.shape == (BATCH, HORIZON, NUM_NODES, 1), out.shape
    assert bool(jnp.all(jnp.isfinite(out)))
    print("KERNEL_OK")
</pallas_src>

<mosaic_0001>
module attributes {stable_mosaic.version = 11 : i64} {
  func.func @_gwnet_kernel(%arg0: memref<16x5xf32, #tpu.memory_space<vmem>>, %arg1: memref<2136x128xf32, #tpu.memory_space<vmem>>, %arg2: memref<16x4xf32, #tpu.memory_space<vmem>>) attributes {dimension_semantics = [], scalar_prefetch = 0 : i64, scratch_operands = 0 : i64, tpu.core_type = #tpu.core_type<tc>} {
    %c0 = arith.constant 0 : index
    %c0_0 = arith.constant 0 : index
    %0 = vector.load %arg1[%c0, %c0_0] : memref<2136x128xf32, #tpu.memory_space<vmem>>, vector<8x4xf32>
    %c8 = arith.constant 8 : index
    %c0_1 = arith.constant 0 : index
    %1 = vector.load %arg1[%c8, %c0_1] : memref<2136x128xf32, #tpu.memory_space<vmem>>, vector<4x8xf32>
    %cst = arith.constant dense<0.000000e+00> : vector<8x8xf32>
    %2 = tpu.matmul %0, %1, %cst {dimension_numbers = #tpu.dot_dimension_numbers<[1], [0], [0], [1], [0, 0, 1, 1], [], []>} : vector<8x4xf32>, vector<4x8xf32>, vector<8x8xf32> -> vector<8x8xf32>
    %cst_2 = arith.constant 0.000000e+00 : f32
    %3 = vector.broadcast %cst_2 : f32 to vector<8x8xf32>
    %4 = arith.maximumf %2, %3 : vector<8x8xf32>
    %cst_3 = arith.constant dense<0xFF800000> : vector<8xf32>
    %5 = vector.multi_reduction <maximumf>, %4, %cst_3 [0] : vector<8x8xf32> to vector<8xf32>
    %6 = vector.shape_cast %5 : vector<8xf32> to vector<1x8xf32>
    %7 = vector.broadcast %6 : vector<1x8xf32> to vector<8x8xf32>
    %8 = arith.subf %4, %7 : vector<8x8xf32>
    %9 = math.exp %8 : vector<8x8xf32>
    %cst_4 = arith.constant dense<0.000000e+00> : vector<8xf32>
    %10 = vector.multi_reduction <add>, %9, %cst_4 [0] : vector<8x8xf32> to vector<8xf32>
    %11 = vector.shape_cast %10 : vector<8xf32> to vector<1x8xf32>
    %12 = tpu.reciprocal %11 {approx = true} : vector<1x8xf32> -> vector<1x8xf32>
    %13 = vector.broadcast %12 : vector<1x8xf32> to vector<8x8xf32>
    %14 = arith.mulf %9, %13 : vector<8x8xf32>
    %cst_5 = arith.constant 0.000000e+00 : f32
    %15 = vector.broadcast %cst_5 : f32 to vector<8x8xf32>
    %16 = tpu.concatenate %14, %15 in 1 : vector<8x8xf32>, vector<8x8xf32> -> vector<8x16xf32>
    %17 = tpu.concatenate %15, %14 in 1 : vector<8x8xf32>, vector<8x8xf32> -> vector<8x16xf32>
    %18 = tpu.concatenate %16, %17 in 0 : vector<8x16xf32>, vector<8x16xf32> -> vector<16x16xf32>
    %c0_6 = arith.constant 0 : index
    %c0_7 = arith.constant 0 : index
    %19 = vector.load %arg0[%c0_6, %c0_7] : memref<16x5xf32, #tpu.memory_space<vmem>>, vector<16x5xf32>
    %cst_8 = arith.constant dense<0.000000e+00> : vector<16xf32>
    %20 = vector.multi_reduction <add>, %19, %cst_8 [1] : vector<16x5xf32> to vector<16xf32>
    %21 = vector.shape_cast %20 : vector<16xf32> to vector<16x1xf32>
    %cst_9 = arith.constant 5.000000e+00 : f32
    %22 = vector.broadcast %cst_9 : f32 to vector<16x1xf32>
    %23 = arith.divf %21, %22 : vector<16x1xf32>
    %24 = vector.broadcast %23 : vector<16x1xf32> to vector<16x5xf32>
    %25 = arith.subf %19, %24 : vector<16x5xf32>
    %26 = arith.mulf %25, %25 : vector<16x5xf32>
    %cst_10 = arith.constant dense<0.000000e+00> : vector<16xf32>
    %27 = vector.multi_reduction <add>, %26, %cst_10 [1] : vector<16x5xf32> to vector<16xf32>
    %28 = vector.shape_cast %27 : vector<16xf32> to vector<16x1xf32>
    %cst_11 = arith.constant 5.000000e+00 : f32
    %29 = vector.broadcast %cst_11 : f32 to vector<16x1xf32>
    %30 = arith.divf %28, %29 : vector<16x1xf32>
    %cst_12 = arith.constant 9.99999974E-6 : f32
    %31 = vector.broadcast %cst_12 : f32 to vector<16x1xf32>
    %32 = arith.addf %30, %31 : vector<16x1xf32>
    %33 = math.sqrt %32 : vector<16x1xf32>
    %34 = vector.broadcast %33 : vector<16x1xf32> to vector<16x5xf32>
    %35 = arith.divf %25, %34 : vector<16x5xf32>
    %c16 = arith.constant 16 : index
    %c0_13 = arith.constant 0 : index
    %36 = vector.load %arg1[%c16, %c0_13] : memref<2136x128xf32, #tpu.memory_space<vmem>>, vector<5x112xf32>
    %cst_14 = arith.constant dense<0.000000e+00> : vector<16x112xf32>
    %37 = tpu.matmul %35, %36, %cst_14 {dimension_numbers = #tpu.dot_dimension_numbers<[1], [0], [0], [1], [0, 0, 1, 1], [], []>} : vector<16x5xf32>, vector<5x112xf32>, vector<16x112xf32> -> vector<16x112xf32>
    %c24 = arith.constant 24 : index
    %c0_15 = arith.constant 0 : index
    %38 = vector.load %arg1[%c24, %c0_15] : memref<2136x128xf32, #tpu.memory_space<vmem>>, vector<16x112xf32>
    %39 = arith.addf %37, %38 : vector<16x112xf32>
    %cst_16 = arith.constant 0.000000e+00 : f32
    %40 = vector.broadcast %cst_16 : f32 to vector<16x32xf32>
    %c40 = arith.constant 40 : index
    %c0_17 = arith.constant 0 : index
    %41 = vector.load %arg1[%c40, %c0_17] : memref<2136x128xf32, #tpu.memory_space<vmem>>, vector<112x96xf32>
    %cst_18 = arith.constant dense<0.000000e+00> : vector<16x96xf32>
    %42 = tpu.matmul %39, %41, %cst_18 {dimension_numbers = #tpu.dot_dimension_numbers<[1], [0], [0], [1], [0, 0, 1, 1], [], []>} : vector<16x112xf32>, vector<112x96xf32>, vector<16x96xf32> -> vector<16x96xf32>
    %c264 = arith.constant 264 : index
    %c0_19 = arith.constant 0 : index
    %43 = vector.load %arg1[%c264, %c0_19] : memref<2136x128xf32, #tpu.memory_space<vmem>>, vector<16x96xf32>
    %44 = arith.addf %42, %43 : vector<16x96xf32>
    %c152 = arith.constant 152 : index
    %c0_20 = arith.constant 0 : index
    %45 = vector.load %arg1[%c152, %c0_20] : memref<2136x128xf32, #tpu.memory_space<vmem>>, vector<112x96xf32>
    %cst_21 = arith.constant dense<0.000000e+00> : vector<16x96xf32>
    %46 = tpu.matmul %39, %45, %cst_21 {dimension_numbers = #tpu.dot_dimension_numbers<[1], [0], [0], [1], [0, 0, 1, 1], [], []>} : vector<16x112xf32>, vector<112x96xf32>, vector<16x96xf32> -> vector<16x96xf32>
    %c280 = arith.constant 280 : index
    %c0_22 = arith.constant 0 : index
    %47 = vector.load %arg1[%c280, %c0_22] : memref<2136x128xf32, #tpu.memory_space<vmem>>, vector<16x96xf32>
    %48 = arith.addf %46, %47 : vector<16x96xf32>
    %49 = math.tanh %44 : vector<16x96xf32>
    %cst_23 = arith.constant 0.000000e+00 : f32
    %50 = vector.broadcast %cst_23 : f32 to vector<16x96xf32>
    %51 = arith.subf %50, %48 : vector<16x96xf32>
    %52 = math.exp %51 : vector<16x96xf32>
    %cst_24 = arith.constant 1.000000e+00 : f32
    %53 = vector.broadcast %cst_24 : f32 to vector<16x96xf32>
    %54 = arith.addf %53, %52 : vector<16x96xf32>
    %55 = tpu.reciprocal %54 {approx = true} : vector<16x96xf32> -> vector<16x96xf32>
    %56 = arith.mulf %49, %55 : vector<16x96xf32>
    %c296 = arith.constant 296 : index
    %c0_25 = arith.constant 0 : index
    %57 = vector.load %arg1[%c296, %c0_25] : memref<2136x128xf32, #tpu.memory_space<vmem>>, vector<96x32xf32>
    %cst_26 = arith.constant dense<0.000000e+00> : vector<16x32xf32>
    %58 = tpu.matmul %56, %57, %cst_26 {dimension_numbers = #tpu.dot_dimension_numbers<[1], [0], [0], [1], [0, 0, 1, 1], [], []>} : vector<16x96xf32>, vector<96x32xf32>, vector<16x32xf32> -> vector<16x32xf32>
    %59 = arith.addf %40, %58 : vector<16x32xf32>
    %c392 = arith.constant 392 : index
    %c0_27 = arith.constant 0 : index
    %60 = vector.load %arg1[%c392, %c0_27] : memref<2136x128xf32, #tpu.memory_space<vmem>>, vector<16x32xf32>
    %61 = arith.addf %59, %60 : vector<16x32xf32>
    %cst_28 = arith.constant dense<0.000000e+00> : vector<16x96xf32>
    %62 = tpu.matmul %18, %56, %cst_28 {dimension_numbers = #tpu.dot_dimension_numbers<[1], [0], [0], [1], [0, 0, 1, 1], [], []>} : vector<16x16xf32>, vector<16x96xf32>, vector<16x96xf32> -> vector<16x96xf32>
    %cst_29 = arith.constant dense<0.000000e+00> : vector<16x96xf32>
    %63 = tpu.matmul %18, %62, %cst_29 {dimension_numbers = #tpu.dot_dimension_numbers<[1], [0], [0], [1], [0, 0, 1, 1], [], []>} : vector<16x16xf32>, vector<16x96xf32>, vector<16x96xf32> -> vector<16x96xf32>
    %c408 = arith.constant 408 : index
    %c0_30 = arith.constant 0 : index
    %64 = vector.load %arg1[%c408, %c0_30] : memref<2136x128xf32, #tpu.memory_space<vmem>>, vector<96x96xf32>
    %cst_31 = arith.constant dense<0.000000e+00> : vector<16x96xf32>
    %65 = tpu.matmul %56, %64, %cst_31 {dimension_numbers = #tpu.dot_dimension_numbers<[1], [0], [0], [1], [0, 0, 1, 1], [], []>} : vector<16x96xf32>, vector<96x96xf32>, vector<16x96xf32> -> vector<16x96xf32>
    %c504 = arith.constant 504 : index
    %c0_32 = arith.constant 0 : index
    %66 = vector.load %arg1[%c504, %c0_32] : memref<2136x128xf32, #tpu.memory_space<vmem>>, vector<96x96xf32>
    %cst_33 = arith.constant dense<0.000000e+00> : vector<16x96xf32>
    %67 = tpu.matmul %62, %66, %cst_33 {dimension_numbers = #tpu.dot_dimension_numbers<[1], [0], [0], [1], [0, 0, 1, 1], [], []>} : vector<16x96xf32>, vector<96x96xf32>, vector<16x96xf32> -> vector<16x96xf32>
    %68 = arith.addf %65, %67 : vector<16x96xf32>
    %c600 = arith.constant 600 : index
    %c0_34 = arith.constant 0 : index
    %69 = vector.load %arg1[%c600, %c0_34] : memref<2136x128xf32, #tpu.memory_space<vmem>>, vector<96x96xf32>
    %cst_35 = arith.constant dense<0.000000e+00> : vector<16x96xf32>
    %70 = tpu.matmul %63, %69, %cst_35 {dimension_numbers = #tpu.dot_dimension_numbers<[1], [0], [0], [1], [0, 0, 1, 1], [], []>} : vector<16x96xf32>, vector<96x96xf32>, vector<16x96xf32> -> vector<16x96xf32>
    %71 = arith.addf %68, %70 : vector<16x96xf32>
    %c696 = arith.constant 696 : index
    %c0_36 = arith.constant 0 : index
    %72 = vector.load %arg1[%c696, %c0_36] : memref<2136x128xf32, #tpu.memory_space<vmem>>, vector<112x96xf32>
    %cst_37 = arith.constant dense<0.000000e+00> : vector<16x96xf32>
    %73 = tpu.matmul %39, %72, %cst_37 {dimension_numbers = #tpu.dot_dimension_numbers<[1], [0], [0], [1], [0, 0, 1, 1], [], []>} : vector<16x112xf32>, vector<112x96xf32>, vector<16x96xf32> -> vector<16x96xf32>
    %74 = arith.addf %71, %73 : vector<16x96xf32>
    %c808 = arith.constant 808 : index
    %c0_38 = arith.constant 0 : index
    %75 = vector.load %arg1[%c808, %c0_38] : memref<2136x128xf32, #tpu.memory_space<vmem>>, vector<16x96xf32>
    %76 = arith.addf %74, %75 : vector<16x96xf32>
    %c824 = arith.constant 824 : index
    %c0_39 = arith.constant 0 : index
    %77 = vector.load %arg1[%c824, %c0_39] : memref<2136x128xf32, #tpu.memory_space<vmem>>, vector<96x64xf32>
    %cst_40 = arith.constant dense<0.000000e+00> : vector<16x64xf32>
    %78 = tpu.matmul %76, %77, %cst_40 {dimension_numbers = #tpu.dot_dimension_numbers<[1], [0], [0], [1], [0, 0, 1, 1], [], []>} : vector<16x96xf32>, vector<96x64xf32>, vector<16x64xf32> -> vector<16x64xf32>
    %c1016 = arith.constant 1016 : index
    %c0_41 = arith.constant 0 : index
    %79 = vector.load %arg1[%c1016, %c0_41] : memref<2136x128xf32, #tpu.memory_space<vmem>>, vector<16x64xf32>
    %80 = arith.addf %78, %79 : vector<16x64xf32>
    %c920 = arith.constant 920 : index
    %c0_42 = arith.constant 0 : index
    %81 = vector.load %arg1[%c920, %c0_42] : memref<2136x128xf32, #tpu.memory_space<vmem>>, vector<96x64xf32>
    %cst_43 = arith.constant dense<0.000000e+00> : vector<16x64xf32>
    %82 = tpu.matmul %76, %81, %cst_43 {dimension_numbers = #tpu.dot_dimension_numbers<[1], [0], [0], [1], [0, 0, 1, 1], [], []>} : vector<16x96xf32>, vector<96x64xf32>, vector<16x64xf32> -> vector<16x64xf32>
    %c1032 = arith.constant 1032 : index
    %c0_44 = arith.constant 0 : index
    %83 = vector.load %arg1[%c1032, %c0_44] : memref<2136x128xf32, #tpu.memory_space<vmem>>, vector<16x64xf32>
    %84 = arith.addf %82, %83 : vector<16x64xf32>
    %85 = math.tanh %80 : vector<16x64xf32>
    %cst_45 = arith.constant 0.000000e+00 : f32
    %86 = vector.broadcast %cst_45 : f32 to vector<16x64xf32>
    %87 = arith.subf %86, %84 : vector<16x64xf32>
    %88 = math.exp %87 : vector<16x64xf32>
    %cst_46 = arith.constant 1.000000e+00 : f32
    %89 = vector.broadcast %cst_46 : f32 to vector<16x64xf32>
    %90 = arith.addf %89, %88 : vector<16x64xf32>
    %91 = tpu.reciprocal %90 {approx = true} : vector<16x64xf32> -> vector<16x64xf32>
    %92 = arith.mulf %85, %91 : vector<16x64xf32>
    %c1048 = arith.constant 1048 : index
    %c0_47 = arith.constant 0 : index
    %93 = vector.load %arg1[%c1048, %c0_47] : memref<2136x128xf32, #tpu.memory_space<vmem>>, vector<64x32xf32>
    %cst_48 = arith.constant dense<0.000000e+00> : vector<16x32xf32>
    %94 = tpu.matmul %92, %93, %cst_48 {dimension_numbers = #tpu.dot_dimension_numbers<[1], [0], [0], [1], [0, 0, 1, 1], [], []>} : vector<16x64xf32>, vector<64x32xf32>, vector<16x32xf32> -> vector<16x32xf32>
    %95 = arith.addf %61, %94 : vector<16x32xf32>
    %c1112 = arith.constant 1112 : index
    %c0_49 = arith.constant 0 : index
    %96 = vector.load %arg1[%c1112, %c0_49] : memref<2136x128xf32, #tpu.memory_space<vmem>>, vector<16x32xf32>
    %97 = arith.addf %95, %96 : vector<16x32xf32>
    %cst_50 = arith.constant dense<0.000000e+00> : vector<16x64xf32>
    %98 = tpu.matmul %18, %92, %cst_50 {dimension_numbers = #tpu.dot_dimension_numbers<[1], [0], [0], [1], [0, 0, 1, 1], [], []>} : vector<16x16xf32>, vector<16x64xf32>, vector<16x64xf32> -> vector<16x64xf32>
    %cst_51 = arith.constant dense<0.000000e+00> : vector<16x64xf32>
    %99 = tpu.matmul %18, %98, %cst_51 {dimension_numbers = #tpu.dot_dimension_numbers<[1], [0], [0], [1], [0, 0, 1, 1], [], []>} : vector<16x16xf32>, vector<16x64xf32>, vector<16x64xf32> -> vector<16x64xf32>
    %c1128 = arith.constant 1128 : index
    %c0_52 = arith.constant 0 : index
    %100 = vector.load %arg1[%c1128, %c0_52] : memref<2136x128xf32, #tpu.memory_space<vmem>>, vector<64x64xf32>
    %cst_53 = arith.constant dense<0.000000e+00> : vector<16x64xf32>
    %101 = tpu.matmul %92, %100, %cst_53 {dimension_numbers = #tpu.dot_dimension_numbers<[1], [0], [0], [1], [0, 0, 1, 1], [], []>} : vector<16x64xf32>, vector<64x64xf32>, vector<16x64xf32> -> vector<16x64xf32>
    %c1192 = arith.constant 1192 : index
    %c0_54 = arith.constant 0 : index
    %102 = vector.load %arg1[%c1192, %c0_54] : memref<2136x128xf32, #tpu.memory_space<vmem>>, vector<64x64xf32>
    %cst_55 = arith.constant dense<0.000000e+00> : vector<16x64xf32>
    %103 = tpu.matmul %98, %102, %cst_55 {dimension_numbers = #tpu.dot_dimension_numbers<[1], [0], [0], [1], [0, 0, 1, 1], [], []>} : vector<16x64xf32>, vector<64x64xf32>, vector<16x64xf32> -> vector<16x64xf32>
    %104 = arith.addf %101, %103 : vector<16x64xf32>
    %c1256 = arith.constant 1256 : index
    %c0_56 = arith.constant 0 : index
    %105 = vector.load %arg1[%c1256, %c0_56] : memref<2136x128xf32, #tpu.memory_space<vmem>>, vector<64x64xf32>
    %cst_57 = arith.constant dense<0.000000e+00> : vector<16x64xf32>
    %106 = tpu.matmul %99, %105, %cst_57 {dimension_numbers = #tpu.dot_dimension_numbers<[1], [0], [0], [1], [0, 0, 1, 1], [], []>} : vector<16x64xf32>, vector<64x64xf32>, vector<16x64xf32> -> vector<16x64xf32>
    %107 = arith.addf %104, %106 : vector<16x64xf32>
    %c1320 = arith.constant 1320 : index
    %c0_58 = arith.constant 0 : index
    %108 = vector.load %arg1[%c1320, %c0_58] : memref<2136x128xf32, #tpu.memory_space<vmem>>, vector<96x64xf32>
    %cst_59 = arith.constant dense<0.000000e+00> : vector<16x64xf32>
    %109 = tpu.matmul %76, %108, %cst_59 {dimension_numbers = #tpu.dot_dimension_numbers<[1], [0], [0], [1], [0, 0, 1, 1], [], []>} : vector<16x96xf32>, vector<96x64xf32>, vector<16x64xf32> -> vector<16x64xf32>
    %110 = arith.addf %107, %109 : vector<16x64xf32>
    %c1416 = arith.constant 1416 : index
    %c0_60 = arith.constant 0 : index
    %111 = vector.load %arg1[%c1416, %c0_60] : memref<2136x128xf32, #tpu.memory_space<vmem>>, vector<16x64xf32>
    %112 = arith.addf %110, %111 : vector<16x64xf32>
    %c1432 = arith.constant 1432 : index
    %c0_61 = arith.constant 0 : index
    %113 = vector.load %arg1[%c1432, %c0_61] : memref<2136x128xf32, #tpu.memory_space<vmem>>, vector<64x48xf32>
    %cst_62 = arith.constant dense<0.000000e+00> : vector<16x48xf32>
    %114 = tpu.matmul %112, %113, %cst_62 {dimension_numbers = #tpu.dot_dimension_numbers<[1], [0], [0], [1], [0, 0, 1, 1], [], []>} : vector<16x64xf32>, vector<64x48xf32>, vector<16x48xf32> -> vector<16x48xf32>
    %c1560 = arith.constant 1560 : index
    %c0_63 = arith.constant 0 : index
    %115 = vector.load %arg1[%c1560, %c0_63] : memref<2136x128xf32, #tpu.memory_space<vmem>>, vector<16x48xf32>
    %116 = arith.addf %114, %115 : vector<16x48xf32>
    %c1496 = arith.constant 1496 : index
    %c0_64 = arith.constant 0 : index
    %117 = vector.load %arg1[%c1496, %c0_64] : memref<2136x128xf32, #tpu.memory_space<vmem>>, vector<64x48xf32>
    %cst_65 = arith.constant dense<0.000000e+00> : vector<16x48xf32>
    %118 = tpu.matmul %112, %117, %cst_65 {dimension_numbers = #tpu.dot_dimension_numbers<[1], [0], [0], [1], [0, 0, 1, 1], [], []>} : vector<16x64xf32>, vector<64x48xf32>, vector<16x48xf32> -> vector<16x48xf32>
    %c1576 = arith.constant 1576 : index
    %c0_66 = arith.constant 0 : index
    %119 = vector.load %arg1[%c1576, %c0_66] : memref<2136x128xf32, #tpu.memory_space<vmem>>, vector<16x48xf32>
    %120 = arith.addf %118, %119 : vector<16x48xf32>
    %121 = math.tanh %116 : vector<16x48xf32>
    %cst_67 = arith.constant 0.000000e+00 : f32
    %122 = vector.broadcast %cst_67 : f32 to vector<16x48xf32>
    %123 = arith.subf %122, %120 : vector<16x48xf32>
    %124 = math.exp %123 : vector<16x48xf32>
    %cst_68 = arith.constant 1.000000e+00 : f32
    %125 = vector.broadcast %cst_68 : f32 to vector<16x48xf32>
    %126 = arith.addf %125, %124 : vector<16x48xf32>
    %127 = tpu.reciprocal %126 {approx = true} : vector<16x48xf32> -> vector<16x48xf32>
    %128 = arith.mulf %121, %127 : vector<16x48xf32>
    %c1592 = arith.constant 1592 : index
    %c0_69 = arith.constant 0 : index
    %129 = vector.load %arg1[%c1592, %c0_69] : memref<2136x128xf32, #tpu.memory_space<vmem>>, vector<48x32xf32>
    %cst_70 = arith.constant dense<0.000000e+00> : vector<16x32xf32>
    %130 = tpu.matmul %128, %129, %cst_70 {dimension_numbers = #tpu.dot_dimension_numbers<[1], [0], [0], [1], [0, 0, 1, 1], [], []>} : vector<16x48xf32>, vector<48x32xf32>, vector<16x32xf32> -> vector<16x32xf32>
    %131 = arith.addf %97, %130 : vector<16x32xf32>
    %c1640 = arith.constant 1640 : index
    %c0_71 = arith.constant 0 : index
    %132 = vector.load %arg1[%c1640, %c0_71] : memref<2136x128xf32, #tpu.memory_space<vmem>>, vector<16x32xf32>
    %133 = arith.addf %131, %132 : vector<16x32xf32>
    %cst_72 = arith.constant dense<0.000000e+00> : vector<16x48xf32>
    %134 = tpu.matmul %18, %128, %cst_72 {dimension_numbers = #tpu.dot_dimension_numbers<[1], [0], [0], [1], [0, 0, 1, 1], [], []>} : vector<16x16xf32>, vector<16x48xf32>, vector<16x48xf32> -> vector<16x48xf32>
    %cst_73 = arith.constant dense<0.000000e+00> : vector<16x48xf32>
    %135 = tpu.matmul %18, %134, %cst_73 {dimension_numbers = #tpu.dot_dimension_numbers<[1], [0], [0], [1], [0, 0, 1, 1], [], []>} : vector<16x16xf32>, vector<16x48xf32>, vector<16x48xf32> -> vector<16x48xf32>
    %c1656 = arith.constant 1656 : index
    %c0_74 = arith.constant 0 : index
    %136 = vector.load %arg1[%c1656, %c0_74] : memref<2136x128xf32, #tpu.memory_space<vmem>>, vector<48x48xf32>
    %cst_75 = arith.constant dense<0.000000e+00> : vector<16x48xf32>
    %137 = tpu.matmul %128, %136, %cst_75 {dimension_numbers = #tpu.dot_dimension_numbers<[1], [0], [0], [1], [0, 0, 1, 1], [], []>} : vector<16x48xf32>, vector<48x48xf32>, vector<16x48xf32> -> vector<16x48xf32>
    %c1704 = arith.constant 1704 : index
    %c0_76 = arith.constant 0 : index
    %138 = vector.load %arg1[%c1704, %c0_76] : memref<2136x128xf32, #tpu.memory_space<vmem>>, vector<48x48xf32>
    %cst_77 = arith.constant dense<0.000000e+00> : vector<16x48xf32>
    %139 = tpu.matmul %134, %138, %cst_77 {dimension_numbers = #tpu.dot_dimension_numbers<[1], [0], [0], [1], [0, 0, 1, 1], [], []>} : vector<16x48xf32>, vector<48x48xf32>, vector<16x48xf32> -> vector<16x48xf32>
    %140 = arith.addf %137, %139 : vector<16x48xf32>
    %c1752 = arith.constant 1752 : index
    %c0_78 = arith.constant 0 : index
    %141 = vector.load %arg1[%c1752, %c0_78] : memref<2136x128xf32, #tpu.memory_space<vmem>>, vector<48x48xf32>
    %cst_79 = arith.constant dense<0.000000e+00> : vector<16x48xf32>
    %142 = tpu.matmul %135, %141, %cst_79 {dimension_numbers = #tpu.dot_dimension_numbers<[1], [0], [0], [1], [0, 0, 1, 1], [], []>} : vector<16x48xf32>, vector<48x48xf32>, vector<16x48xf32> -> vector<16x48xf32>
    %143 = arith.addf %140, %142 : vector<16x48xf32>
    %c1800 = arith.constant 1800 : index
    %c0_80 = arith.constant 0 : index
    %144 = vector.load %arg1[%c1800, %c0_80] : memref<2136x128xf32, #tpu.memory_space<vmem>>, vector<64x48xf32>
    %cst_81 = arith.constant dense<0.000000e+00> : vector<16x48xf32>
    %145 = tpu.matmul %112, %144, %cst_81 {dimension_numbers = #tpu.dot_dimension_numbers<[1], [0], [0], [1], [0, 0, 1, 1], [], []>} : vector<16x64xf32>, vector<64x48xf32>, vector<16x48xf32> -> vector<16x48xf32>
    %146 = arith.addf %143, %145 : vector<16x48xf32>
    %c1864 = arith.constant 1864 : index
    %c0_82 = arith.constant 0 : index
    %147 = vector.load %arg1[%c1864, %c0_82] : memref<2136x128xf32, #tpu.memory_space<vmem>>, vector<16x48xf32>
    %148 = arith.addf %146, %147 : vector<16x48xf32>
    %c1880 = arith.constant 1880 : index
    %c0_83 = arith.constant 0 : index
    %149 = vector.load %arg1[%c1880, %c0_83] : memref<2136x128xf32, #tpu.memory_space<vmem>>, vector<48x16xf32>
    %cst_84 = arith.constant dense<0.000000e+00> : vector<16x16xf32>
    %150 = tpu.matmul %148, %149, %cst_84 {dimension_numbers = #tpu.dot_dimension_numbers<[1], [0], [0], [1], [0, 0, 1, 1], [], []>} : vector<16x48xf32>, vector<48x16xf32>, vector<16x16xf32> -> vector<16x16xf32>
    %c1976 = arith.constant 1976 : index
    %c0_85 = arith.constant 0 : index
    %151 = vector.load %arg1[%c1976, %c0_85] : memref<2136x128xf32, #tpu.memory_space<vmem>>, vector<16x16xf32>
    %152 = arith.addf %150, %151 : vector<16x16xf32>
    %c1928 = arith.constant 1928 : index
    %c0_86 = arith.constant 0 : index
    %153 = vector.load %arg1[%c1928, %c0_86] : memref<2136x128xf32, #tpu.memory_space<vmem>>, vector<48x16xf32>
    %cst_87 = arith.constant dense<0.000000e+00> : vector<16x16xf32>
    %154 = tpu.matmul %148, %153, %cst_87 {dimension_numbers = #tpu.dot_dimension_numbers<[1], [0], [0], [1], [0, 0, 1, 1], [], []>} : vector<16x48xf32>, vector<48x16xf32>, vector<16x16xf32> -> vector<16x16xf32>
    %c1992 = arith.constant 1992 : index
    %c0_88 = arith.constant 0 : index
    %155 = vector.load %arg1[%c1992, %c0_88] : memref<2136x128xf32, #tpu.memory_space<vmem>>, vector<16x16xf32>
    %156 = arith.addf %154, %155 : vector<16x16xf32>
    %157 = math.tanh %152 : vector<16x16xf32>
    %cst_89 = arith.constant 0.000000e+00 : f32
    %158 = vector.broadcast %cst_89 : f32 to vector<16x16xf32>
    %159 = arith.subf %158, %156 : vector<16x16xf32>
    %160 = math.exp %159 : vector<16x16xf32>
    %cst_90 = arith.constant 1.000000e+00 : f32
    %161 = vector.broadcast %cst_90 : f32 to vector<16x16xf32>
    %162 = arith.addf %161, %160 : vector<16x16xf32>
    %163 = tpu.reciprocal %162 {approx = true} : vector<16x16xf32> -> vector<16x16xf32>
    %164 = arith.mulf %157, %163 : vector<16x16xf32>
    %c2008 = arith.constant 2008 : index
    %c0_91 = arith.constant 0 : index
    %165 = vector.load %arg1[%c2008, %c0_91] : memref<2136x128xf32, #tpu.memory_space<vmem>>, vector<16x32xf32>
    %cst_92 = arith.constant dense<0.000000e+00> : vector<16x32xf32>
    %166 = tpu.matmul %164, %165, %cst_92 {dimension_numbers = #tpu.dot_dimension_numbers<[1], [0], [0], [1], [0, 0, 1, 1], [], []>} : vector<16x16xf32>, vector<16x32xf32>, vector<16x32xf32> -> vector<16x32xf32>
    %167 = arith.addf %133, %166 : vector<16x32xf32>
    %c2024 = arith.constant 2024 : index
    %c0_93 = arith.constant 0 : index
    %168 = vector.load %arg1[%c2024, %c0_93] : memref<2136x128xf32, #tpu.memory_space<vmem>>, vector<16x32xf32>
    %169 = arith.addf %167, %168 : vector<16x32xf32>
    %cst_94 = arith.constant 0.000000e+00 : f32
    %170 = vector.broadcast %cst_94 : f32 to vector<16x32xf32>
    %171 = arith.maximumf %169, %170 : vector<16x32xf32>
    %c2040 = arith.constant 2040 : index
    %c0_95 = arith.constant 0 : index
    %172 = vector.load %arg1[%c2040, %c0_95] : memref<2136x128xf32, #tpu.memory_space<vmem>>, vector<32x32xf32>
    %cst_96 = arith.constant dense<0.000000e+00> : vector<16x32xf32>
    %173 = tpu.matmul %171, %172, %cst_96 {dimension_numbers = #tpu.dot_dimension_numbers<[1], [0], [0], [1], [0, 0, 1, 1], [], []>} : vector<16x32xf32>, vector<32x32xf32>, vector<16x32xf32> -> vector<16x32xf32>
    %c2072 = arith.constant 2072 : index
    %c0_97 = arith.constant 0 : index
    %174 = vector.load %arg1[%c2072, %c0_97] : memref<2136x128xf32, #tpu.memory_space<vmem>>, vector<16x32xf32>
    %175 = arith.addf %173, %174 : vector<16x32xf32>
    %cst_98 = arith.constant 0.000000e+00 : f32
    %176 = vector.broadcast %cst_98 : f32 to vector<16x32xf32>
    %177 = arith.maximumf %175, %176 : vector<16x32xf32>
    %c2088 = arith.constant 2088 : index
    %c0_99 = arith.constant 0 : index
    %178 = vector.load %arg1[%c2088, %c0_99] : memref<2136x128xf32, #tpu.memory_space<vmem>>, vector<32x4xf32>
    %cst_100 = arith.constant dense<0.000000e+00> : vector<16x4xf32>
    %179 = tpu.matmul %177, %178, %cst_100 {dimension_numbers = #tpu.dot_dimension_numbers<[1], [0], [0], [1], [0, 0, 1, 1], [], []>} : vector<16x32xf32>, vector<32x4xf32>, vector<16x4xf32> -> vector<16x4xf32>
    %c2120 = arith.constant 2120 : index
    %c0_101 = arith.constant 0 : index
    %180 = vector.load %arg1[%c2120, %c0_101] : memref<2136x128xf32, #tpu.memory_space<vmem>>, vector<16x4xf32>
    %181 = arith.addf %179, %180 : vector<16x4xf32>
    %182 = vector.broadcast %33 : vector<16x1xf32> to vector<16x4xf32>
    %183 = arith.mulf %181, %182 : vector<16x4xf32>
    %184 = vector.broadcast %23 : vector<16x1xf32> to vector<16x4xf32>
    %185 = arith.addf %183, %184 : vector<16x4xf32>
    %c0_102 = arith.constant 0 : index
    %c0_103 = arith.constant 0 : index
    %186 = vector.load %arg2[%c0_102, %c0_103] : memref<16x4xf32, #tpu.memory_space<vmem>>, vector<16x4xf32>
    tpu.vector_store %arg2[%c0_102, %c0_103], %185 {strides = array<i32>} : memref<16x4xf32, #tpu.memory_space<vmem>>, vector<16x4xf32>,
    return
  }
}

</mosaic_0001>

<llo_original>
// kernel: gwnet_forward.1
$region0: #{gwnet_forward.1}
  #allocation0 [shape = 'u32[]', space=smem, size = 0x4, offset = 0x4, fixed_abs, tag = 'smem constant byte address 0x4 - core index']
  #allocation1 [shape = 'u32[144,128]{1,0:T(1,128)}', space=vmem, size = 0x12000, scoped, tag = 'internal scratch']
  %s0 = inlined_call_operand.vmem [shape: f32[16,5], index: 0, kind: input, shape index: {}]
  %s1 = inlined_call_operand.hbm [shape: f32[2136,128], index: 1, kind: input, shape index: {}]
  %s2 = inlined_call_operand.vmem [shape: f32[16,4], index: 2, kind: output, shape index: {}]
  %s3 = sld [smem:[#allocation0]]
  $region22: #{gwnet_forward.1} parent=0
    _
  %s5 = ssub.s32 1, %s3
  %s6 = scalar_select 0, %s5, %s3
  $region1: #{gwnet_forward.1} parent=0
    #allocation2 [shape = 'u8[1093632]{0}', space=vmem, size = 0x10b000, scoped, tag = 'input window, operand 1, single buffered']
    #allocation3 [shape = 's32[1]{0}', space=sflag, size = 0x4, scoped, tag = 'scoped memory for gwnet_forward.1']
    %7 = vsyncpa [#allocation3], 0
    // Predicated region
    $region2: #{gwnet_forward.1} parent=1 // pred_check
      _
    $region3: #{gwnet_forward.1} parent=1 // pred_check_branch
      %9 = sbr.rel (0) target = $region5
    $region4: #{gwnet_forward.1} parent=1 // pred_region
      _
    $region5: #{gwnet_forward.1} parent=1 // pred_fallthru
      _
    // Predicated region
    $region6: #{gwnet_forward.1} parent=1 // pred_check
      _
    $region7: #{gwnet_forward.1} parent=1 // pred_check_branch
      %11 = sbr.rel (0) target = $region9
    $region8: #{gwnet_forward.1} parent=1 // pred_region
      %s13 = ssub.s32 34176, 34176
      %14 = vsyncadd [#allocation3], %s13
      %s15 = sshll.u32 [#allocation2], 4
      %s16 = int_to_ptr.vmem [resolvable:$true] %s15
      %21 = dma.hbm_to_vmem [thread:$0]  %s1, 34176, %s16, [#allocation3], 128, 128, 8
    $region9: #{gwnet_forward.1} parent=1 // pred_fallthru
      _
    // Predicated region
    $region10: #{gwnet_forward.1} parent=1 // pred_check
      _
    $region11: #{gwnet_forward.1} parent=1 // pred_check_branch
      %23 = sbr.rel (0) target = $region13
    $region12: #{gwnet_forward.1} parent=1 // pred_region
      %24 = dma.done [#allocation3], 34176
    $region13: #{gwnet_forward.1} parent=1 // pred_fallthru
      _
    %v25 = vld [vmem:[#allocation2] sm:$0xff]
    %v26 = vld [vmem:[#allocation2 + $0x8] sm:$0xf]
    %vm27 = vcmask 31744
    %v29 = vsel %vm27, %v25, 0
    %vm31 = vcmask 1043456
    %v33 = vsel %vm31, %v26, 0
    %35 = vmatprep.subr.mxu0 0.0
    %36 = vmatpush1.msra.mxu0 0.0
    %37 = vmatprep.subr.mxu0 0.0
    %38 = vmatpush1.msra.mxu0 0.0
    %39 = vmatprep.subr.mxu0 0.0
    %40 = vmatpush1.msra.mxu0 0.0
    %41 = vmatprep.subr.mxu0 0.0
    %42 = vmatpush1.msra.mxu0 0.0
    %43 = vmatprep.subr.mxu0 0.0
    %44 = vmatpush1.msra.mxu0 0.0
    %45 = vmatprep.subr.mxu0 0.0
    %46 = vmatpush1.msra.mxu0 0.0
    %47 = vmatprep.subr.mxu0 0.0
    %48 = vmatpush1.msra.mxu0 0.0
    %49 = vmatprep.subr.mxu0 0.0
    %50 = vmatpush1.msra.mxu0 0.0
    %51 = vmatprep.subr.mxu0 0.0
    %52 = vmatpush1.msra.mxu0 0.0
    %53 = vmatprep.subr.mxu0 0.0
    %54 = vmatpush1.msra.mxu0 0.0
    %55 = vmatprep.subr.mxu0 0.0
    %56 = vmatpush1.msra.mxu0 0.0
    %57 = vmatprep.subr.mxu0 0.0
    %58 = vmatpush1.msra.mxu0 0.0
    %59 = vmatprep.subr.mxu0 0.0
    %60 = vmatpush1.msra.mxu0 0.0
    %61 = vmatprep.subr.mxu0 0.0
    %62 = vmatpush1.msra.mxu0 0.0
    %63 = vmatprep.subr.mxu0 0.0
    %64 = vmatpush1.msra.mxu0 0.0
    %65 = vmatprep.subr.mxu0 0.0
    %66 = vmatpush1.msra.mxu0 %v33
    %67 = vmatprep.subr.mxu0 0.0
    %68 = vmatpush2.msra.mxu0 0.0
    %69 = vmatprep.subr.mxu0 0.0
    %70 = vmatpush2.msra.mxu0 0.0
    %71 = vmatprep.subr.mxu0 0.0
    %72 = vmatpush2.msra.mxu0 0.0
    %73 = vmatprep.subr.mxu0 0.0
    %74 = vmatpush2.msra.mxu0 0.0
    %75 = vmatprep.subr.mxu0 0.0
    %76 = vmatpush2.msra.mxu0 0.0
    %77 = vmatprep.subr.mxu0 0.0
    %78 = vmatpush2.msra.mxu0 0.0
    %79 = vmatprep.subr.mxu0 0.0
    %80 = vmatpush2.msra.mxu0 0.0
    %81 = vmatprep.subr.mxu0 0.0
    %82 = vmatpush2.msra.mxu0 0.0
    %83 = vmatprep.subr.mxu0 0.0
    %84 = vmatpush2.msra.mxu0 0.0
    %85 = vmatprep.subr.mxu0 0.0
    %86 = vmatpush2.msra.mxu0 0.0
    %87 = vmatprep.subr.mxu0 0.0
    %88 = vmatpush2.msra.mxu0 0.0
    %89 = vmatprep.subr.mxu0 0.0
    %90 = vmatpush2.msra.mxu0 0.0
    %91 = vmatprep.subr.mxu0 0.0
    %92 = vmatpush2.msra.mxu0 0.0
    %93 = vmatprep.subr.mxu0 0.0
    %94 = vmatpush2.msra.mxu0 0.0
    %95 = vmatprep.subr.mxu0 0.0
    %96 = vmatpush2.msra.mxu0 0.0
    %97 = vmatprep.subr.mxu0 0.0
    %98 = vmatpush2.msra.mxu0 0.0
    %99 = vmatprep.mubr.f32.mxu0 0.0
    %100 = vmatmul.mubr.f32.gmra.mxu0 %v29
    %v101 = vpop.f32.mrf.mxu0
    %v102 = vadd.f32 0.0, %v101
    %v103 = vpop.f32.mrf.mxu0
    %104 = vdwg.mxu0
    %v105 = vmax.f32 %v102, 0.0
    %vm106 = vcmask 64512
    %v107 = vsel %vm106, %v105, -inf
    %v108 = vrot.slane %v107, 4
    %v109 = vmax.f32 %v107, %v108
    %v110 = vrot.slane %v109, 2
    %v111 = vmax.f32 %v109, %v110
    %v112 = vrot.slane %v111, 1
    %v113 = vmax.f32 %v111, %v112
    %v114 = vsub.f32 %v105, %v113
    %v115 = vmul.f32 %v114, 1.442695
    %v116 = vpow.pop %v115
    %v117 = vsel %vm106, %v116, 0.0
    %v118 = vrot.slane %v117, 4
    %v119 = vadd.f32 %v117, %v118
    %v120 = vrot.slane %v119, 2
    %v121 = vadd.f32 %v119, %v120
    %v122 = vrot.slane %v121, 1
    %v123 = vadd.f32 %v121, %v122
    %v124 = vrcp.pop %v123
    %v125 = vmul.f32 %v116, %v124
    %v126 = vsel %vm106, %v125, 0.0
    %128 = vrot.lane.b32.xlu0 %v125, 8
    %v129 = vpop.permute.xlu0 %128
    %v131 = vsel %vm106, 0.0, %v129
    %v132 = vld [vmem:[%s0] sm:$0xff]
    %v133 = vld [vmem:[%s0 + $0x8] sm:$0xff]
    %vm134 = vcmask 39936
    %v135 = vsel %vm134, %v132, 0.0
    %136 = vadd.xlane.f32.xlu0 %v135
    %v137 = vpop.xlane.xlu0 %136
    %v138 = vsel %vm134, %v133, 0.0
    %139 = vadd.xlane.f32.xlu0 %v138
    %v140 = vpop.xlane.xlu0 %139
    %v141 = vrcp.pop 5.0
    %v142 = vmul.f32 %v137, %v141
    %v143 = vmul.f32 %v140, %v141
    %v144 = vsub.f32 %v132, %v142
    %v145 = vsub.f32 %v133, %v143
    %v146 = vmul.f32 %v144, %v144
    %v147 = vmul.f32 %v145, %v145
    %v148 = vsel %vm134, %v146, 0.0
    %149 = vadd.xlane.f32.xlu0 %v148
    %v150 = vpop.xlane.xlu0 %149
    %v151 = vsel %vm134, %v147, 0.0
    %152 = vadd.xlane.f32.xlu0 %v151
    %v153 = vpop.xlane.xlu0 %152
    %v154 = vmul.f32 %v150, %v141
    %v155 = vmul.f32 %v153, %v141
    %v156 = vadd.f32 %v154, 1e-05
    %v157 = vadd.f32 %v155, 1e-05
    %v158 = vrsqrt.pop %v156
    %v159 = vmul.f32 %v156, %v158
    %vm160 = vcmp.eq.f32.partialorder %v156, inf
    %v161 = vsel %vm160, %v156, %v159
    %vm162 = vcmp.eq.f32.partialorder %v156, 0.0
    %v163 = vand.u32 %v156, 2147483648
    %v164 = vsel %vm162, %v163, %v161
    %v165 = vrsqrt.pop %v157
    %v166 = vmul.f32 %v157, %v165
    %vm167 = vcmp.eq.f32.partialorder %v157, inf
    %v168 = vsel %vm167, %v157, %v166
    %vm169 = vcmp.eq.f32.partialorder %v157, 0.0
    %v170 = vand.u32 %v157, 2147483648
    %v171 = vsel %vm169, %v170, %v168
    %v172 = vrcp.pop %v164
    %v173 = vmul.f32 %v144, %v172
    %v174 = vrcp.pop %v171
    %v175 = vmul.f32 %v145, %v174
    %v176 = vld [vmem:[#allocation2 + $0x10] sm:$0x1f]
    %v177 = vld [vmem:[#allocation2 + $0x18] sm:$0xff]
    %v178 = vld [vmem:[#allocation2 + $0x20] sm:$0xff]
    %v180 = vsel %vm134, %v173, 0
    %v183 = vsel %vm134, %v175, 0
    %vm185 = vcmask 1044480
    %v187 = vsel %vm185, %v176, 0
    %189 = vmatprep.subr.mxu0 0.0
    %190 = vmatpush1.msra.mxu0 0.0
    %191 = vmatprep.subr.mxu0 0.0
    %192 = vmatpush1.msra.mxu0 0.0
    %193 = vmatprep.subr.mxu0 0.0
    %194 = vmatpush1.msra.mxu0 0.0
    %195 = vmatprep.subr.mxu0 0.0
    %196 = vmatpush1.msra.mxu0 0.0
    %197 = vmatprep.subr.mxu0 0.0
    %198 = vmatpush1.msra.mxu0 0.0
    %199 = vmatprep.subr.mxu0 0.0
    %200 = vmatpush1.msra.mxu0 0.0
    %201 = vmatprep.subr.mxu0 0.0
    %202 = vmatpush1.msra.mxu0 0.0
    %203 = vmatprep.subr.mxu0 0.0
    %204 = vmatpush1.msra.mxu0 0.0
    %205 = vmatprep.subr.mxu0 0.0
    %206 = vmatpush1.msra.mxu0 0.0
    %207 = vmatprep.subr.mxu0 0.0
    %208 = vmatpush1.msra.mxu0 0.0
    %209 = vmatprep.subr.mxu0 0.0
    %210 = vmatpush1.msra.mxu0 0.0
    %211 = vmatprep.subr.mxu0 0.0
    %212 = vmatpush1.msra.mxu0 0.0
    %213 = vmatprep.subr.mxu0 0.0
    %214 = vmatpush1.msra.mxu0 0.0
    %215 = vmatprep.subr.mxu0 0.0
    %216 = vmatpush1.msra.mxu0 0.0
    %217 = vmatprep.subr.mxu0 0.0
    %218 = vmatpush1.msra.mxu0 0.0
    %219 = vmatprep.subr.mxu0 0.0
    %220 = vmatpush1.msra.mxu0 %v187
    %221 = vmatprep.subr.mxu0 0.0
    %222 = vmatpush2.msra.mxu0 0.0
    %223 = vmatprep.subr.mxu0 0.0
    %224 = vmatpush2.msra.mxu0 0.0
    %225 = vmatprep.subr.mxu0 0.0
    %226 = vmatpush2.msra.mxu0 0.0
    %227 = vmatprep.subr.mxu0 0.0
    %228 = vmatpush2.msra.mxu0 0.0
    %229 = vmatprep.subr.mxu0 0.0
    %230 = vmatpush2.msra.mxu0 0.0
    %231 = vmatprep.subr.mxu0 0.0
    %232 = vmatpush2.msra.mxu0 0.0
    %233 = vmatprep.subr.mxu0 0.0
    %234 = vmatpush2.msra.mxu0 0.0
    %235 = vmatprep.subr.mxu0 0.0
    %236 = vmatpush2.msra.mxu0 0.0
    %237 = vmatprep.subr.mxu0 0.0
    %238 = vmatpush2.msra.mxu0 0.0
    %239 = vmatprep.subr.mxu0 0.0
    %240 = vmatpush2.msra.mxu0 0.0
    %241 = vmatprep.subr.mxu0 0.0
    %242 = vmatpush2.msra.mxu0 0.0
    %243 = vmatprep.subr.mxu0 0.0
    %244 = vmatpush2.msra.mxu0 0.0
    %245 = vmatprep.subr.mxu0 0.0
    %246 = vmatpush2.msra.mxu0 0.0
    %247 = vmatprep.subr.mxu0 0.0
    %248 = vmatpush2.msra.mxu0 0.0
    %249 = vmatprep.subr.mxu0 0.0
    %250 = vmatpush2.msra.mxu0 0.0
    %251 = vmatprep.subr.mxu0 0.0
    %252 = vmatpush2.msra.mxu0 0.0
    %253 = vmatprep.mubr.f32.mxu0 0.0
    %254 = vmatmul.mubr.f32.gmra.mxu0 %v180
    %v255 = vpop.f32.mrf.mxu0
    %v256 = vadd.f32 %v177, %v255
    %v257 = vpop.f32.mrf.mxu0
    %258 = vmatprep.mubr.f32.mxu0 0.0
    %259 = vmatmul.mubr.f32.gmra.mxu0 %v183
    %v260 = vpop.f32.mrf.mxu0
    %v261 = vadd.f32 %v178, %v260
    %v262 = vpop.f32.mrf.mxu0
    %263 = vdwg.mxu0
    %v264 = vld [vmem:[#allocation2 + $0x28] sm:$0xff]
    %v265 = vld [vmem:[#allocation2 + $0x30] sm:$0xff]
    %v266 = vld [vmem:[#allocation2 + $0x38] sm:$0xff]
    %v267 = vld [vmem:[#allocation2 + $0x40] sm:$0xff]
    %v268 = vld [vmem:[#allocation2 + $0x48] sm:$0xff]
    %v269 = vld [vmem:[#allocation2 + $0x50] sm:$0xff]
    %v270 = vld [vmem:[#allocation2 + $0x58] sm:$0xff]
    %v271 = vld [vmem:[#allocation2 + $0x60] sm:$0xff]
    %v272 = vld [vmem:[#allocation2 + $0x68] sm:$0xff]
    %v273 = vld [vmem:[#allocation2 + $0x70] sm:$0xff]
    %v274 = vld [vmem:[#allocation2 + $0x78] sm:$0xff]
    %v275 = vld [vmem:[#allocation2 + $0x80] sm:$0xff]
    %v276 = vld [vmem:[#allocation2 + $0x88] sm:$0xff]
    %v277 = vld [vmem:[#allocation2 + $0x90] sm:$0xff]
    %v278 = vld [vmem:[#allocation2 + $0x108] sm:$0xff]
    %v279 = vld [vmem:[#allocation2 + $0x110] sm:$0xff]
    %vm280 = vcmask 916480
    %v282 = vsel %vm280, %v256, 0
    %v285 = vsel %vm280, %v261, 0
    %287 = vmatprep.subr.mxu0 0.0
    %288 = vmatpush1.msra.mxu0 0.0
    %289 = vmatprep.subr.mxu0 0.0
    %290 = vmatpush1.msra.mxu0 0.0
    %291 = vmatprep.subr.mxu0 0.0
    %292 = vmatpush1.msra.mxu0 %v277
    %293 = vmatprep.subr.mxu0 0.0
    %294 = vmatpush1.msra.mxu0 %v276
    %295 = vmatprep.subr.mxu0 0.0
    %296 = vmatpush1.msra.mxu0 %v275
    %297 = vmatprep.subr.mxu0 0.0
    %298 = vmatpush1.msra.mxu0 %v274
    %299 = vmatprep.subr.mxu0 0.0
    %300 = vmatpush1.msra.mxu0 %v273
    %301 = vmatprep.subr.mxu0 0.0
    %302 = vmatpush1.msra.mxu0 %v272
    %303 = vmatprep.subr.mxu0 0.0
    %304 = vmatpush1.msra.mxu0 %v271
    %305 = vmatprep.subr.mxu0 0.0
    %306 = vmatpush1.msra.mxu0 %v270
    %307 = vmatprep.subr.mxu0 0.0
    %308 = vmatpush1.msra.mxu0 %v269
    %309 = vmatprep.subr.mxu0 0.0
    %310 = vmatpush1.msra.mxu0 %v268
    %311 = vmatprep.subr.mxu0 0.0
    %312 = vmatpush1.msra.mxu0 %v267
    %313 = vmatprep.subr.mxu0 0.0
    %314 = vmatpush1.msra.mxu0 %v266
    %315 = vmatprep.subr.mxu0 0.0
    %316 = vmatpush1.msra.mxu0 %v265
    %317 = vmatprep.subr.mxu0 0.0
    %318 = vmatpush1.msra.mxu0 %v264
    %319 = vmatprep.subr.mxu0 0.0
    %320 = vmatpush2.msra.mxu0 0.0
    %321 = vmatprep.subr.mxu0 0.0
    %322 = vmatpush2.msra.mxu0 0.0
    %323 = vmatprep.subr.mxu0 0.0
    %324 = vmatpush2.msra.mxu0 0.0
    %325 = vmatprep.subr.mxu0 0.0
    %326 = vmatpush2.msra.mxu0 0.0
    %327 = vmatprep.subr.mxu0 0.0
    %328 = vmatpush2.msra.mxu0 0.0
    %329 = vmatprep.subr.mxu0 0.0
    %330 = vmatpush2.msra.mxu0 0.0
    %331 = vmatprep.subr.mxu0 0.0
    %332 = vmatpush2.msra.mxu0 0.0
    %333 = vmatprep.subr.mxu0 0.0
    %334 = vmatpush2.msra.mxu0 0.0
    %335 = vmatprep.subr.mxu0 0.0
    %336 = vmatpush2.msra.mxu0 0.0
    %337 = vmatprep.subr.mxu0 0.0
    %338 = vmatpush2.msra.mxu0 0.0
    %339 = vmatprep.subr.mxu0 0.0
    %340 = vmatpush2.msra.mxu0 0.0
    %341 = vmatprep.subr.mxu0 0.0
    %342 = vmatpush2.msra.mxu0 0.0
    %343 = vmatprep.subr.mxu0 0.0
    %344 = vmatpush2.msra.mxu0 0.0
    %345 = vmatprep.subr.mxu0 0.0
    %346 = vmatpush2.msra.mxu0 0.0
    %347 = vmatprep.subr.mxu0 0.0
    %348 = vmatpush2.msra.mxu0 0.0
    %349 = vmatprep.subr.mxu0 0.0
    %350 = vmatpush2.msra.mxu0 0.0
    %351 = vmatprep.mubr.f32.mxu0 0.0
    %352 = vmatmul.mubr.f32.gmra.mxu0 %v282
    %v353 = vpop.f32.mrf.mxu0
    %v354 = vadd.f32 %v278, %v353
    %v355 = vpop.f32.mrf.mxu0
    %356 = vmatprep.mubr.f32.mxu0 0.0
    %357 = vmatmul.mubr.f32.gmra.mxu0 %v285
    %v358 = vpop.f32.mrf.mxu0
    %v359 = vadd.f32 %v279, %v358
    %v360 = vpop.f32.mrf.mxu0
    %361 = vdwg.mxu0
    %v362 = vld [vmem:[#allocation2 + $0x98] sm:$0xff]
    %v363 = vld [vmem:[#allocation2 + $0xa0] sm:$0xff]
    %v364 = vld [vmem:[#allocation2 + $0xa8] sm:$0xff]
    %v365 = vld [vmem:[#allocation2 + $0xb0] sm:$0xff]
    %v366 = vld [vmem:[#allocation2 + $0xb8] sm:$0xff]
    %v367 = vld [vmem:[#allocation2 + $0xc0] sm:$0xff]
    %v368 = vld [vmem:[#allocation2 + $0xc8] sm:$0xff]
    %v369 = vld [vmem:[#allocation2 + $0xd0] sm:$0xff]
    %v370 = vld [vmem:[#allocation2 + $0xd8] sm:$0xff]
    %v371 = vld [vmem:[#allocation2 + $0xe0] sm:$0xff]
    %v372 = vld [vmem:[#allocation2 + $0xe8] sm:$0xff]
    %v373 = vld [vmem:[#allocation2 + $0xf0] sm:$0xff]
    %v374 = vld [vmem:[#allocation2 + $0xf8] sm:$0xff]
    %v375 = vld [vmem:[#allocation2 + $0x100] sm:$0xff]
    %v376 = vld [vmem:[#allocation2 + $0x118] sm:$0xff]
    %v377 = vld [vmem:[#allocation2 + $0x120] sm:$0xff]
    %378 = vmatprep.subr.mxu0 0.0
    %379 = vmatpush1.msra.mxu0 0.0
    %380 = vmatprep.subr.mxu0 0.0
    %381 = vmatpush1.msra.mxu0 0.0
    %382 = vmatprep.subr.mxu0 0.0
    %383 = vmatpush1.msra.mxu0 %v375
    %384 = vmatprep.subr.mxu0 0.0
    %385 = vmatpush1.msra.mxu0 %v374
    %386 = vmatprep.subr.mxu0 0.0
    %387 = vmatpush1.msra.mxu0 %v373
    %388 = vmatprep.subr.mxu0 0.0
    %389 = vmatpush1.msra.mxu0 %v372
    %390 = vmatprep.subr.mxu0 0.0
    %391 = vmatpush1.msra.mxu0 %v371
    %392 = vmatprep.subr.mxu0 0.0
    %393 = vmatpush1.msra.mxu0 %v370
    %394 = vmatprep.subr.mxu0 0.0
    %395 = vmatpush1.msra.mxu0 %v369
    %396 = vmatprep.subr.mxu0 0.0
    %397 = vmatpush1.msra.mxu0 %v368
    %398 = vmatprep.subr.mxu0 0.0
    %399 = vmatpush1.msra.mxu0 %v367
    %400 = vmatprep.subr.mxu0 0.0
    %401 = vmatpush1.msra.mxu0 %v366
    %402 = vmatprep.subr.mxu0 0.0
    %403 = vmatpush1.msra.mxu0 %v365
    %404 = vmatprep.subr.mxu0 0.0
    %405 = vmatpush1.msra.mxu0 %v364
    %406 = vmatprep.subr.mxu0 0.0
    %407 = vmatpush1.msra.mxu0 %v363
    %408 = vmatprep.subr.mxu0 0.0
    %409 = vmatpush1.msra.mxu0 %v362
    %410 = vmatprep.subr.mxu0 0.0
    %411 = vmatpush2.msra.mxu0 0.0
    %412 = vmatprep.subr.mxu0 0.0
    %413 = vmatpush2.msra.mxu0 0.0
    %414 = vmatprep.subr.mxu0 0.0
    %415 = vmatpush2.msra.mxu0 0.0
    %416 = vmatprep.subr.mxu0 0.0
    %417 = vmatpush2.msra.mxu0 0.0
    %418 = vmatprep.subr.mxu0 0.0
    %419 = vmatpush2.msra.mxu0 0.0
    %420 = vmatprep.subr.mxu0 0.0
    %421 = vmatpush2.msra.mxu0 0.0
    %422 = vmatprep.subr.mxu0 0.0
    %423 = vmatpush2.msra.mxu0 0.0
    %424 = vmatprep.subr.mxu0 0.0
    %425 = vmatpush2.msra.mxu0 0.0
    %426 = vmatprep.subr.mxu0 0.0
    %427 = vmatpush2.msra.mxu0 0.0
    %428 = vmatprep.subr.mxu0 0.0
    %429 = vmatpush2.msra.mxu0 0.0
    %430 = vmatprep.subr.mxu0 0.0
    %431 = vmatpush2.msra.mxu0 0.0
    %432 = vmatprep.subr.mxu0 0.0
    %433 = vmatpush2.msra.mxu0 0.0
    %434 = vmatprep.subr.mxu0 0.0
    %435 = vmatpush2.msra.mxu0 0.0
    %436 = vmatprep.subr.mxu0 0.0
    %437 = vmatpush2.msra.mxu0 0.0
    %438 = vmatprep.subr.mxu0 0.0
    %439 = vmatpush2.msra.mxu0 0.0
    %440 = vmatprep.subr.mxu0 0.0
    %441 = vmatpush2.msra.mxu0 0.0
    %442 = vmatprep.mubr.f32.mxu0 0.0
    %443 = vmatmul.mubr.f32.gmra.mxu0 %v282
    %v444 = vpop.f32.mrf.mxu0
    %v445 = vadd.f32 %v376, %v444
    %v446 = vpop.f32.mrf.mxu0
    %447 = vmatprep.mubr.f32.mxu0 0.0
    %448 = vmatmul.mubr.f32.gmra.mxu0 %v285
    %v449 = vpop.f32.mrf.mxu0
    %v450 = vadd.f32 %v377, %v449
    %v451 = vpop.f32.mrf.mxu0
    %452 = vdwg.mxu0
    %v453 = vtanh.pop %v354
    %v454 = vtanh.pop %v359
    %v455 = vsub.f32 0.0, %v445
    %v456 = vsub.f32 0.0, %v450
    %v457 = vmul.f32 %v455, 1.442695
    %v458 = vpow.pop %v457
    %v459 = vmul.f32 %v456, 1.442695
    %v460 = vpow.pop %v459
    %v461 = vadd.f32 %v458, 1.0
    %v462 = vadd.f32 %v460, 1.0
    %v463 = vrcp.pop %v461
    %v464 = vrcp.pop %v462
    %v465 = vmul.f32 %v453, %v463
    %v466 = vmul.f32 %v454, %v464
    %v467 = vld [vmem:[#allocation2 + $0x128] sm:$0xff]
    %v468 = vld [vmem:[#allocation2 + $0x130] sm:$0xff]
    %v469 = vld [vmem:[#allocation2 + $0x138] sm:$0xff]
    %v470 = vld [vmem:[#allocation2 + $0x140] sm:$0xff]
    %v471 = vld [vmem:[#allocation2 + $0x148] sm:$0xff]
    %v472 = vld [vmem:[#allocation2 + $0x150] sm:$0xff]
    %v473 = vld [vmem:[#allocation2 + $0x158] sm:$0xff]
    %v474 = vld [vmem:[#allocation2 + $0x160] sm:$0xff]
    %v475 = vld [vmem:[#allocation2 + $0x168] sm:$0xff]
    %v476 = vld [vmem:[#allocation2 + $0x170] sm:$0xff]
    %v477 = vld [vmem:[#allocation2 + $0x178] sm:$0xff]
    %v478 = vld [vmem:[#allocation2 + $0x180] sm:$0xff]
    %v479 = vld [vmem:[#allocation2 + $0x188] sm:$0xff]
    %v480 = vld [vmem:[#allocation2 + $0x190] sm:$0xff]
    %vm481 = vcmask 785408
    %v483 = vsel %vm481, %v465, 0
    %v486 = vsel %vm481, %v466, 0
    %488 = vmatprep.subr.mxu0 0.0
    %489 = vmatpush1.msra.mxu0 0.0
    %490 = vmatprep.subr.mxu0 0.0
    %491 = vmatpush1.msra.mxu0 0.0
    %492 = vmatprep.subr.mxu0 0.0
    %493 = vmatpush1.msra.mxu0 0.0
    %494 = vmatprep.subr.mxu0 0.0
    %495 = vmatpush1.msra.mxu0 0.0
    %496 = vmatprep.subr.mxu0 0.0
    %497 = vmatpush1.msra.mxu0 %v478
    %498 = vmatprep.subr.mxu0 0.0
    %499 = vmatpush1.msra.mxu0 %v477
    %500 = vmatprep.subr.mxu0 0.0
    %501 = vmatpush1.msra.mxu0 %v476
    %502 = vmatprep.subr.mxu0 0.0
    %503 = vmatpush1.msra.mxu0 %v475
    %504 = vmatprep.subr.mxu0 0.0
    %505 = vmatpush1.msra.mxu0 %v474
    %506 = vmatprep.subr.mxu0 0.0
    %507 = vmatpush1.msra.mxu0 %v473
    %508 = vmatprep.subr.mxu0 0.0
    %509 = vmatpush1.msra.mxu0 %v472
    %510 = vmatprep.subr.mxu0 0.0
    %511 = vmatpush1.msra.mxu0 %v471
    %512 = vmatprep.subr.mxu0 0.0
    %513 = vmatpush1.msra.mxu0 %v470
    %514 = vmatprep.subr.mxu0 0.0
    %515 = vmatpush1.msra.mxu0 %v469
    %516 = vmatprep.subr.mxu0 0.0
    %517 = vmatpush1.msra.mxu0 %v468
    %518 = vmatprep.subr.mxu0 0.0
    %519 = vmatpush1.msra.mxu0 %v467
    %520 = vmatprep.subr.mxu0 0.0
    %521 = vmatpush2.msra.mxu0 0.0
    %522 = vmatprep.subr.mxu0 0.0
    %523 = vmatpush2.msra.mxu0 0.0
    %524 = vmatprep.subr.mxu0 0.0
    %525 = vmatpush2.msra.mxu0 0.0
    %526 = vmatprep.subr.mxu0 0.0
    %527 = vmatpush2.msra.mxu0 0.0
    %528 = vmatprep.subr.mxu0 0.0
    %529 = vmatpush2.msra.mxu0 0.0
    %530 = vmatprep.subr.mxu0 0.0
    %531 = vmatpush2.msra.mxu0 0.0
    %532 = vmatprep.subr.mxu0 0.0
    %533 = vmatpush2.msra.mxu0 0.0
    %534 = vmatprep.subr.mxu0 0.0
    %535 = vmatpush2.msra.mxu0 0.0
    %536 = vmatprep.subr.mxu0 0.0
    %537 = vmatpush2.msra.mxu0 0.0
    %538 = vmatprep.subr.mxu0 0.0
    %539 = vmatpush2.msra.mxu0 0.0
    %540 = vmatprep.subr.mxu0 0.0
    %541 = vmatpush2.msra.mxu0 0.0
    %542 = vmatprep.subr.mxu0 0.0
    %543 = vmatpush2.msra.mxu0 0.0
    %544 = vmatprep.subr.mxu0 0.0
    %545 = vmatpush2.msra.mxu0 0.0
    %546 = vmatprep.subr.mxu0 0.0
    %547 = vmatpush2.msra.mxu0 0.0
    %548 = vmatprep.subr.mxu0 0.0
    %549 = vmatpush2.msra.mxu0 0.0
    %550 = vmatprep.subr.mxu0 0.0
    %551 = vmatpush2.msra.mxu0 0.0
    %552 = vmatprep.mubr.f32.mxu0 0.0
    %553 = vmatmul.mubr.f32.gmra.mxu0 %v483
    %v554 = vpop.f32.mrf.mxu0
    %v555 = vadd.f32 %v479, %v554
    %v556 = vpop.f32.mrf.mxu0
    %557 = vmatprep.mubr.f32.mxu0 0.0
    %558 = vmatmul.mubr.f32.gmra.mxu0 %v486
    %v559 = vpop.f32.mrf.mxu0
    %v560 = vadd.f32 %v480, %v559
    %v561 = vpop.f32.mrf.mxu0
    %562 = vdwg.mxu0
    %vm563 = vcmask 130048
    %v565 = vsel %vm563, %v126, 0
    %v568 = vsel %vm563, %v131, 0
    %570 = vmatprep.subr.mxu0 0.0
    %571 = vmatpush1.msra.mxu0 0.0
    %572 = vmatprep.subr.mxu0 0.0
    %573 = vmatpush1.msra.mxu0 0.0
    %574 = vmatprep.subr.mxu0 0.0
    %575 = vmatpush1.msra.mxu0 0.0
    %576 = vmatprep.subr.mxu0 0.0
    %577 = vmatpush1.msra.mxu0 0.0
    %578 = vmatprep.subr.mxu0 0.0
    %579 = vmatpush1.msra.mxu0 0.0
    %580 = vmatprep.subr.mxu0 0.0
    %581 = vmatpush1.msra.mxu0 0.0
    %582 = vmatprep.subr.mxu0 0.0
    %583 = vmatpush1.msra.mxu0 0.0
    %584 = vmatprep.subr.mxu0 0.0
    %585 = vmatpush1.msra.mxu0 0.0
    %586 = vmatprep.subr.mxu0 0.0
    %587 = vmatpush1.msra.mxu0 0.0
    %588 = vmatprep.subr.mxu0 0.0
    %589 = vmatpush1.msra.mxu0 0.0
    %590 = vmatprep.subr.mxu0 0.0
    %591 = vmatpush1.msra.mxu0 0.0
    %592 = vmatprep.subr.mxu0 0.0
    %593 = vmatpush1.msra.mxu0 0.0
    %594 = vmatprep.subr.mxu0 0.0
    %595 = vmatpush1.msra.mxu0 0.0
    %596 = vmatprep.subr.mxu0 0.0
    %597 = vmatpush1.msra.mxu0 0.0
    %598 = vmatprep.subr.mxu0 0.0
    %599 = vmatpush1.msra.mxu0 %v466
    %600 = vmatprep.subr.mxu0 0.0
    %601 = vmatpush1.msra.mxu0 %v465
    %602 = vmatprep.subr.mxu0 0.0
    %603 = vmatpush2.msra.mxu0 0.0
    %604 = vmatprep.subr.mxu0 0.0
    %605 = vmatpush2.msra.mxu0 0.0
    %606 = vmatprep.subr.mxu0 0.0
    %607 = vmatpush2.msra.mxu0 0.0
    %608 = vmatprep.subr.mxu0 0.0
    %609 = vmatpush2.msra.mxu0 0.0
    %610 = vmatprep.subr.mxu0 0.0
    %611 = vmatpush2.msra.mxu0 0.0
    %612 = vmatprep.subr.mxu0 0.0
    %613 = vmatpush2.msra.mxu0 0.0
    %614 = vmatprep.subr.mxu0 0.0
    %615 = vmatpush2.msra.mxu0 0.0
    %616 = vmatprep.subr.mxu0 0.0
    %617 = vmatpush2.msra.mxu0 0.0
    %618 = vmatprep.subr.mxu0 0.0
    %619 = vmatpush2.msra.mxu0 0.0
    %620 = vmatprep.subr.mxu0 0.0
    %621 = vmatpush2.msra.mxu0 0.0
    %622 = vmatprep.subr.mxu0 0.0
    %623 = vmatpush2.msra.mxu0 0.0
    %624 = vmatprep.subr.mxu0 0.0
    %625 = vmatpush2.msra.mxu0 0.0
    %626 = vmatprep.subr.mxu0 0.0
    %627 = vmatpush2.msra.mxu0 0.0
    %628 = vmatprep.subr.mxu0 0.0
    %629 = vmatpush2.msra.mxu0 0.0
    %630 = vmatprep.subr.mxu0 0.0
    %631 = vmatpush2.msra.mxu0 0.0
    %632 = vmatprep.subr.mxu0 0.0
    %633 = vmatpush2.msra.mxu0 0.0
    %634 = vmatprep.mubr.f32.mxu0 0.0
    %635 = vmatmul.mubr.f32.gmra.mxu0 %v565
    %v636 = vpop.f32.mrf.mxu0
    %v637 = vadd.f32 0.0, %v636
    %v638 = vpop.f32.mrf.mxu0
    %639 = vmatprep.mubr.f32.mxu0 0.0
    %640 = vmatmul.mubr.f32.gmra.mxu0 %v568
    %v641 = vpop.f32.mrf.mxu0
    %v642 = vadd.f32 0.0, %v641
    %v643 = vpop.f32.mrf.mxu0
    %644 = vdwg.mxu0
    %645 = vmatprep.subr.mxu0 0.0
    %646 = vmatpush1.msra.mxu0 0.0
    %647 = vmatprep.subr.mxu0 0.0
    %648 = vmatpush1.msra.mxu0 0.0
    %649 = vmatprep.subr.mxu0 0.0
    %650 = vmatpush1.msra.mxu0 0.0
    %651 = vmatprep.subr.mxu0 0.0
    %652 = vmatpush1.msra.mxu0 0.0
    %653 = vmatprep.subr.mxu0 0.0
    %654 = vmatpush1.msra.mxu0 0.0
    %655 = vmatprep.subr.mxu0 0.0
    %656 = vmatpush1.msra.mxu0 0.0
    %657 = vmatprep.subr.mxu0 0.0
    %658 = vmatpush1.msra.mxu0 0.0
    %659 = vmatprep.subr.mxu0 0.0
    %660 = vmatpush1.msra.mxu0 0.0
    %661 = vmatprep.subr.mxu0 0.0
    %662 = vmatpush1.msra.mxu0 0.0
    %663 = vmatprep.subr.mxu0 0.0
    %664 = vmatpush1.msra.mxu0 0.0
    %665 = vmatprep.subr.mxu0 0.0
    %666 = vmatpush1.msra.mxu0 0.0
    %667 = vmatprep.subr.mxu0 0.0
    %668 = vmatpush1.msra.mxu0 0.0
    %669 = vmatprep.subr.mxu0 0.0
    %670 = vmatpush1.msra.mxu0 0.0
    %671 = vmatprep.subr.mxu0 0.0
    %672 = vmatpush1.msra.mxu0 0.0
    %673 = vmatprep.subr.mxu0 0.0
    %674 = vmatpush1.msra.mxu0 %v642
    %675 = vmatprep.subr.mxu0 0.0
    %676 = vmatpush1.msra.mxu0 %v637
    %677 = vmatprep.subr.mxu0 0.0
    %678 = vmatpush2.msra.mxu0 0.0
    %679 = vmatprep.subr.mxu0 0.0
    %680 = vmatpush2.msra.mxu0 0.0
    %681 = vmatprep.subr.mxu0 0.0
    %682 = vmatpush2.msra.mxu0 0.0
    %683 = vmatprep.subr.mxu0 0.0
    %684 = vmatpush2.msra.mxu0 0.0
    %685 = vmatprep.subr.mxu0 0.0
    %686 = vmatpush2.msra.mxu0 0.0
    %687 = vmatprep.subr.mxu0 0.0
    %688 = vmatpush2.msra.mxu0 0.0
    %689 = vmatprep.subr.mxu0 0.0
    %690 = vmatpush2.msra.mxu0 0.0
    %691 = vmatprep.subr.mxu0 0.0
    %692 = vmatpush2.msra.mxu0 0.0
    %693 = vmatprep.subr.mxu0 0.0
    %694 = vmatpush2.msra.mxu0 0.0
    %695 = vmatprep.subr.mxu0 0.0
    %696 = vmatpush2.msra.mxu0 0.0
    %697 = vmatprep.subr.mxu0 0.0
    %698 = vmatpush2.msra.mxu0 0.0
    %699 = vmatprep.subr.mxu0 0.0
    %700 = vmatpush2.msra.mxu0 0.0
    %701 = vmatprep.subr.mxu0 0.0
    %702 = vmatpush2.msra.mxu0 0.0
    %703 = vmatprep.subr.mxu0 0.0
    %704 = vmatpush2.msra.mxu0 0.0
    %705 = vmatprep.subr.mxu0 0.0
    %706 = vmatpush2.msra.mxu0 0.0
    %707 = vmatprep.subr.mxu0 0.0
    %708 = vmatpush2.msra.mxu0 0.0
    %709 = vmatprep.mubr.f32.mxu0 0.0
    %710 = vmatmul.mubr.f32.gmra.mxu0 %v565
    %v711 = vpop.f32.mrf.mxu0
    %v712 = vadd.f32 0.0, %v711
    %v713 = vpop.f32.mrf.mxu0
    %714 = vmatprep.mubr.f32.mxu0 0.0
    %715 = vmatmul.mubr.f32.gmra.mxu0 %v568
    %v716 = vpop.f32.mrf.mxu0
    %v717 = vadd.f32 0.0, %v716
    %v718 = vpop.f32.mrf.mxu0
    %719 = vdwg.mxu0
    %v720 = vld [vmem:[#allocation2 + $0x198] sm:$0xff]
    %v721 = vld [vmem:[#allocation2 + $0x1a0] sm:$0xff]
    %v722 = vld [vmem:[#allocation2 + $0x1a8] sm:$0xff]
    %v723 = vld [vmem:[#allocation2 + $0x1b0] sm:$0xff]
    %v724 = vld [vmem:[#allocation2 + $0x1b8] sm:$0xff]
    %v725 = vld [vmem:[#allocation2 + $0x1c0] sm:$0xff]
    %v726 = vld [vmem:[#allocation2 + $0x1c8] sm:$0xff]
    %v727 = vld [vmem:[#allocation2 + $0x1d0] sm:$0xff]
    %v728 = vld [vmem:[#allocation2 + $0x1d8] sm:$0xff]
    %v729 = vld [vmem:[#allocation2 + $0x1e0] sm:$0xff]
    %v730 = vld [vmem:[#allocation2 + $0x1e8] sm:$0xff]
    %v731 = vld [vmem:[#allocation2 + $0x1f0] sm:$0xff]
    %v732 = vld [vmem:[#allocation2 + $0x1f8] sm:$0xff]
    %v733 = vld [vmem:[#allocation2 + $0x200] sm:$0xff]
    %v734 = vld [vmem:[#allocation2 + $0x208] sm:$0xff]
    %v735 = vld [vmem:[#allocation2 + $0x210] sm:$0xff]
    %v736 = vld [vmem:[#allocation2 + $0x218] sm:$0xff]
    %v737 = vld [vmem:[#allocation2 + $0x220] sm:$0xff]
    %v738 = vld [vmem:[#allocation2 + $0x228] sm:$0xff]
    %v739 = vld [vmem:[#allocation2 + $0x230] sm:$0xff]
    %v740 = vld [vmem:[#allocation2 + $0x238] sm:$0xff]
    %v741 = vld [vmem:[#allocation2 + $0x240] sm:$0xff]
    %v742 = vld [vmem:[#allocation2 + $0x248] sm:$0xff]
    %v743 = vld [vmem:[#allocation2 + $0x250] sm:$0xff]
    %v745 = vsel %vm481, %v637, 0
    %v748 = vsel %vm481, %v642, 0
    %750 = vmatprep.subr.mxu0 0.0
    %751 = vmatpush1.msra.mxu0 0.0
    %752 = vmatprep.subr.mxu0 0.0
    %753 = vmatpush1.msra.mxu0 0.0
    %754 = vmatprep.subr.mxu0 0.0
    %755 = vmatpush1.msra.mxu0 0.0
    %756 = vmatprep.subr.mxu0 0.0
    %757 = vmatpush1.msra.mxu0 0.0
    %758 = vmatprep.subr.mxu0 0.0
    %759 = vmatpush1.msra.mxu0 %v743
    %760 = vmatprep.subr.mxu0 0.0
    %761 = vmatpush1.msra.mxu0 %v742
    %762 = vmatprep.subr.mxu0 0.0
    %763 = vmatpush1.msra.mxu0 %v741
    %764 = vmatprep.subr.mxu0 0.0
    %765 = vmatpush1.msra.mxu0 %v740
    %766 = vmatprep.subr.mxu0 0.0
    %767 = vmatpush1.msra.mxu0 %v739
    %768 = vmatprep.subr.mxu0 0.0
    %769 = vmatpush1.msra.mxu0 %v738
    %770 = vmatprep.subr.mxu0 0.0
    %771 = vmatpush1.msra.mxu0 %v737
    %772 = vmatprep.subr.mxu0 0.0
    %773 = vmatpush1.msra.mxu0 %v736
    %774 = vmatprep.subr.mxu0 0.0
    %775 = vmatpush1.msra.mxu0 %v735
    %776 = vmatprep.subr.mxu0 0.0
    %777 = vmatpush1.msra.mxu0 %v734
    %778 = vmatprep.subr.mxu0 0.0
    %779 = vmatpush1.msra.mxu0 %v733
    %780 = vmatprep.subr.mxu0 0.0
    %781 = vmatpush1.msra.mxu0 %v732
    %782 = vmatprep.subr.mxu0 0.0
    %783 = vmatpush2.msra.mxu0 0.0
    %784 = vmatprep.subr.mxu0 0.0
    %785 = vmatpush2.msra.mxu0 0.0
    %786 = vmatprep.subr.mxu0 0.0
    %787 = vmatpush2.msra.mxu0 0.0
    %788 = vmatprep.subr.mxu0 0.0
    %789 = vmatpush2.msra.mxu0 0.0
    %790 = vmatprep.subr.mxu0 0.0
    %791 = vmatpush2.msra.mxu0 0.0
    %792 = vmatprep.subr.mxu0 0.0
    %793 = vmatpush2.msra.mxu0 0.0
    %794 = vmatprep.subr.mxu0 0.0
    %795 = vmatpush2.msra.mxu0 0.0
    %796 = vmatprep.subr.mxu0 0.0
    %797 = vmatpush2.msra.mxu0 0.0
    %798 = vmatprep.subr.mxu0 0.0
    %799 = vmatpush2.msra.mxu0 0.0
    %800 = vmatprep.subr.mxu0 0.0
    %801 = vmatpush2.msra.mxu0 0.0
    %802 = vmatprep.subr.mxu0 0.0
    %803 = vmatpush2.msra.mxu0 0.0
    %804 = vmatprep.subr.mxu0 0.0
    %805 = vmatpush2.msra.mxu0 0.0
    %806 = vmatprep.subr.mxu0 0.0
    %807 = vmatpush2.msra.mxu0 0.0
    %808 = vmatprep.subr.mxu0 0.0
    %809 = vmatpush2.msra.mxu0 0.0
    %810 = vmatprep.subr.mxu0 0.0
    %811 = vmatpush2.msra.mxu0 0.0
    %812 = vmatprep.subr.mxu0 0.0
    %813 = vmatpush2.msra.mxu0 0.0
    %814 = vmatprep.mubr.f32.mxu0 0.0
    %815 = vmatmul.mubr.f32.gmra.mxu0 %v745
    %v816 = vpop.f32.mrf.mxu0
    %v817 = vadd.f32 0.0, %v816
    %v818 = vpop.f32.mrf.mxu0
    %819 = vmatprep.mubr.f32.mxu0 0.0
    %820 = vmatmul.mubr.f32.gmra.mxu0 %v748
    %v821 = vpop.f32.mrf.mxu0
    %v822 = vadd.f32 0.0, %v821
    %v823 = vpop.f32.mrf.mxu0
    %824 = vdwg.mxu0
    %825 = vmatprep.subr.mxu0 0.0
    %826 = vmatpush1.msra.mxu0 0.0
    %827 = vmatprep.subr.mxu0 0.0
    %828 = vmatpush1.msra.mxu0 0.0
    %829 = vmatprep.subr.mxu0 0.0
    %830 = vmatpush1.msra.mxu0 0.0
    %831 = vmatprep.subr.mxu0 0.0
    %832 = vmatpush1.msra.mxu0 0.0
    %833 = vmatprep.subr.mxu0 0.0
    %834 = vmatpush1.msra.mxu0 %v731
    %835 = vmatprep.subr.mxu0 0.0
    %836 = vmatpush1.msra.mxu0 %v730
    %837 = vmatprep.subr.mxu0 0.0
    %838 = vmatpush1.msra.mxu0 %v729
    %839 = vmatprep.subr.mxu0 0.0
    %840 = vmatpush1.msra.mxu0 %v728
    %841 = vmatprep.subr.mxu0 0.0
    %842 = vmatpush1.msra.mxu0 %v727
    %843 = vmatprep.subr.mxu0 0.0
    %844 = vmatpush1.msra.mxu0 %v726
    %845 = vmatprep.subr.mxu0 0.0
    %846 = vmatpush1.msra.mxu0 %v725
    %847 = vmatprep.subr.mxu0 0.0
    %848 = vmatpush1.msra.mxu0 %v724
    %849 = vmatprep.subr.mxu0 0.0
    %850 = vmatpush1.msra.mxu0 %v723
    %851 = vmatprep.subr.mxu0 0.0
    %852 = vmatpush1.msra.mxu0 %v722
    %853 = vmatprep.subr.mxu0 0.0
    %854 = vmatpush1.msra.mxu0 %v721
    %855 = vmatprep.subr.mxu0 0.0
    %856 = vmatpush1.msra.mxu0 %v720
    %857 = vmatprep.subr.mxu0 0.0
    %858 = vmatpush2.msra.mxu0 0.0
    %859 = vmatprep.subr.mxu0 0.0
    %860 = vmatpush2.msra.mxu0 0.0
    %861 = vmatprep.subr.mxu0 0.0
    %862 = vmatpush2.msra.mxu0 0.0
    %863 = vmatprep.subr.mxu0 0.0
    %864 = vmatpush2.msra.mxu0 0.0
    %865 = vmatprep.subr.mxu0 0.0
    %866 = vmatpush2.msra.mxu0 0.0
    %867 = vmatprep.subr.mxu0 0.0
    %868 = vmatpush2.msra.mxu0 0.0
    %869 = vmatprep.subr.mxu0 0.0
    %870 = vmatpush2.msra.mxu0 0.0
    %871 = vmatprep.subr.mxu0 0.0
    %872 = vmatpush2.msra.mxu0 0.0
    %873 = vmatprep.subr.mxu0 0.0
    %874 = vmatpush2.msra.mxu0 0.0
    %875 = vmatprep.subr.mxu0 0.0
    %876 = vmatpush2.msra.mxu0 0.0
    %877 = vmatprep.subr.mxu0 0.0
    %878 = vmatpush2.msra.mxu0 0.0
    %879 = vmatprep.subr.mxu0 0.0
    %880 = vmatpush2.msra.mxu0 0.0
    %881 = vmatprep.subr.mxu0 0.0
    %882 = vmatpush2.msra.mxu0 0.0
    %883 = vmatprep.subr.mxu0 0.0
    %884 = vmatpush2.msra.mxu0 0.0
    %885 = vmatprep.subr.mxu0 0.0
    %886 = vmatpush2.msra.mxu0 0.0
    %887 = vmatprep.subr.mxu0 0.0
    %888 = vmatpush2.msra.mxu0 0.0
    %889 = vmatprep.mubr.f32.mxu0 0.0
    %890 = vmatmul.mubr.f32.gmra.mxu0 %v483
    %v891 = vpop.f32.mrf.mxu0
    %v892 = vadd.f32 %v817, %v891
    %v893 = vpop.f32.mrf.mxu0
    %894 = vmatprep.mubr.f32.mxu0 0.0
    %895 = vmatmul.mubr.f32.gmra.mxu0 %v486
    %v896 = vpop.f32.mrf.mxu0
    %v897 = vadd.f32 %v822, %v896
    %v898 = vpop.f32.mrf.mxu0
    %899 = vdwg.mxu0
    %v900 = vld [vmem:[#allocation2 + $0x258] sm:$0xff]
    %v901 = vld [vmem:[#allocation2 + $0x260] sm:$0xff]
    %v902 = vld [vmem:[#allocation2 + $0x268] sm:$0xff]
    %v903 = vld [vmem:[#allocation2 + $0x270] sm:$0xff]
    %v904 = vld [vmem:[#allocation2 + $0x278] sm:$0xff]
    %v905 = vld [vmem:[#allocation2 + $0x280] sm:$0xff]
    %v906 = vld [vmem:[#allocation2 + $0x288] sm:$0xff]
    %v907 = vld [vmem:[#allocation2 + $0x290] sm:$0xff]
    %v908 = vld [vmem:[#allocation2 + $0x298] sm:$0xff]
    %v909 = vld [vmem:[#allocation2 + $0x2a0] sm:$0xff]
    %v910 = vld [vmem:[#allocation2 + $0x2a8] sm:$0xff]
    %v911 = vld [vmem:[#allocation2 + $0x2b0] sm:$0xff]
    %v913 = vsel %vm481, %v712, 0
    %v916 = vsel %vm481, %v717, 0
    %918 = vmatprep.subr.mxu0 0.0
    %919 = vmatpush1.msra.mxu0 0.0
    %920 = vmatprep.subr.mxu0 0.0
    %921 = vmatpush1.msra.mxu0 0.0
    %922 = vmatprep.subr.mxu0 0.0
    %923 = vmatpush1.msra.mxu0 0.0
    %924 = vmatprep.subr.mxu0 0.0
    %925 = vmatpush1.msra.mxu0 0.0
    %926 = vmatprep.subr.mxu0 0.0
    %927 = vmatpush1.msra.mxu0 %v911
    %928 = vmatprep.subr.mxu0 0.0
    %929 = vmatpush1.msra.mxu0 %v910
    %930 = vmatprep.subr.mxu0 0.0
    %931 = vmatpush1.msra.mxu0 %v909
    %932 = vmatprep.subr.mxu0 0.0
    %933 = vmatpush1.msra.mxu0 %v908
    %934 = vmatprep.subr.mxu0 0.0
    %935 = vmatpush1.msra.mxu0 %v907
    %936 = vmatprep.subr.mxu0 0.0
    %937 = vmatpush1.msra.mxu0 %v906
    %938 = vmatprep.subr.mxu0 0.0
    %939 = vmatpush1.msra.mxu0 %v905
    %940 = vmatprep.subr.mxu0 0.0
    %941 = vmatpush1.msra.mxu0 %v904
    %942 = vmatprep.subr.mxu0 0.0
    %943 = vmatpush1.msra.mxu0 %v903
    %944 = vmatprep.subr.mxu0 0.0
    %945 = vmatpush1.msra.mxu0 %v902
    %946 = vmatprep.subr.mxu0 0.0
    %947 = vmatpush1.msra.mxu0 %v901
    %948 = vmatprep.subr.mxu0 0.0
    %949 = vmatpush1.msra.mxu0 %v900
    %950 = vmatprep.subr.mxu0 0.0
    %951 = vmatpush2.msra.mxu0 0.0
    %952 = vmatprep.subr.mxu0 0.0
    %953 = vmatpush2.msra.mxu0 0.0
    %954 = vmatprep.subr.mxu0 0.0
    %955 = vmatpush2.msra.mxu0 0.0
    %956 = vmatprep.subr.mxu0 0.0
    %957 = vmatpush2.msra.mxu0 0.0
    %958 = vmatprep.subr.mxu0 0.0
    %959 = vmatpush2.msra.mxu0 0.0
    %960 = vmatprep.subr.mxu0 0.0
    %961 = vmatpush2.msra.mxu0 0.0
    %962 = vmatprep.subr.mxu0 0.0
    %963 = vmatpush2.msra.mxu0 0.0
    %964 = vmatprep.subr.mxu0 0.0
    %965 = vmatpush2.msra.mxu0 0.0
    %966 = vmatprep.subr.mxu0 0.0
    %967 = vmatpush2.msra.mxu0 0.0
    %968 = vmatprep.subr.mxu0 0.0
    %969 = vmatpush2.msra.mxu0 0.0
    %970 = vmatprep.subr.mxu0 0.0
    %971 = vmatpush2.msra.mxu0 0.0
    %972 = vmatprep.subr.mxu0 0.0
    %973 = vmatpush2.msra.mxu0 0.0
    %974 = vmatprep.subr.mxu0 0.0
    %975 = vmatpush2.msra.mxu0 0.0
    %976 = vmatprep.subr.mxu0 0.0
    %977 = vmatpush2.msra.mxu0 0.0
    %978 = vmatprep.subr.mxu0 0.0
    %979 = vmatpush2.msra.mxu0 0.0
    %980 = vmatprep.subr.mxu0 0.0
    %981 = vmatpush2.msra.mxu0 0.0
    %982 = vmatprep.mubr.f32.mxu0 0.0
    %983 = vmatmul.mubr.f32.gmra.mxu0 %v913
    %v984 = vpop.f32.mrf.mxu0
    %v985 = vadd.f32 0.0, %v984
    %v986 = vpop.f32.mrf.mxu0
    %987 = vmatprep.mubr.f32.mxu0 0.0
    %988 = vmatmul.mubr.f32.gmra.mxu0 %v916
    %v989 = vpop.f32.mrf.mxu0
    %v990 = vadd.f32 0.0, %v989
    %v991 = vpop.f32.mrf.mxu0
    %992 = vdwg.mxu0
    %v993 = vadd.f32 %v892, %v985
    %v994 = vadd.f32 %v897, %v990
    %v995 = vld [vmem:[#allocation2 + $0x2b8] sm:$0xff]
    %v996 = vld [vmem:[#allocation2 + $0x2c0] sm:$0xff]
    %v997 = vld [vmem:[#allocation2 + $0x2c8] sm:$0xff]
    %v998 = vld [vmem:[#allocation2 + $0x2d0] sm:$0xff]
    %v999 = vld [vmem:[#allocation2 + $0x2d8] sm:$0xff]
    %v1000 = vld [vmem:[#allocation2 + $0x2e0] sm:$0xff]
    %v1001 = vld [vmem:[#allocation2 + $0x2e8] sm:$0xff]
    %v1002 = vld [vmem:[#allocation2 + $0x2f0] sm:$0xff]
    %v1003 = vld [vmem:[#allocation2 + $0x2f8] sm:$0xff]
    %v1004 = vld [vmem:[#allocation2 + $0x300] sm:$0xff]
    %v1005 = vld [vmem:[#allocation2 + $0x308] sm:$0xff]
    %v1006 = vld [vmem:[#allocation2 + $0x310] sm:$0xff]
    %v1007 = vld [vmem:[#allocation2 + $0x318] sm:$0xff]
    %v1008 = vld [vmem:[#allocation2 + $0x320] sm:$0xff]
    %1009 = vmatprep.subr.mxu0 0.0
    %1010 = vmatpush1.msra.mxu0 0.0
    %1011 = vmatprep.subr.mxu0 0.0
    %1012 = vmatpush1.msra.mxu0 0.0
    %1013 = vmatprep.subr.mxu0 0.0
    %1014 = vmatpush1.msra.mxu0 %v1008
    %1015 = vmatprep.subr.mxu0 0.0
    %1016 = vmatpush1.msra.mxu0 %v1007
    %1017 = vmatprep.subr.mxu0 0.0
    %1018 = vmatpush1.msra.mxu0 %v1006
    %1019 = vmatprep.subr.mxu0 0.0
    %1020 = vmatpush1.msra.mxu0 %v1005
    %1021 = vmatprep.subr.mxu0 0.0
    %1022 = vmatpush1.msra.mxu0 %v1004
    %1023 = vmatprep.subr.mxu0 0.0
    %1024 = vmatpush1.msra.mxu0 %v1003
    %1025 = vmatprep.subr.mxu0 0.0
    %1026 = vmatpush1.msra.mxu0 %v1002
    %1027 = vmatprep.subr.mxu0 0.0
    %1028 = vmatpush1.msra.mxu0 %v1001
    %1029 = vmatprep.subr.mxu0 0.0
    %1030 = vmatpush1.msra.mxu0 %v1000
    %1031 = vmatprep.subr.mxu0 0.0
    %1032 = vmatpush1.msra.mxu0 %v999
    %1033 = vmatprep.subr.mxu0 0.0
    %1034 = vmatpush1.msra.mxu0 %v998
    %1035 = vmatprep.subr.mxu0 0.0
    %1036 = vmatpush1.msra.mxu0 %v997
    %1037 = vmatprep.subr.mxu0 0.0
    %1038 = vmatpush1.msra.mxu0 %v996
    %1039 = vmatprep.subr.mxu0 0.0
    %1040 = vmatpush1.msra.mxu0 %v995
    %1041 = vmatprep.subr.mxu0 0.0
    %1042 = vmatpush2.msra.mxu0 0.0
    %1043 = vmatprep.subr.mxu0 0.0
    %1044 = vmatpush2.msra.mxu0 0.0
    %1045 = vmatprep.subr.mxu0 0.0
    %1046 = vmatpush2.msra.mxu0 0.0
    %1047 = vmatprep.subr.mxu0 0.0
    %1048 = vmatpush2.msra.mxu0 0.0
    %1049 = vmatprep.subr.mxu0 0.0
    %1050 = vmatpush2.msra.mxu0 0.0
    %1051 = vmatprep.subr.mxu0 0.0
    %1052 = vmatpush2.msra.mxu0 0.0
    %1053 = vmatprep.subr.mxu0 0.0
    %1054 = vmatpush2.msra.mxu0 0.0
    %1055 = vmatprep.subr.mxu0 0.0
    %1056 = vmatpush2.msra.mxu0 0.0
    %1057 = vmatprep.subr.mxu0 0.0
    %1058 = vmatpush2.msra.mxu0 0.0
    %1059 = vmatprep.subr.mxu0 0.0
    %1060 = vmatpush2.msra.mxu0 0.0
    %1061 = vmatprep.subr.mxu0 0.0
    %1062 = vmatpush2.msra.mxu0 0.0
    %1063 = vmatprep.subr.mxu0 0.0
    %1064 = vmatpush2.msra.mxu0 0.0
    %1065 = vmatprep.subr.mxu0 0.0
    %1066 = vmatpush2.msra.mxu0 0.0
    %1067 = vmatprep.subr.mxu0 0.0
    %1068 = vmatpush2.msra.mxu0 0.0
    %1069 = vmatprep.subr.mxu0 0.0
    %1070 = vmatpush2.msra.mxu0 0.0
    %1071 = vmatprep.subr.mxu0 0.0
    %1072 = vmatpush2.msra.mxu0 0.0
    %1073 = vmatprep.mubr.f32.mxu0 0.0
    %1074 = vmatmul.mubr.f32.gmra.mxu0 %v282
    %v1075 = vpop.f32.mrf.mxu0
    %v1076 = vadd.f32 0.0, %v1075
    %v1077 = vpop.f32.mrf.mxu0
    %1078 = vmatprep.mubr.f32.mxu0 0.0
    %1079 = vmatmul.mubr.f32.gmra.mxu0 %v285
    %v1080 = vpop.f32.mrf.mxu0
    %v1081 = vadd.f32 0.0, %v1080
    %v1082 = vpop.f32.mrf.mxu0
    %1083 = vdwg.mxu0
    %v1084 = vadd.f32 %v993, %v1076
    %v1085 = vadd.f32 %v994, %v1081
    %v1086 = vld [vmem:[#allocation2 + $0x328] sm:$0xff]
    %v1087 = vld [vmem:[#allocation2 + $0x330] sm:$0xff]
    %v1088 = vadd.f32 %v1084, %v1086
    %v1089 = vadd.f32 %v1085, %v1087
    %v1090 = vld [vmem:[#allocation2 + $0x338] sm:$0xff]
    %v1091 = vld [vmem:[#allocation2 + $0x340] sm:$0xff]
    %v1092 = vld [vmem:[#allocation2 + $0x348] sm:$0xff]
    %v1093 = vld [vmem:[#allocation2 + $0x350] sm:$0xff]
    %v1094 = vld [vmem:[#allocation2 + $0x358] sm:$0xff]
    %v1095 = vld [vmem:[#allocation2 + $0x360] sm:$0xff]
    %v1096 = vld [vmem:[#allocation2 + $0x368] sm:$0xff]
    %v1097 = vld [vmem:[#allocation2 + $0x370] sm:$0xff]
    %v1098 = vld [vmem:[#allocation2 + $0x378] sm:$0xff]
    %v1099 = vld [vmem:[#allocation2 + $0x380] sm:$0xff]
    %v1100 = vld [vmem:[#allocation2 + $0x388] sm:$0xff]
    %v1101 = vld [vmem:[#allocation2 + $0x390] sm:$0xff]
    %v1102 = vld [vmem:[#allocation2 + $0x3f8] sm:$0xff]
    %v1103 = vld [vmem:[#allocation2 + $0x400] sm:$0xff]
    %v1105 = vsel %vm481, %v1088, 0
    %v1108 = vsel %vm481, %v1089, 0
    %1110 = vmatprep.subr.mxu0 0.0
    %1111 = vmatpush1.msra.mxu0 0.0
    %1112 = vmatprep.subr.mxu0 0.0
    %1113 = vmatpush1.msra.mxu0 0.0
    %1114 = vmatprep.subr.mxu0 0.0
    %1115 = vmatpush1.msra.mxu0 0.0
    %1116 = vmatprep.subr.mxu0 0.0
    %1117 = vmatpush1.msra.mxu0 0.0
    %1118 = vmatprep.subr.mxu0 0.0
    %1119 = vmatpush1.msra.mxu0 %v1101
    %1120 = vmatprep.subr.mxu0 0.0
    %1121 = vmatpush1.msra.mxu0 %v1100
    %1122 = vmatprep.subr.mxu0 0.0
    %1123 = vmatpush1.msra.mxu0 %v1099
    %1124 = vmatprep.subr.mxu0 0.0
    %1125 = vmatpush1.msra.mxu0 %v1098
    %1126 = vmatprep.subr.mxu0 0.0
    %1127 = vmatpush1.msra.mxu0 %v1097
    %1128 = vmatprep.subr.mxu0 0.0
    %1129 = vmatpush1.msra.mxu0 %v1096
    %1130 = vmatprep.subr.mxu0 0.0
    %1131 = vmatpush1.msra.mxu0 %v1095
    %1132 = vmatprep.subr.mxu0 0.0
    %1133 = vmatpush1.msra.mxu0 %v1094
    %1134 = vmatprep.subr.mxu0 0.0
    %1135 = vmatpush1.msra.mxu0 %v1093
    %1136 = vmatprep.subr.mxu0 0.0
    %1137 = vmatpush1.msra.mxu0 %v1092
    %1138 = vmatprep.subr.mxu0 0.0
    %1139 = vmatpush1.msra.mxu0 %v1091
    %1140 = vmatprep.subr.mxu0 0.0
    %1141 = vmatpush1.msra.mxu0 %v1090
    %1142 = vmatprep.subr.mxu0 0.0
    %1143 = vmatpush2.msra.mxu0 0.0
    %1144 = vmatprep.subr.mxu0 0.0
    %1145 = vmatpush2.msra.mxu0 0.0
    %1146 = vmatprep.subr.mxu0 0.0
    %1147 = vmatpush2.msra.mxu0 0.0
    %1148 = vmatprep.subr.mxu0 0.0
    %1149 = vmatpush2.msra.mxu0 0.0
    %1150 = vmatprep.subr.mxu0 0.0
    %1151 = vmatpush2.msra.mxu0 0.0
    %1152 = vmatprep.subr.mxu0 0.0
    %1153 = vmatpush2.msra.mxu0 0.0
    %1154 = vmatprep.subr.mxu0 0.0
    %1155 = vmatpush2.msra.mxu0 0.0
    %1156 = vmatprep.subr.mxu0 0.0
    %1157 = vmatpush2.msra.mxu0 0.0
    %1158 = vmatprep.subr.mxu0 0.0
    %1159 = vmatpush2.msra.mxu0 0.0
    %1160 = vmatprep.subr.mxu0 0.0
    %1161 = vmatpush2.msra.mxu0 0.0
    %1162 = vmatprep.subr.mxu0 0.0
    %1163 = vmatpush2.msra.mxu0 0.0
    %1164 = vmatprep.subr.mxu0 0.0
    %1165 = vmatpush2.msra.mxu0 0.0
    %1166 = vmatprep.subr.mxu0 0.0
    %1167 = vmatpush2.msra.mxu0 0.0
    %1168 = vmatprep.subr.mxu0 0.0
    %1169 = vmatpush2.msra.mxu0 0.0
    %1170 = vmatprep.subr.mxu0 0.0
    %1171 = vmatpush2.msra.mxu0 0.0
    %1172 = vmatprep.subr.mxu0 0.0
    %1173 = vmatpush2.msra.mxu0 0.0
    %1174 = vmatprep.mubr.f32.mxu0 0.0
    %1175 = vmatmul.mubr.f32.gmra.mxu0 %v1105
    %v1176 = vpop.f32.mrf.mxu0
    %v1177 = vadd.f32 %v1102, %v1176
    %v1178 = vpop.f32.mrf.mxu0
    %1179 = vmatprep.mubr.f32.mxu0 0.0
    %1180 = vmatmul.mubr.f32.gmra.mxu0 %v1108
    %v1181 = vpop.f32.mrf.mxu0
    %v1182 = vadd.f32 %v1103, %v1181
    %v1183 = vpop.f32.mrf.mxu0
    %1184 = vdwg.mxu0
    %v1185 = vld [vmem:[#allocation2 + $0x398] sm:$0xff]
    %v1186 = vld [vmem:[#allocation2 + $0x3a0] sm:$0xff]
    %v1187 = vld [vmem:[#allocation2 + $0x3a8] sm:$0xff]
    %v1188 = vld [vmem:[#allocation2 + $0x3b0] sm:$0xff]
    %v1189 = vld [vmem:[#allocation2 + $0x3b8] sm:$0xff]
    %v1190 = vld [vmem:[#allocation2 + $0x3c0] sm:$0xff]
    %v1191 = vld [vmem:[#allocation2 + $0x3c8] sm:$0xff]
    %v1192 = vld [vmem:[#allocation2 + $0x3d0] sm:$0xff]
    %v1193 = vld [vmem:[#allocation2 + $0x3d8] sm:$0xff]
    %v1194 = vld [vmem:[#allocation2 + $0x3e0] sm:$0xff]
    %v1195 = vld [vmem:[#allocation2 + $0x3e8] sm:$0xff]
    %v1196 = vld [vmem:[#allocation2 + $0x3f0] sm:$0xff]
    %v1197 = vld [vmem:[#allocation2 + $0x408] sm:$0xff]
    %v1198 = vld [vmem:[#allocation2 + $0x410] sm:$0xff]
    %1199 = vmatprep.subr.mxu0 0.0
    %1200 = vmatpush1.msra.mxu0 0.0
    %1201 = vmatprep.subr.mxu0 0.0
    %1202 = vmatpush1.msra.mxu0 0.0
    %1203 = vmatprep.subr.mxu0 0.0
    %1204 = vmatpush1.msra.mxu0 0.0
    %1205 = vmatprep.subr.mxu0 0.0
    %1206 = vmatpush1.msra.mxu0 0.0
    %1207 = vmatprep.subr.mxu0 0.0
    %1208 = vmatpush1.msra.mxu0 %v1196
    %1209 = vmatprep.subr.mxu0 0.0
    %1210 = vmatpush1.msra.mxu0 %v1195
    %1211 = vmatprep.subr.mxu0 0.0
    %1212 = vmatpush1.msra.mxu0 %v1194
    %1213 = vmatprep.subr.mxu0 0.0
    %1214 = vmatpush1.msra.mxu0 %v1193
    %1215 = vmatprep.subr.mxu0 0.0
    %1216 = vmatpush1.msra.mxu0 %v1192
    %1217 = vmatprep.subr.mxu0 0.0
    %1218 = vmatpush1.msra.mxu0 %v1191
    %1219 = vmatprep.subr.mxu0 0.0
    %1220 = vmatpush1.msra.mxu0 %v1190
    %1221 = vmatprep.subr.mxu0 0.0
    %1222 = vmatpush1.msra.mxu0 %v1189
    %1223 = vmatprep.subr.mxu0 0.0
    %1224 = vmatpush1.msra.mxu0 %v1188
    %1225 = vmatprep.subr.mxu0 0.0
    %1226 = vmatpush1.msra.mxu0 %v1187
    %1227 = vmatprep.subr.mxu0 0.0
    %1228 = vmatpush1.msra.mxu0 %v1186
    %1229 = vmatprep.subr.mxu0 0.0
    %1230 = vmatpush1.msra.mxu0 %v1185
    %1231 = vmatprep.subr.mxu0 0.0
    %1232 = vmatpush2.msra.mxu0 0.0
    %1233 = vmatprep.subr.mxu0 0.0
    %1234 = vmatpush2.msra.mxu0 0.0
    %1235 = vmatprep.subr.mxu0 0.0
    %1236 = vmatpush2.msra.mxu0 0.0
    %1237 = vmatprep.subr.mxu0 0.0
    %1238 = vmatpush2.msra.mxu0 0.0
    %1239 = vmatprep.subr.mxu0 0.0
    %1240 = vmatpush2.msra.mxu0 0.0
    %1241 = vmatprep.subr.mxu0 0.0
    %1242 = vmatpush2.msra.mxu0 0.0
    %1243 = vmatprep.subr.mxu0 0.0
    %1244 = vmatpush2.msra.mxu0 0.0
    %1245 = vmatprep.subr.mxu0 0.0
    %1246 = vmatpush2.msra.mxu0 0.0
    %1247 = vmatprep.subr.mxu0 0.0
    %1248 = vmatpush2.msra.mxu0 0.0
    %1249 = vmatprep.subr.mxu0 0.0
    %1250 = vmatpush2.msra.mxu0 0.0
    %1251 = vmatprep.subr.mxu0 0.0
    %1252 = vmatpush2.msra.mxu0 0.0
    %1253 = vmatprep.subr.mxu0 0.0
    %1254 = vmatpush2.msra.mxu0 0.0
    %1255 = vmatprep.subr.mxu0 0.0
    %1256 = vmatpush2.msra.mxu0 0.0
    %1257 = vmatprep.subr.mxu0 0.0
    %1258 = vmatpush2.msra.mxu0 0.0
    %1259 = vmatprep.subr.mxu0 0.0
    %1260 = vmatpush2.msra.mxu0 0.0
    %1261 = vmatprep.subr.mxu0 0.0
    %1262 = vmatpush2.msra.mxu0 0.0
    %1263 = vmatprep.mubr.f32.mxu0 0.0
    %1264 = vmatmul.mubr.f32.gmra.mxu0 %v1105
    %v1265 = vpop.f32.mrf.mxu0
    %v1266 = vadd.f32 %v1197, %v1265
    %v1267 = vpop.f32.mrf.mxu0
    %1268 = vmatprep.mubr.f32.mxu0 0.0
    %1269 = vmatmul.mubr.f32.gmra.mxu0 %v1108
    %v1270 = vpop.f32.mrf.mxu0
    %v1271 = vadd.f32 %v1198, %v1270
    %v1272 = vpop.f32.mrf.mxu0
    %1273 = vdwg.mxu0
    %v1274 = vtanh.pop %v1177
    %v1275 = vtanh.pop %v1182
    %v1276 = vsub.f32 0.0, %v1266
    %v1277 = vsub.f32 0.0, %v1271
    %v1278 = vmul.f32 %v1276, 1.442695
    %v1279 = vpow.pop %v1278
    %v1280 = vmul.f32 %v1277, 1.442695
    %v1281 = vpow.pop %v1280
    %v1282 = vadd.f32 %v1279, 1.0
    %v1283 = vadd.f32 %v1281, 1.0
    %v1284 = vrcp.pop %v1282
    %v1285 = vrcp.pop %v1283
    %v1286 = vmul.f32 %v1274, %v1284
    %v1287 = vmul.f32 %v1275, %v1285
    %v1288 = vld [vmem:[#allocation2 + $0x418] sm:$0xff]
    %v1289 = vld [vmem:[#allocation2 + $0x420] sm:$0xff]
    %v1290 = vld [vmem:[#allocation2 + $0x428] sm:$0xff]
    %v1291 = vld [vmem:[#allocation2 + $0x430] sm:$0xff]
    %v1292 = vld [vmem:[#allocation2 + $0x438] sm:$0xff]
    %v1293 = vld [vmem:[#allocation2 + $0x440] sm:$0xff]
    %v1294 = vld [vmem:[#allocation2 + $0x448] sm:$0xff]
    %v1295 = vld [vmem:[#allocation2 + $0x450] sm:$0xff]
    %vm1296 = vcmask 523264
    %v1298 = vsel %vm1296, %v1286, 0
    %v1301 = vsel %vm1296, %v1287, 0
    %1303 = vmatprep.subr.mxu0 0.0
    %1304 = vmatpush1.msra.mxu0 0.0
    %1305 = vmatprep.subr.mxu0 0.0
    %1306 = vmatpush1.msra.mxu0 0.0
    %1307 = vmatprep.subr.mxu0 0.0
    %1308 = vmatpush1.msra.mxu0 0.0
    %1309 = vmatprep.subr.mxu0 0.0
    %1310 = vmatpush1.msra.mxu0 0.0
    %1311 = vmatprep.subr.mxu0 0.0
    %1312 = vmatpush1.msra.mxu0 0.0
    %1313 = vmatprep.subr.mxu0 0.0
    %1314 = vmatpush1.msra.mxu0 0.0
    %1315 = vmatprep.subr.mxu0 0.0
    %1316 = vmatpush1.msra.mxu0 0.0
    %1317 = vmatprep.subr.mxu0 0.0
    %1318 = vmatpush1.msra.mxu0 0.0
    %1319 = vmatprep.subr.mxu0 0.0
    %1320 = vmatpush1.msra.mxu0 %v1295
    %1321 = vmatprep.subr.mxu0 0.0
    %1322 = vmatpush1.msra.mxu0 %v1294
    %1323 = vmatprep.subr.mxu0 0.0
    %1324 = vmatpush1.msra.mxu0 %v1293
    %1325 = vmatprep.subr.mxu0 0.0
    %1326 = vmatpush1.msra.mxu0 %v1292
    %1327 = vmatprep.subr.mxu0 0.0
    %1328 = vmatpush1.msra.mxu0 %v1291
    %1329 = vmatprep.subr.mxu0 0.0
    %1330 = vmatpush1.msra.mxu0 %v1290
    %1331 = vmatprep.subr.mxu0 0.0
    %1332 = vmatpush1.msra.mxu0 %v1289
    %1333 = vmatprep.subr.mxu0 0.0
    %1334 = vmatpush1.msra.mxu0 %v1288
    %1335 = vmatprep.subr.mxu0 0.0
    %1336 = vmatpush2.msra.mxu0 0.0
    %1337 = vmatprep.subr.mxu0 0.0
    %1338 = vmatpush2.msra.mxu0 0.0
    %1339 = vmatprep.subr.mxu0 0.0
    %1340 = vmatpush2.msra.mxu0 0.0
    %1341 = vmatprep.subr.mxu0 0.0
    %1342 = vmatpush2.msra.mxu0 0.0
    %1343 = vmatprep.subr.mxu0 0.0
    %1344 = vmatpush2.msra.mxu0 0.0
    %1345 = vmatprep.subr.mxu0 0.0
    %1346 = vmatpush2.msra.mxu0 0.0
    %1347 = vmatprep.subr.mxu0 0.0
    %1348 = vmatpush2.msra.mxu0 0.0
    %1349 = vmatprep.subr.mxu0 0.0
    %1350 = vmatpush2.msra.mxu0 0.0
    %1351 = vmatprep.subr.mxu0 0.0
    %1352 = vmatpush2.msra.mxu0 0.0
    %1353 = vmatprep.subr.mxu0 0.0
    %1354 = vmatpush2.msra.mxu0 0.0
    %1355 = vmatprep.subr.mxu0 0.0
    %1356 = vmatpush2.msra.mxu0 0.0
    %1357 = vmatprep.subr.mxu0 0.0
    %1358 = vmatpush2.msra.mxu0 0.0
    %1359 = vmatprep.subr.mxu0 0.0
    %1360 = vmatpush2.msra.mxu0 0.0
    %1361 = vmatprep.subr.mxu0 0.0
    %1362 = vmatpush2.msra.mxu0 0.0
    %1363 = vmatprep.subr.mxu0 0.0
    %1364 = vmatpush2.msra.mxu0 0.0
    %1365 = vmatprep.subr.mxu0 0.0
    %1366 = vmatpush2.msra.mxu0 0.0
    %1367 = vmatprep.mubr.f32.mxu0 0.0
    %1368 = vmatmul.mubr.f32.gmra.mxu0 %v1298
    %v1369 = vpop.f32.mrf.mxu0
    %v1370 = vadd.f32 0.0, %v1369
    %v1371 = vpop.f32.mrf.mxu0
    %1372 = vmatprep.mubr.f32.mxu0 0.0
    %1373 = vmatmul.mubr.f32.gmra.mxu0 %v1301
    %v1374 = vpop.f32.mrf.mxu0
    %v1375 = vadd.f32 0.0, %v1374
    %v1376 = vpop.f32.mrf.mxu0
    %1377 = vdwg.mxu0
    %v1378 = vadd.f32 %v555, %v1370
    %v1379 = vadd.f32 %v560, %v1375
    %v1380 = vld [vmem:[#allocation2 + $0x458] sm:$0xff]
    %v1381 = vld [vmem:[#allocation2 + $0x460] sm:$0xff]
    %v1382 = vadd.f32 %v1378, %v1380
    %v1383 = vadd.f32 %v1379, %v1381
    %1384 = vmatprep.subr.mxu0 0.0
    %1385 = vmatpush1.msra.mxu0 0.0
    %1386 = vmatprep.subr.mxu0 0.0
    %1387 = vmatpush1.msra.mxu0 0.0
    %1388 = vmatprep.subr.mxu0 0.0
    %1389 = vmatpush1.msra.mxu0 0.0
    %1390 = vmatprep.subr.mxu0 0.0
    %1391 = vmatpush1.msra.mxu0 0.0
    %1392 = vmatprep.subr.mxu0 0.0
    %1393 = vmatpush1.msra.mxu0 0.0
    %1394 = vmatprep.subr.mxu0 0.0
    %1395 = vmatpush1.msra.mxu0 0.0
    %1396 = vmatprep.subr.mxu0 0.0
    %1397 = vmatpush1.msra.mxu0 0.0
    %1398 = vmatprep.subr.mxu0 0.0
    %1399 = vmatpush1.msra.mxu0 0.0
    %1400 = vmatprep.subr.mxu0 0.0
    %1401 = vmatpush1.msra.mxu0 0.0
    %1402 = vmatprep.subr.mxu0 0.0
    %1403 = vmatpush1.msra.mxu0 0.0
    %1404 = vmatprep.subr.mxu0 0.0
    %1405 = vmatpush1.msra.mxu0 0.0
    %1406 = vmatprep.subr.mxu0 0.0
    %1407 = vmatpush1.msra.mxu0 0.0
    %1408 = vmatprep.subr.mxu0 0.0
    %1409 = vmatpush1.msra.mxu0 0.0
    %1410 = vmatprep.subr.mxu0 0.0
    %1411 = vmatpush1.msra.mxu0 0.0
    %1412 = vmatprep.subr.mxu0 0.0
    %1413 = vmatpush1.msra.mxu0 %v1287
    %1414 = vmatprep.subr.mxu0 0.0
    %1415 = vmatpush1.msra.mxu0 %v1286
    %1416 = vmatprep.subr.mxu0 0.0
    %1417 = vmatpush2.msra.mxu0 0.0
    %1418 = vmatprep.subr.mxu0 0.0
    %1419 = vmatpush2.msra.mxu0 0.0
    %1420 = vmatprep.subr.mxu0 0.0
    %1421 = vmatpush2.msra.mxu0 0.0
    %1422 = vmatprep.subr.mxu0 0.0
    %1423 = vmatpush2.msra.mxu0 0.0
    %1424 = vmatprep.subr.mxu0 0.0
    %1425 = vmatpush2.msra.mxu0 0.0
    %1426 = vmatprep.subr.mxu0 0.0
    %1427 = vmatpush2.msra.mxu0 0.0
    %1428 = vmatprep.subr.mxu0 0.0
    %1429 = vmatpush2.msra.mxu0 0.0
    %1430 = vmatprep.subr.mxu0 0.0
    %1431 = vmatpush2.msra.mxu0 0.0
    %1432 = vmatprep.subr.mxu0 0.0
    %1433 = vmatpush2.msra.mxu0 0.0
    %1434 = vmatprep.subr.mxu0 0.0
    %1435 = vmatpush2.msra.mxu0 0.0
    %1436 = vmatprep.subr.mxu0 0.0
    %1437 = vmatpush2.msra.mxu0 0.0
    %1438 = vmatprep.subr.mxu0 0.0
    %1439 = vmatpush2.msra.mxu0 0.0
    %1440 = vmatprep.subr.mxu0 0.0
    %1441 = vmatpush2.msra.mxu0 0.0
    %1442 = vmatprep.subr.mxu0 0.0
    %1443 = vmatpush2.msra.mxu0 0.0
    %1444 = vmatprep.subr.mxu0 0.0
    %1445 = vmatpush2.msra.mxu0 0.0
    %1446 = vmatprep.subr.mxu0 0.0
    %1447 = vmatpush2.msra.mxu0 0.0
    %1448 = vmatprep.mubr.f32.mxu0 0.0
    %1449 = vmatmul.mubr.f32.gmra.mxu0 %v565
    %v1450 = vpop.f32.mrf.mxu0
    %v1451 = vadd.f32 0.0, %v1450
    %v1452 = vpop.f32.mrf.mxu0
    %1453 = vmatprep.mubr.f32.mxu0 0.0
    %1454 = vmatmul.mubr.f32.gmra.mxu0 %v568
    %v1455 = vpop.f32.mrf.mxu0
    %v1456 = vadd.f32 0.0, %v1455
    %v1457 = vpop.f32.mrf.mxu0
    %1458 = vdwg.mxu0
    %1459 = vmatprep.subr.mxu0 0.0
    %1460 = vmatpush1.msra.mxu0 0.0
    %1461 = vmatprep.subr.mxu0 0.0
    %1462 = vmatpush1.msra.mxu0 0.0
    %1463 = vmatprep.subr.mxu0 0.0
    %1464 = vmatpush1.msra.mxu0 0.0
    %1465 = vmatprep.subr.mxu0 0.0
    %1466 = vmatpush1.msra.mxu0 0.0
    %1467 = vmatprep.subr.mxu0 0.0
    %1468 = vmatpush1.msra.mxu0 0.0
    %1469 = vmatprep.subr.mxu0 0.0
    %1470 = vmatpush1.msra.mxu0 0.0
    %1471 = vmatprep.subr.mxu0 0.0
    %1472 = vmatpush1.msra.mxu0 0.0
    %1473 = vmatprep.subr.mxu0 0.0
    %1474 = vmatpush1.msra.mxu0 0.0
    %1475 = vmatprep.subr.mxu0 0.0
    %1476 = vmatpush1.msra.mxu0 0.0
    %1477 = vmatprep.subr.mxu0 0.0
    %1478 = vmatpush1.msra.mxu0 0.0
    %1479 = vmatprep.subr.mxu0 0.0
    %1480 = vmatpush1.msra.mxu0 0.0
    %1481 = vmatprep.subr.mxu0 0.0
    %1482 = vmatpush1.msra.mxu0 0.0
    %1483 = vmatprep.subr.mxu0 0.0
    %1484 = vmatpush1.msra.mxu0 0.0
    %1485 = vmatprep.subr.mxu0 0.0
    %1486 = vmatpush1.msra.mxu0 0.0
    %1487 = vmatprep.subr.mxu0 0.0
    %1488 = vmatpush1.msra.mxu0 %v1456
    %1489 = vmatprep.subr.mxu0 0.0
    %1490 = vmatpush1.msra.mxu0 %v1451
    %1491 = vmatprep.subr.mxu0 0.0
    %1492 = vmatpush2.msra.mxu0 0.0
    %1493 = vmatprep.subr.mxu0 0.0
    %1494 = vmatpush2.msra.mxu0 0.0
    %1495 = vmatprep.subr.mxu0 0.0
    %1496 = vmatpush2.msra.mxu0 0.0
    %1497 = vmatprep.subr.mxu0 0.0
    %1498 = vmatpush2.msra.mxu0 0.0
    %1499 = vmatprep.subr.mxu0 0.0
    %1500 = vmatpush2.msra.mxu0 0.0
    %1501 = vmatprep.subr.mxu0 0.0
    %1502 = vmatpush2.msra.mxu0 0.0
    %1503 = vmatprep.subr.mxu0 0.0
    %1504 = vmatpush2.msra.mxu0 0.0
    %1505 = vmatprep.subr.mxu0 0.0
    %1506 = vmatpush2.msra.mxu0 0.0
    %1507 = vmatprep.subr.mxu0 0.0
    %1508 = vmatpush2.msra.mxu0 0.0
    %1509 = vmatprep.subr.mxu0 0.0
    %1510 = vmatpush2.msra.mxu0 0.0
    %1511 = vmatprep.subr.mxu0 0.0
    %1512 = vmatpush2.msra.mxu0 0.0
    %1513 = vmatprep.subr.mxu0 0.0
    %1514 = vmatpush2.msra.mxu0 0.0
    %1515 = vmatprep.subr.mxu0 0.0
    %1516 = vmatpush2.msra.mxu0 0.0
    %1517 = vmatprep.subr.mxu0 0.0
    %1518 = vmatpush2.msra.mxu0 0.0
    %1519 = vmatprep.subr.mxu0 0.0
    %1520 = vmatpush2.msra.mxu0 0.0
    %1521 = vmatprep.subr.mxu0 0.0
    %1522 = vmatpush2.msra.mxu0 0.0
    %1523 = vmatprep.mubr.f32.mxu0 0.0
    %1524 = vmatmul.mubr.f32.gmra.mxu0 %v565
    %v1525 = vpop.f32.mrf.mxu0
    %v1526 = vadd.f32 0.0, %v1525
    %v1527 = vpop.f32.mrf.mxu0
    %1528 = vmatprep.mubr.f32.mxu0 0.0
    %1529 = vmatmul.mubr.f32.gmra.mxu0 %v568
    %v1530 = vpop.f32.mrf.mxu0
    %v1531 = vadd.f32 0.0, %v1530
    %v1532 = vpop.f32.mrf.mxu0
    %1533 = vdwg.mxu0
    %v1534 = vld [vmem:[#allocation2 + $0x468] sm:$0xff]
    %v1535 = vld [vmem:[#allocation2 + $0x470] sm:$0xff]
    %v1536 = vld [vmem:[#allocation2 + $0x478] sm:$0xff]
    %v1537 = vld [vmem:[#allocation2 + $0x480] sm:$0xff]
    %v1538 = vld [vmem:[#allocation2 + $0x488] sm:$0xff]
    %v1539 = vld [vmem:[#allocation2 + $0x490] sm:$0xff]
    %v1540 = vld [vmem:[#allocation2 + $0x498] sm:$0xff]
    %v1541 = vld [vmem:[#allocation2 + $0x4a0] sm:$0xff]
    %v1542 = vld [vmem:[#allocation2 + $0x4a8] sm:$0xff]
    %v1543 = vld [vmem:[#allocation2 + $0x4b0] sm:$0xff]
    %v1544 = vld [vmem:[#allocation2 + $0x4b8] sm:$0xff]
    %v1545 = vld [vmem:[#allocation2 + $0x4c0] sm:$0xff]
    %v1546 = vld [vmem:[#allocation2 + $0x4c8] sm:$0xff]
    %v1547 = vld [vmem:[#allocation2 + $0x4d0] sm:$0xff]
    %v1548 = vld [vmem:[#allocation2 + $0x4d8] sm:$0xff]
    %v1549 = vld [vmem:[#allocation2 + $0x4e0] sm:$0xff]
    %v1551 = vsel %vm1296, %v1451, 0
    %v1554 = vsel %vm1296, %v1456, 0
    %1556 = vmatprep.subr.mxu0 0.0
    %1557 = vmatpush1.msra.mxu0 0.0
    %1558 = vmatprep.subr.mxu0 0.0
    %1559 = vmatpush1.msra.mxu0 0.0
    %1560 = vmatprep.subr.mxu0 0.0
    %1561 = vmatpush1.msra.mxu0 0.0
    %1562 = vmatprep.subr.mxu0 0.0
    %1563 = vmatpush1.msra.mxu0 0.0
    %1564 = vmatprep.subr.mxu0 0.0
    %1565 = vmatpush1.msra.mxu0 0.0
    %1566 = vmatprep.subr.mxu0 0.0
    %1567 = vmatpush1.msra.mxu0 0.0
    %1568 = vmatprep.subr.mxu0 0.0
    %1569 = vmatpush1.msra.mxu0 0.0
    %1570 = vmatprep.subr.mxu0 0.0
    %1571 = vmatpush1.msra.mxu0 0.0
    %1572 = vmatprep.subr.mxu0 0.0
    %1573 = vmatpush1.msra.mxu0 %v1549
    %1574 = vmatprep.subr.mxu0 0.0
    %1575 = vmatpush1.msra.mxu0 %v1548
    %1576 = vmatprep.subr.mxu0 0.0
    %1577 = vmatpush1.msra.mxu0 %v1547
    %1578 = vmatprep.subr.mxu0 0.0
    %1579 = vmatpush1.msra.mxu0 %v1546
    %1580 = vmatprep.subr.mxu0 0.0
    %1581 = vmatpush1.msra.mxu0 %v1545
    %1582 = vmatprep.subr.mxu0 0.0
    %1583 = vmatpush1.msra.mxu0 %v1544
    %1584 = vmatprep.subr.mxu0 0.0
    %1585 = vmatpush1.msra.mxu0 %v1543
    %1586 = vmatprep.subr.mxu0 0.0
    %1587 = vmatpush1.msra.mxu0 %v1542
    %1588 = vmatprep.subr.mxu0 0.0
    %1589 = vmatpush2.msra.mxu0 0.0
    %1590 = vmatprep.subr.mxu0 0.0
    %1591 = vmatpush2.msra.mxu0 0.0
    %1592 = vmatprep.subr.mxu0 0.0
    %1593 = vmatpush2.msra.mxu0 0.0
    %1594 = vmatprep.subr.mxu0 0.0
    %1595 = vmatpush2.msra.mxu0 0.0
    %1596 = vmatprep.subr.mxu0 0.0
    %1597 = vmatpush2.msra.mxu0 0.0
    %1598 = vmatprep.subr.mxu0 0.0
    %1599 = vmatpush2.msra.mxu0 0.0
    %1600 = vmatprep.subr.mxu0 0.0
    %1601 = vmatpush2.msra.mxu0 0.0
    %1602 = vmatprep.subr.mxu0 0.0
    %1603 = vmatpush2.msra.mxu0 0.0
    %1604 = vmatprep.subr.mxu0 0.0
    %1605 = vmatpush2.msra.mxu0 0.0
    %1606 = vmatprep.subr.mxu0 0.0
    %1607 = vmatpush2.msra.mxu0 0.0
    %1608 = vmatprep.subr.mxu0 0.0
    %1609 = vmatpush2.msra.mxu0 0.0
    %1610 = vmatprep.subr.mxu0 0.0
    %1611 = vmatpush2.msra.mxu0 0.0
    %1612 = vmatprep.subr.mxu0 0.0
    %1613 = vmatpush2.msra.mxu0 0.0
    %1614 = vmatprep.subr.mxu0 0.0
    %1615 = vmatpush2.msra.mxu0 0.0
    %1616 = vmatprep.subr.mxu0 0.0
    %1617 = vmatpush2.msra.mxu0 0.0
    %1618 = vmatprep.subr.mxu0 0.0
    %1619 = vmatpush2.msra.mxu0 0.0
    %1620 = vmatprep.mubr.f32.mxu0 0.0
    %1621 = vmatmul.mubr.f32.gmra.mxu0 %v1551
    %v1622 = vpop.f32.mrf.mxu0
    %v1623 = vadd.f32 0.0, %v1622
    %v1624 = vpop.f32.mrf.mxu0
    %1625 = vmatprep.mubr.f32.mxu0 0.0
    %1626 = vmatmul.mubr.f32.gmra.mxu0 %v1554
    %v1627 = vpop.f32.mrf.mxu0
    %v1628 = vadd.f32 0.0, %v1627
    %v1629 = vpop.f32.mrf.mxu0
    %1630 = vdwg.mxu0
    %1631 = vmatprep.subr.mxu0 0.0
    %1632 = vmatpush1.msra.mxu0 0.0
    %1633 = vmatprep.subr.mxu0 0.0
    %1634 = vmatpush1.msra.mxu0 0.0
    %1635 = vmatprep.subr.mxu0 0.0
    %1636 = vmatpush1.msra.mxu0 0.0
    %1637 = vmatprep.subr.mxu0 0.0
    %1638 = vmatpush1.msra.mxu0 0.0
    %1639 = vmatprep.subr.mxu0 0.0
    %1640 = vmatpush1.msra.mxu0 0.0
    %1641 = vmatprep.subr.mxu0 0.0
    %1642 = vmatpush1.msra.mxu0 0.0
    %1643 = vmatprep.subr.mxu0 0.0
    %1644 = vmatpush1.msra.mxu0 0.0
    %1645 = vmatprep.subr.mxu0 0.0
    %1646 = vmatpush1.msra.mxu0 0.0
    %1647 = vmatprep.subr.mxu0 0.0
    %1648 = vmatpush1.msra.mxu0 %v1541
    %1649 = vmatprep.subr.mxu0 0.0
    %1650 = vmatpush1.msra.mxu0 %v1540
    %1651 = vmatprep.subr.mxu0 0.0
    %1652 = vmatpush1.msra.mxu0 %v1539
    %1653 = vmatprep.subr.mxu0 0.0
    %1654 = vmatpush1.msra.mxu0 %v1538
    %1655 = vmatprep.subr.mxu0 0.0
    %1656 = vmatpush1.msra.mxu0 %v1537
    %1657 = vmatprep.subr.mxu0 0.0
    %1658 = vmatpush1.msra.mxu0 %v1536
    %1659 = vmatprep.subr.mxu0 0.0
    %1660 = vmatpush1.msra.mxu0 %v1535
    %1661 = vmatprep.subr.mxu0 0.0
    %1662 = vmatpush1.msra.mxu0 %v1534
    %1663 = vmatprep.subr.mxu0 0.0
    %1664 = vmatpush2.msra.mxu0 0.0
    %1665 = vmatprep.subr.mxu0 0.0
    %1666 = vmatpush2.msra.mxu0 0.0
    %1667 = vmatprep.subr.mxu0 0.0
    %1668 = vmatpush2.msra.mxu0 0.0
    %1669 = vmatprep.subr.mxu0 0.0
    %1670 = vmatpush2.msra.mxu0 0.0
    %1671 = vmatprep.subr.mxu0 0.0
    %1672 = vmatpush2.msra.mxu0 0.0
    %1673 = vmatprep.subr.mxu0 0.0
    %1674 = vmatpush2.msra.mxu0 0.0
    %1675 = vmatprep.subr.mxu0 0.0
    %1676 = vmatpush2.msra.mxu0 0.0
    %1677 = vmatprep.subr.mxu0 0.0
    %1678 = vmatpush2.msra.mxu0 0.0
    %1679 = vmatprep.subr.mxu0 0.0
    %1680 = vmatpush2.msra.mxu0 0.0
    %1681 = vmatprep.subr.mxu0 0.0
    %1682 = vmatpush2.msra.mxu0 0.0
    %1683 = vmatprep.subr.mxu0 0.0
    %1684 = vmatpush2.msra.mxu0 0.0
    %1685 = vmatprep.subr.mxu0 0.0
    %1686 = vmatpush2.msra.mxu0 0.0
    %1687 = vmatprep.subr.mxu0 0.0
    %1688 = vmatpush2.msra.mxu0 0.0
    %1689 = vmatprep.subr.mxu0 0.0
    %1690 = vmatpush2.msra.mxu0 0.0
    %1691 = vmatprep.subr.mxu0 0.0
    %1692 = vmatpush2.msra.mxu0 0.0
    %1693 = vmatprep.subr.mxu0 0.0
    %1694 = vmatpush2.msra.mxu0 0.0
    %1695 = vmatprep.mubr.f32.mxu0 0.0
    %1696 = vmatmul.mubr.f32.gmra.mxu0 %v1298
    %v1697 = vpop.f32.mrf.mxu0
    %v1698 = vadd.f32 %v1623, %v1697
    %v1699 = vpop.f32.mrf.mxu0
    %1700 = vmatprep.mubr.f32.mxu0 0.0
    %1701 = vmatmul.mubr.f32.gmra.mxu0 %v1301
    %v1702 = vpop.f32.mrf.mxu0
    %v1703 = vadd.f32 %v1628, %v1702
    %v1704 = vpop.f32.mrf.mxu0
    %1705 = vdwg.mxu0
    %v1706 = vld [vmem:[#allocation2 + $0x4e8] sm:$0xff]
    %v1707 = vld [vmem:[#allocation2 + $0x4f0] sm:$0xff]
    %v1708 = vld [vmem:[#allocation2 + $0x4f8] sm:$0xff]
    %v1709 = vld [vmem:[#allocation2 + $0x500] sm:$0xff]
    %v1710 = vld [vmem:[#allocation2 + $0x508] sm:$0xff]
    %v1711 = vld [vmem:[#allocation2 + $0x510] sm:$0xff]
    %v1712 = vld [vmem:[#allocation2 + $0x518] sm:$0xff]
    %v1713 = vld [vmem:[#allocation2 + $0x520] sm:$0xff]
    %v1715 = vsel %vm1296, %v1526, 0
    %v1718 = vsel %vm1296, %v1531, 0
    %1720 = vmatprep.subr.mxu0 0.0
    %1721 = vmatpush1.msra.mxu0 0.0
    %1722 = vmatprep.subr.mxu0 0.0
    %1723 = vmatpush1.msra.mxu0 0.0
    %1724 = vmatprep.subr.mxu0 0.0
    %1725 = vmatpush1.msra.mxu0 0.0
    %1726 = vmatprep.subr.mxu0 0.0
    %1727 = vmatpush1.msra.mxu0 0.0
    %1728 = vmatprep.subr.mxu0 0.0
    %1729 = vmatpush1.msra.mxu0 0.0
    %1730 = vmatprep.subr.mxu0 0.0
    %1731 = vmatpush1.msra.mxu0 0.0
    %1732 = vmatprep.subr.mxu0 0.0
    %1733 = vmatpush1.msra.mxu0 0.0
    %1734 = vmatprep.subr.mxu0 0.0
    %1735 = vmatpush1.msra.mxu0 0.0
    %1736 = vmatprep.subr.mxu0 0.0
    %1737 = vmatpush1.msra.mxu0 %v1713
    %1738 = vmatprep.subr.mxu0 0.0
    %1739 = vmatpush1.msra.mxu0 %v1712
    %1740 = vmatprep.subr.mxu0 0.0
    %1741 = vmatpush1.msra.mxu0 %v1711
    %1742 = vmatprep.subr.mxu0 0.0
    %1743 = vmatpush1.msra.mxu0 %v1710
    %1744 = vmatprep.subr.mxu0 0.0
    %1745 = vmatpush1.msra.mxu0 %v1709
    %1746 = vmatprep.subr.mxu0 0.0
    %1747 = vmatpush1.msra.mxu0 %v1708
    %1748 = vmatprep.subr.mxu0 0.0
    %1749 = vmatpush1.msra.mxu0 %v1707
    %1750 = vmatprep.subr.mxu0 0.0
    %1751 = vmatpush1.msra.mxu0 %v1706
    %1752 = vmatprep.subr.mxu0 0.0
    %1753 = vmatpush2.msra.mxu0 0.0
    %1754 = vmatprep.subr.mxu0 0.0
    %1755 = vmatpush2.msra.mxu0 0.0
    %1756 = vmatprep.subr.mxu0 0.0
    %1757 = vmatpush2.msra.mxu0 0.0
    %1758 = vmatprep.subr.mxu0 0.0
    %1759 = vmatpush2.msra.mxu0 0.0
    %1760 = vmatprep.subr.mxu0 0.0
    %1761 = vmatpush2.msra.mxu0 0.0
    %1762 = vmatprep.subr.mxu0 0.0
    %1763 = vmatpush2.msra.mxu0 0.0
    %1764 = vmatprep.subr.mxu0 0.0
    %1765 = vmatpush2.msra.mxu0 0.0
    %1766 = vmatprep.subr.mxu0 0.0
    %1767 = vmatpush2.msra.mxu0 0.0
    %1768 = vmatprep.subr.mxu0 0.0
    %1769 = vmatpush2.msra.mxu0 0.0
    %1770 = vmatprep.subr.mxu0 0.0
    %1771 = vmatpush2.msra.mxu0 0.0
    %1772 = vmatprep.subr.mxu0 0.0
    %1773 = vmatpush2.msra.mxu0 0.0
    %1774 = vmatprep.subr.mxu0 0.0
    %1775 = vmatpush2.msra.mxu0 0.0
    %1776 = vmatprep.subr.mxu0 0.0
    %1777 = vmatpush2.msra.mxu0 0.0
    %1778 = vmatprep.subr.mxu0 0.0
    %1779 = vmatpush2.msra.mxu0 0.0
    %1780 = vmatprep.subr.mxu0 0.0
    %1781 = vmatpush2.msra.mxu0 0.0
    %1782 = vmatprep.subr.mxu0 0.0
    %1783 = vmatpush2.msra.mxu0 0.0
    %1784 = vmatprep.mubr.f32.mxu0 0.0
    %1785 = vmatmul.mubr.f32.gmra.mxu0 %v1715
    %v1786 = vpop.f32.mrf.mxu0
    %v1787 = vadd.f32 0.0, %v1786
    %v1788 = vpop.f32.mrf.mxu0
    %1789 = vmatprep.mubr.f32.mxu0 0.0
    %1790 = vmatmul.mubr.f32.gmra.mxu0 %v1718
    %v1791 = vpop.f32.mrf.mxu0
    %v1792 = vadd.f32 0.0, %v1791
    %v1793 = vpop.f32.mrf.mxu0
    %1794 = vdwg.mxu0
    %v1795 = vadd.f32 %v1698, %v1787
    %v1796 = vadd.f32 %v1703, %v1792
    %v1797 = vld [vmem:[#allocation2 + $0x528] sm:$0xff]
    %v1798 = vld [vmem:[#allocation2 + $0x530] sm:$0xff]
    %v1799 = vld [vmem:[#allocation2 + $0x538] sm:$0xff]
    %v1800 = vld [vmem:[#allocation2 + $0x540] sm:$0xff]
    %v1801 = vld [vmem:[#allocation2 + $0x548] sm:$0xff]
    %v1802 = vld [vmem:[#allocation2 + $0x550] sm:$0xff]
    %v1803 = vld [vmem:[#allocation2 + $0x558] sm:$0xff]
    %v1804 = vld [vmem:[#allocation2 + $0x560] sm:$0xff]
    %v1805 = vld [vmem:[#allocation2 + $0x568] sm:$0xff]
    %v1806 = vld [vmem:[#allocation2 + $0x570] sm:$0xff]
    %v1807 = vld [vmem:[#allocation2 + $0x578] sm:$0xff]
    %v1808 = vld [vmem:[#allocation2 + $0x580] sm:$0xff]
    %1809 = vmatprep.subr.mxu0 0.0
    %1810 = vmatpush1.msra.mxu0 0.0
    %1811 = vmatprep.subr.mxu0 0.0
    %1812 = vmatpush1.msra.mxu0 0.0
    %1813 = vmatprep.subr.mxu0 0.0
    %1814 = vmatpush1.msra.mxu0 0.0
    %1815 = vmatprep.subr.mxu0 0.0
    %1816 = vmatpush1.msra.mxu0 0.0
    %1817 = vmatprep.subr.mxu0 0.0
    %1818 = vmatpush1.msra.mxu0 %v1808
    %1819 = vmatprep.subr.mxu0 0.0
    %1820 = vmatpush1.msra.mxu0 %v1807
    %1821 = vmatprep.subr.mxu0 0.0
    %1822 = vmatpush1.msra.mxu0 %v1806
    %1823 = vmatprep.subr.mxu0 0.0
    %1824 = vmatpush1.msra.mxu0 %v1805
    %1825 = vmatprep.subr.mxu0 0.0
    %1826 = vmatpush1.msra.mxu0 %v1804
    %1827 = vmatprep.subr.mxu0 0.0
    %1828 = vmatpush1.msra.mxu0 %v1803
    %1829 = vmatprep.subr.mxu0 0.0
    %1830 = vmatpush1.msra.mxu0 %v1802
    %1831 = vmatprep.subr.mxu0 0.0
    %1832 = vmatpush1.msra.mxu0 %v1801
    %1833 = vmatprep.subr.mxu0 0.0
    %1834 = vmatpush1.msra.mxu0 %v1800
    %1835 = vmatprep.subr.mxu0 0.0
    %1836 = vmatpush1.msra.mxu0 %v1799
    %1837 = vmatprep.subr.mxu0 0.0
    %1838 = vmatpush1.msra.mxu0 %v1798
    %1839 = vmatprep.subr.mxu0 0.0
    %1840 = vmatpush1.msra.mxu0 %v1797
    %1841 = vmatprep.subr.mxu0 0.0
    %1842 = vmatpush2.msra.mxu0 0.0
    %1843 = vmatprep.subr.mxu0 0.0
    %1844 = vmatpush2.msra.mxu0 0.0
    %1845 = vmatprep.subr.mxu0 0.0
    %1846 = vmatpush2.msra.mxu0 0.0
    %1847 = vmatprep.subr.mxu0 0.0
    %1848 = vmatpush2.msra.mxu0 0.0
    %1849 = vmatprep.subr.mxu0 0.0
    %1850 = vmatpush2.msra.mxu0 0.0
    %1851 = vmatprep.subr.mxu0 0.0
    %1852 = vmatpush2.msra.mxu0 0.0
    %1853 = vmatprep.subr.mxu0 0.0
    %1854 = vmatpush2.msra.mxu0 0.0
    %1855 = vmatprep.subr.mxu0 0.0
    %1856 = vmatpush2.msra.mxu0 0.0
    %1857 = vmatprep.subr.mxu0 0.0
    %1858 = vmatpush2.msra.mxu0 0.0
    %1859 = vmatprep.subr.mxu0 0.0
    %1860 = vmatpush2.msra.mxu0 0.0
    %1861 = vmatprep.subr.mxu0 0.0
    %1862 = vmatpush2.msra.mxu0 0.0
    %1863 = vmatprep.subr.mxu0 0.0
    %1864 = vmatpush2.msra.mxu0 0.0
    %1865 = vmatprep.subr.mxu0 0.0
    %1866 = vmatpush2.msra.mxu0 0.0
    %1867 = vmatprep.subr.mxu0 0.0
    %1868 = vmatpush2.msra.mxu0 0.0
    %1869 = vmatprep.subr.mxu0 0.0
    %1870 = vmatpush2.msra.mxu0 0.0
    %1871 = vmatprep.subr.mxu0 0.0
    %1872 = vmatpush2.msra.mxu0 0.0
    %1873 = vmatprep.mubr.f32.mxu0 0.0
    %1874 = vmatmul.mubr.f32.gmra.mxu0 %v1105
    %v1875 = vpop.f32.mrf.mxu0
    %v1876 = vadd.f32 0.0, %v1875
    %v1877 = vpop.f32.mrf.mxu0
    %1878 = vmatprep.mubr.f32.mxu0 0.0
    %1879 = vmatmul.mubr.f32.gmra.mxu0 %v1108
    %v1880 = vpop.f32.mrf.mxu0
    %v1881 = vadd.f32 0.0, %v1880
    %v1882 = vpop.f32.mrf.mxu0
    %1883 = vdwg.mxu0
    %v1884 = vadd.f32 %v1795, %v1876
    %v1885 = vadd.f32 %v1796, %v1881
    %v1886 = vld [vmem:[#allocation2 + $0x588] sm:$0xff]
    %v1887 = vld [vmem:[#allocation2 + $0x590] sm:$0xff]
    %v1888 = vadd.f32 %v1884, %v1886
    %v1889 = vadd.f32 %v1885, %v1887
    %v1890 = vld [vmem:[#allocation2 + $0x598] sm:$0xff]
    %v1891 = vld [vmem:[#allocation2 + $0x5a0] sm:$0xff]
    %v1892 = vld [vmem:[#allocation2 + $0x5a8] sm:$0xff]
    %v1893 = vld [vmem:[#allocation2 + $0x5b0] sm:$0xff]
    %v1894 = vld [vmem:[#allocation2 + $0x5b8] sm:$0xff]
    %v1895 = vld [vmem:[#allocation2 + $0x5c0] sm:$0xff]
    %v1896 = vld [vmem:[#allocation2 + $0x5c8] sm:$0xff]
    %v1897 = vld [vmem:[#allocation2 + $0x5d0] sm:$0xff]
    %v1898 = vld [vmem:[#allocation2 + $0x618] sm:$0xff]
    %v1899 = vld [vmem:[#allocation2 + $0x620] sm:$0xff]
    %v1901 = vsel %vm1296, %v1888, 0
    %v1904 = vsel %vm1296, %v1889, 0
    %1906 = vmatprep.subr.mxu0 0.0
    %1907 = vmatpush1.msra.mxu0 0.0
    %1908 = vmatprep.subr.mxu0 0.0
    %1909 = vmatpush1.msra.mxu0 0.0
    %1910 = vmatprep.subr.mxu0 0.0
    %1911 = vmatpush1.msra.mxu0 0.0
    %1912 = vmatprep.subr.mxu0 0.0
    %1913 = vmatpush1.msra.mxu0 0.0
    %1914 = vmatprep.subr.mxu0 0.0
    %1915 = vmatpush1.msra.mxu0 0.0
    %1916 = vmatprep.subr.mxu0 0.0
    %1917 = vmatpush1.msra.mxu0 0.0
    %1918 = vmatprep.subr.mxu0 0.0
    %1919 = vmatpush1.msra.mxu0 0.0
    %1920 = vmatprep.subr.mxu0 0.0
    %1921 = vmatpush1.msra.mxu0 0.0
    %1922 = vmatprep.subr.mxu0 0.0
    %1923 = vmatpush1.msra.mxu0 %v1897
    %1924 = vmatprep.subr.mxu0 0.0
    %1925 = vmatpush1.msra.mxu0 %v1896
    %1926 = vmatprep.subr.mxu0 0.0
    %1927 = vmatpush1.msra.mxu0 %v1895
    %1928 = vmatprep.subr.mxu0 0.0
    %1929 = vmatpush1.msra.mxu0 %v1894
    %1930 = vmatprep.subr.mxu0 0.0
    %1931 = vmatpush1.msra.mxu0 %v1893
    %1932 = vmatprep.subr.mxu0 0.0
    %1933 = vmatpush1.msra.mxu0 %v1892
    %1934 = vmatprep.subr.mxu0 0.0
    %1935 = vmatpush1.msra.mxu0 %v1891
    %1936 = vmatprep.subr.mxu0 0.0
    %1937 = vmatpush1.msra.mxu0 %v1890
    %1938 = vmatprep.subr.mxu0 0.0
    %1939 = vmatpush2.msra.mxu0 0.0
    %1940 = vmatprep.subr.mxu0 0.0
    %1941 = vmatpush2.msra.mxu0 0.0
    %1942 = vmatprep.subr.mxu0 0.0
    %1943 = vmatpush2.msra.mxu0 0.0
    %1944 = vmatprep.subr.mxu0 0.0
    %1945 = vmatpush2.msra.mxu0 0.0
    %1946 = vmatprep.subr.mxu0 0.0
    %1947 = vmatpush2.msra.mxu0 0.0
    %1948 = vmatprep.subr.mxu0 0.0
    %1949 = vmatpush2.msra.mxu0 0.0
    %1950 = vmatprep.subr.mxu0 0.0
    %1951 = vmatpush2.msra.mxu0 0.0
    %1952 = vmatprep.subr.mxu0 0.0
    %1953 = vmatpush2.msra.mxu0 0.0
    %1954 = vmatprep.subr.mxu0 0.0
    %1955 = vmatpush2.msra.mxu0 0.0
    %1956 = vmatprep.subr.mxu0 0.0
    %1957 = vmatpush2.msra.mxu0 0.0
    %1958 = vmatprep.subr.mxu0 0.0
    %1959 = vmatpush2.msra.mxu0 0.0
    %1960 = vmatprep.subr.mxu0 0.0
    %1961 = vmatpush2.msra.mxu0 0.0
    %1962 = vmatprep.subr.mxu0 0.0
    %1963 = vmatpush2.msra.mxu0 0.0
    %1964 = vmatprep.subr.mxu0 0.0
    %1965 = vmatpush2.msra.mxu0 0.0
    %1966 = vmatprep.subr.mxu0 0.0
    %1967 = vmatpush2.msra.mxu0 0.0
    %1968 = vmatprep.subr.mxu0 0.0
    %1969 = vmatpush2.msra.mxu0 0.0
    %1970 = vmatprep.mubr.f32.mxu0 0.0
    %1971 = vmatmul.mubr.f32.gmra.mxu0 %v1901
    %v1972 = vpop.f32.mrf.mxu0
    %v1973 = vadd.f32 %v1898, %v1972
    %v1974 = vpop.f32.mrf.mxu0
    %1975 = vmatprep.mubr.f32.mxu0 0.0
    %1976 = vmatmul.mubr.f32.gmra.mxu0 %v1904
    %v1977 = vpop.f32.mrf.mxu0
    %v1978 = vadd.f32 %v1899, %v1977
    %v1979 = vpop.f32.mrf.mxu0
    %1980 = vdwg.mxu0
    %v1981 = vld [vmem:[#allocation2 + $0x5d8] sm:$0xff]
    %v1982 = vld [vmem:[#allocation2 + $0x5e0] sm:$0xff]
    %v1983 = vld [vmem:[#allocation2 + $0x5e8] sm:$0xff]
    %v1984 = vld [vmem:[#allocation2 + $0x5f0] sm:$0xff]
    %v1985 = vld [vmem:[#allocation2 + $0x5f8] sm:$0xff]
    %v1986 = vld [vmem:[#allocation2 + $0x600] sm:$0xff]
    %v1987 = vld [vmem:[#allocation2 + $0x608] sm:$0xff]
    %v1988 = vld [vmem:[#allocation2 + $0x610] sm:$0xff]
    %v1989 = vld [vmem:[#allocation2 + $0x628] sm:$0xff]
    %v1990 = vld [vmem:[#allocation2 + $0x630] sm:$0xff]
    %1991 = vmatprep.subr.mxu0 0.0
    %1992 = vmatpush1.msra.mxu0 0.0
    %1993 = vmatprep.subr.mxu0 0.0
    %1994 = vmatpush1.msra.mxu0 0.0
    %1995 = vmatprep.subr.mxu0 0.0
    %1996 = vmatpush1.msra.mxu0 0.0
    %1997 = vmatprep.subr.mxu0 0.0
    %1998 = vmatpush1.msra.mxu0 0.0
    %1999 = vmatprep.subr.mxu0 0.0
    %2000 = vmatpush1.msra.mxu0 0.0
    %2001 = vmatprep.subr.mxu0 0.0
    %2002 = vmatpush1.msra.mxu0 0.0
    %2003 = vmatprep.subr.mxu0 0.0
    %2004 = vmatpush1.msra.mxu0 0.0
    %2005 = vmatprep.subr.mxu0 0.0
    %2006 = vmatpush1.msra.mxu0 0.0
    %2007 = vmatprep.subr.mxu0 0.0
    %2008 = vmatpush1.msra.mxu0 %v1988
    %2009 = vmatprep.subr.mxu0 0.0
    %2010 = vmatpush1.msra.mxu0 %v1987
    %2011 = vmatprep.subr.mxu0 0.0
    %2012 = vmatpush1.msra.mxu0 %v1986
    %2013 = vmatprep.subr.mxu0 0.0
    %2014 = vmatpush1.msra.mxu0 %v1985
    %2015 = vmatprep.subr.mxu0 0.0
    %2016 = vmatpush1.msra.mxu0 %v1984
    %2017 = vmatprep.subr.mxu0 0.0
    %2018 = vmatpush1.msra.mxu0 %v1983
    %2019 = vmatprep.subr.mxu0 0.0
    %2020 = vmatpush1.msra.mxu0 %v1982
    %2021 = vmatprep.subr.mxu0 0.0
    %2022 = vmatpush1.msra.mxu0 %v1981
    %2023 = vmatprep.subr.mxu0 0.0
    %2024 = vmatpush2.msra.mxu0 0.0
    %2025 = vmatprep.subr.mxu0 0.0
    %2026 = vmatpush2.msra.mxu0 0.0
    %2027 = vmatprep.subr.mxu0 0.0
    %2028 = vmatpush2.msra.mxu0 0.0
    %2029 = vmatprep.subr.mxu0 0.0
    %2030 = vmatpush2.msra.mxu0 0.0
    %2031 = vmatprep.subr.mxu0 0.0
    %2032 = vmatpush2.msra.mxu0 0.0
    %2033 = vmatprep.subr.mxu0 0.0
    %2034 = vmatpush2.msra.mxu0 0.0
    %2035 = vmatprep.subr.mxu0 0.0
    %2036 = vmatpush2.msra.mxu0 0.0
    %2037 = vmatprep.subr.mxu0 0.0
    %2038 = vmatpush2.msra.mxu0 0.0
    %2039 = vmatprep.subr.mxu0 0.0
    %2040 = vmatpush2.msra.mxu0 0.0
    %2041 = vmatprep.subr.mxu0 0.0
    %2042 = vmatpush2.msra.mxu0 0.0
    %2043 = vmatprep.subr.mxu0 0.0
    %2044 = vmatpush2.msra.mxu0 0.0
    %2045 = vmatprep.subr.mxu0 0.0
    %2046 = vmatpush2.msra.mxu0 0.0
    %2047 = vmatprep.subr.mxu0 0.0
    %2048 = vmatpush2.msra.mxu0 0.0
    %2049 = vmatprep.subr.mxu0 0.0
    %2050 = vmatpush2.msra.mxu0 0.0
    %2051 = vmatprep.subr.mxu0 0.0
    %2052 = vmatpush2.msra.mxu0 0.0
    %2053 = vmatprep.subr.mxu0 0.0
    %2054 = vmatpush2.msra.mxu0 0.0
    %2055 = vmatprep.mubr.f32.mxu0 0.0
    %2056 = vmatmul.mubr.f32.gmra.mxu0 %v1901
    %v2057 = vpop.f32.mrf.mxu0
    %v2058 = vadd.f32 %v1989, %v2057
    %v2059 = vpop.f32.mrf.mxu0
    %2060 = vmatprep.mubr.f32.mxu0 0.0
    %2061 = vmatmul.mubr.f32.gmra.mxu0 %v1904
    %v2062 = vpop.f32.mrf.mxu0
    %v2063 = vadd.f32 %v1990, %v2062
    %v2064 = vpop.f32.mrf.mxu0
    %2065 = vdwg.mxu0
    %v2066 = vtanh.pop %v1973
    %v2067 = vtanh.pop %v1978
    %v2068 = vsub.f32 0.0, %v2058
    %v2069 = vsub.f32 0.0, %v2063
    %v2070 = vmul.f32 %v2068, 1.442695
    %v2071 = vpow.pop %v2070
    %v2072 = vmul.f32 %v2069, 1.442695
    %v2073 = vpow.pop %v2072
    %v2074 = vadd.f32 %v2071, 1.0
    %v2075 = vadd.f32 %v2073, 1.0
    %v2076 = vrcp.pop %v2074
    %v2077 = vrcp.pop %v2075
    %v2078 = vmul.f32 %v2066, %v2076
    %v2079 = vmul.f32 %v2067, %v2077
    %v2080 = vld [vmem:[#allocation2 + $0x638] sm:$0xff]
    %v2081 = vld [vmem:[#allocation2 + $0x640] sm:$0xff]
    %v2082 = vld [vmem:[#allocation2 + $0x648] sm:$0xff]
    %v2083 = vld [vmem:[#allocation2 + $0x650] sm:$0xff]
    %v2084 = vld [vmem:[#allocation2 + $0x658] sm:$0xff]
    %v2085 = vld [vmem:[#allocation2 + $0x660] sm:$0xff]
    %vm2086 = vcmask 392192
    %v2088 = vsel %vm2086, %v2078, 0
    %v2091 = vsel %vm2086, %v2079, 0
    %2093 = vmatprep.subr.mxu0 0.0
    %2094 = vmatpush1.msra.mxu0 0.0
    %2095 = vmatprep.subr.mxu0 0.0
    %2096 = vmatpush1.msra.mxu0 0.0
    %2097 = vmatprep.subr.mxu0 0.0
    %2098 = vmatpush1.msra.mxu0 0.0
    %2099 = vmatprep.subr.mxu0 0.0
    %2100 = vmatpush1.msra.mxu0 0.0
    %2101 = vmatprep.subr.mxu0 0.0
    %2102 = vmatpush1.msra.mxu0 0.0
    %2103 = vmatprep.subr.mxu0 0.0
    %2104 = vmatpush1.msra.mxu0 0.0
    %2105 = vmatprep.subr.mxu0 0.0
    %2106 = vmatpush1.msra.mxu0 0.0
    %2107 = vmatprep.subr.mxu0 0.0
    %2108 = vmatpush1.msra.mxu0 0.0
    %2109 = vmatprep.subr.mxu0 0.0
    %2110 = vmatpush1.msra.mxu0 0.0
    %2111 = vmatprep.subr.mxu0 0.0
    %2112 = vmatpush1.msra.mxu0 0.0
    %2113 = vmatprep.subr.mxu0 0.0
    %2114 = vmatpush1.msra.mxu0 %v2085
    %2115 = vmatprep.subr.mxu0 0.0
    %2116 = vmatpush1.msra.mxu0 %v2084
    %2117 = vmatprep.subr.mxu0 0.0
    %2118 = vmatpush1.msra.mxu0 %v2083
    %2119 = vmatprep.subr.mxu0 0.0
    %2120 = vmatpush1.msra.mxu0 %v2082
    %2121 = vmatprep.subr.mxu0 0.0
    %2122 = vmatpush1.msra.mxu0 %v2081
    %2123 = vmatprep.subr.mxu0 0.0
    %2124 = vmatpush1.msra.mxu0 %v2080
    %2125 = vmatprep.subr.mxu0 0.0
    %2126 = vmatpush2.msra.mxu0 0.0
    %2127 = vmatprep.subr.mxu0 0.0
    %2128 = vmatpush2.msra.mxu0 0.0
    %2129 = vmatprep.subr.mxu0 0.0
    %2130 = vmatpush2.msra.mxu0 0.0
    %2131 = vmatprep.subr.mxu0 0.0
    %2132 = vmatpush2.msra.mxu0 0.0
    %2133 = vmatprep.subr.mxu0 0.0
    %2134 = vmatpush2.msra.mxu0 0.0
    %2135 = vmatprep.subr.mxu0 0.0
    %2136 = vmatpush2.msra.mxu0 0.0
    %2137 = vmatprep.subr.mxu0 0.0
    %2138 = vmatpush2.msra.mxu0 0.0
    %2139 = vmatprep.subr.mxu0 0.0
    %2140 = vmatpush2.msra.mxu0 0.0
    %2141 = vmatprep.subr.mxu0 0.0
    %2142 = vmatpush2.msra.mxu0 0.0
    %2143 = vmatprep.subr.mxu0 0.0
    %2144 = vmatpush2.msra.mxu0 0.0
    %2145 = vmatprep.subr.mxu0 0.0
    %2146 = vmatpush2.msra.mxu0 0.0
    %2147 = vmatprep.subr.mxu0 0.0
    %2148 = vmatpush2.msra.mxu0 0.0
    %2149 = vmatprep.subr.mxu0 0.0
    %2150 = vmatpush2.msra.mxu0 0.0
    %2151 = vmatprep.subr.mxu0 0.0
    %2152 = vmatpush2.msra.mxu0 0.0
    %2153 = vmatprep.subr.mxu0 0.0
    %2154 = vmatpush2.msra.mxu0 0.0
    %2155 = vmatprep.subr.mxu0 0.0
    %2156 = vmatpush2.msra.mxu0 0.0
    %2157 = vmatprep.mubr.f32.mxu0 0.0
    %2158 = vmatmul.mubr.f32.gmra.mxu0 %v2088
    %v2159 = vpop.f32.mrf.mxu0
    %v2160 = vadd.f32 0.0, %v2159
    %v2161 = vpop.f32.mrf.mxu0
    %2162 = vmatprep.mubr.f32.mxu0 0.0
    %2163 = vmatmul.mubr.f32.gmra.mxu0 %v2091
    %v2164 = vpop.f32.mrf.mxu0
    %v2165 = vadd.f32 0.0, %v2164
    %v2166 = vpop.f32.mrf.mxu0
    %2167 = vdwg.mxu0
    %v2168 = vadd.f32 %v1382, %v2160
    %v2169 = vadd.f32 %v1383, %v2165
    %v2170 = vld [vmem:[#allocation2 + $0x668] sm:$0xff]
    %v2171 = vld [vmem:[#allocation2 + $0x670] sm:$0xff]
    %v2172 = vadd.f32 %v2168, %v2170
    %v2173 = vadd.f32 %v2169, %v2171
    %2174 = vmatprep.subr.mxu0 0.0
    %2175 = vmatpush1.msra.mxu0 0.0
    %2176 = vmatprep.subr.mxu0 0.0
    %2177 = vmatpush1.msra.mxu0 0.0
    %2178 = vmatprep.subr.mxu0 0.0
    %2179 = vmatpush1.msra.mxu0 0.0
    %2180 = vmatprep.subr.mxu0 0.0
    %2181 = vmatpush1.msra.mxu0 0.0
    %2182 = vmatprep.subr.mxu0 0.0
    %2183 = vmatpush1.msra.mxu0 0.0
    %2184 = vmatprep.subr.mxu0 0.0
    %2185 = vmatpush1.msra.mxu0 0.0
    %2186 = vmatprep.subr.mxu0 0.0
    %2187 = vmatpush1.msra.mxu0 0.0
    %2188 = vmatprep.subr.mxu0 0.0
    %2189 = vmatpush1.msra.mxu0 0.0
    %2190 = vmatprep.subr.mxu0 0.0
    %2191 = vmatpush1.msra.mxu0 0.0
    %2192 = vmatprep.subr.mxu0 0.0
    %2193 = vmatpush1.msra.mxu0 0.0
    %2194 = vmatprep.subr.mxu0 0.0
    %2195 = vmatpush1.msra.mxu0 0.0
    %2196 = vmatprep.subr.mxu0 0.0
    %2197 = vmatpush1.msra.mxu0 0.0
    %2198 = vmatprep.subr.mxu0 0.0
    %2199 = vmatpush1.msra.mxu0 0.0
    %2200 = vmatprep.subr.mxu0 0.0
    %2201 = vmatpush1.msra.mxu0 0.0
    %2202 = vmatprep.subr.mxu0 0.0
    %2203 = vmatpush1.msra.mxu0 %v2079
    %2204 = vmatprep.subr.mxu0 0.0
    %2205 = vmatpush1.msra.mxu0 %v2078
    %2206 = vmatprep.subr.mxu0 0.0
    %2207 = vmatpush2.msra.mxu0 0.0
    %2208 = vmatprep.subr.mxu0 0.0
    %2209 = vmatpush2.msra.mxu0 0.0
    %2210 = vmatprep.subr.mxu0 0.0
    %2211 = vmatpush2.msra.mxu0 0.0
    %2212 = vmatprep.subr.mxu0 0.0
    %2213 = vmatpush2.msra.mxu0 0.0
    %2214 = vmatprep.subr.mxu0 0.0
    %2215 = vmatpush2.msra.mxu0 0.0
    %2216 = vmatprep.subr.mxu0 0.0
    %2217 = vmatpush2.msra.mxu0 0.0
    %2218 = vmatprep.subr.mxu0 0.0
    %2219 = vmatpush2.msra.mxu0 0.0
    %2220 = vmatprep.subr.mxu0 0.0
    %2221 = vmatpush2.msra.mxu0 0.0
    %2222 = vmatprep.subr.mxu0 0.0
    %2223 = vmatpush2.msra.mxu0 0.0
    %2224 = vmatprep.subr.mxu0 0.0
    %2225 = vmatpush2.msra.mxu0 0.0
    %2226 = vmatprep.subr.mxu0 0.0
    %2227 = vmatpush2.msra.mxu0 0.0
    %2228 = vmatprep.subr.mxu0 0.0
    %2229 = vmatpush2.msra.mxu0 0.0
    %2230 = vmatprep.subr.mxu0 0.0
    %2231 = vmatpush2.msra.mxu0 0.0
    %2232 = vmatprep.subr.mxu0 0.0
    %2233 = vmatpush2.msra.mxu0 0.0
    %2234 = vmatprep.subr.mxu0 0.0
    %2235 = vmatpush2.msra.mxu0 0.0
    %2236 = vmatprep.subr.mxu0 0.0
    %2237 = vmatpush2.msra.mxu0 0.0
    %2238 = vmatprep.mubr.f32.mxu0 0.0
    %2239 = vmatmul.mubr.f32.gmra.mxu0 %v565
    %v2240 = vpop.f32.mrf.mxu0
    %v2241 = vadd.f32 0.0, %v2240
    %v2242 = vpop.f32.mrf.mxu0
    %2243 = vmatprep.mubr.f32.mxu0 0.0
    %2244 = vmatmul.mubr.f32.gmra.mxu0 %v568
    %v2245 = vpop.f32.mrf.mxu0
    %v2246 = vadd.f32 0.0, %v2245
    %v2247 = vpop.f32.mrf.mxu0
    %2248 = vdwg.mxu0
    %2249 = vmatprep.subr.mxu0 0.0
    %2250 = vmatpush1.msra.mxu0 0.0
    %2251 = vmatprep.subr.mxu0 0.0
    %2252 = vmatpush1.msra.mxu0 0.0
    %2253 = vmatprep.subr.mxu0 0.0
    %2254 = vmatpush1.msra.mxu0 0.0
    %2255 = vmatprep.subr.mxu0 0.0
    %2256 = vmatpush1.msra.mxu0 0.0
    %2257 = vmatprep.subr.mxu0 0.0
    %2258 = vmatpush1.msra.mxu0 0.0
    %2259 = vmatprep.subr.mxu0 0.0
    %2260 = vmatpush1.msra.mxu0 0.0
    %2261 = vmatprep.subr.mxu0 0.0
    %2262 = vmatpush1.msra.mxu0 0.0
    %2263 = vmatprep.subr.mxu0 0.0
    %2264 = vmatpush1.msra.mxu0 0.0
    %2265 = vmatprep.subr.mxu0 0.0
    %2266 = vmatpush1.msra.mxu0 0.0
    %2267 = vmatprep.subr.mxu0 0.0
    %2268 = vmatpush1.msra.mxu0 0.0
    %2269 = vmatprep.subr.mxu0 0.0
    %2270 = vmatpush1.msra.mxu0 0.0
    %2271 = vmatprep.subr.mxu0 0.0
    %2272 = vmatpush1.msra.mxu0 0.0
    %2273 = vmatprep.subr.mxu0 0.0
    %2274 = vmatpush1.msra.mxu0 0.0
    %2275 = vmatprep.subr.mxu0 0.0
    %2276 = vmatpush1.msra.mxu0 0.0
    %2277 = vmatprep.subr.mxu0 0.0
    %2278 = vmatpush1.msra.mxu0 %v2246
    %2279 = vmatprep.subr.mxu0 0.0
    %2280 = vmatpush1.msra.mxu0 %v2241
    %2281 = vmatprep.subr.mxu0 0.0
    %2282 = vmatpush2.msra.mxu0 0.0
    %2283 = vmatprep.subr.mxu0 0.0
    %2284 = vmatpush2.msra.mxu0 0.0
    %2285 = vmatprep.subr.mxu0 0.0
    %2286 = vmatpush2.msra.mxu0 0.0
    %2287 = vmatprep.subr.mxu0 0.0
    %2288 = vmatpush2.msra.mxu0 0.0
    %2289 = vmatprep.subr.mxu0 0.0
    %2290 = vmatpush2.msra.mxu0 0.0
    %2291 = vmatprep.subr.mxu0 0.0
    %2292 = vmatpush2.msra.mxu0 0.0
    %2293 = vmatprep.subr.mxu0 0.0
    %2294 = vmatpush2.msra.mxu0 0.0
    %2295 = vmatprep.subr.mxu0 0.0
    %2296 = vmatpush2.msra.mxu0 0.0
    %2297 = vmatprep.subr.mxu0 0.0
    %2298 = vmatpush2.msra.mxu0 0.0
    %2299 = vmatprep.subr.mxu0 0.0
    %2300 = vmatpush2.msra.mxu0 0.0
    %2301 = vmatprep.subr.mxu0 0.0
    %2302 = vmatpush2.msra.mxu0 0.0
    %2303 = vmatprep.subr.mxu0 0.0
    %2304 = vmatpush2.msra.mxu0 0.0
    %2305 = vmatprep.subr.mxu0 0.0
    %2306 = vmatpush2.msra.mxu0 0.0
    %2307 = vmatprep.subr.mxu0 0.0
    %2308 = vmatpush2.msra.mxu0 0.0
    %2309 = vmatprep.subr.mxu0 0.0
    %2310 = vmatpush2.msra.mxu0 0.0
    %2311 = vmatprep.subr.mxu0 0.0
    %2312 = vmatpush2.msra.mxu0 0.0
    %2313 = vmatprep.mubr.f32.mxu0 0.0
    %2314 = vmatmul.mubr.f32.gmra.mxu0 %v565
    %v2315 = vpop.f32.mrf.mxu0
    %v2316 = vadd.f32 0.0, %v2315
    %v2317 = vpop.f32.mrf.mxu0
    %2318 = vmatprep.mubr.f32.mxu0 0.0
    %2319 = vmatmul.mubr.f32.gmra.mxu0 %v568
    %v2320 = vpop.f32.mrf.mxu0
    %v2321 = vadd.f32 0.0, %v2320
    %v2322 = vpop.f32.mrf.mxu0
    %2323 = vdwg.mxu0
    %v2324 = vld [vmem:[#allocation2 + $0x678] sm:$0xff]
    %v2325 = vld [vmem:[#allocation2 + $0x680] sm:$0xff]
    %v2326 = vld [vmem:[#allocation2 + $0x688] sm:$0xff]
    %v2327 = vld [vmem:[#allocation2 + $0x690] sm:$0xff]
    %v2328 = vld [vmem:[#allocation2 + $0x698] sm:$0xff]
    %v2329 = vld [vmem:[#allocation2 + $0x6a0] sm:$0xff]
    %v2330 = vld [vmem:[#allocation2 + $0x6a8] sm:$0xff]
    %v2331 = vld [vmem:[#allocation2 + $0x6b0] sm:$0xff]
    %v2332 = vld [vmem:[#allocation2 + $0x6b8] sm:$0xff]
    %v2333 = vld [vmem:[#allocation2 + $0x6c0] sm:$0xff]
    %v2334 = vld [vmem:[#allocation2 + $0x6c8] sm:$0xff]
    %v2335 = vld [vmem:[#allocation2 + $0x6d0] sm:$0xff]
    %v2337 = vsel %vm2086, %v2241, 0
    %v2340 = vsel %vm2086, %v2246, 0
    %2342 = vmatprep.subr.mxu0 0.0
    %2343 = vmatpush1.msra.mxu0 0.0
    %2344 = vmatprep.subr.mxu0 0.0
    %2345 = vmatpush1.msra.mxu0 0.0
    %2346 = vmatprep.subr.mxu0 0.0
    %2347 = vmatpush1.msra.mxu0 0.0
    %2348 = vmatprep.subr.mxu0 0.0
    %2349 = vmatpush1.msra.mxu0 0.0
    %2350 = vmatprep.subr.mxu0 0.0
    %2351 = vmatpush1.msra.mxu0 0.0
    %2352 = vmatprep.subr.mxu0 0.0
    %2353 = vmatpush1.msra.mxu0 0.0
    %2354 = vmatprep.subr.mxu0 0.0
    %2355 = vmatpush1.msra.mxu0 0.0
    %2356 = vmatprep.subr.mxu0 0.0
    %2357 = vmatpush1.msra.mxu0 0.0
    %2358 = vmatprep.subr.mxu0 0.0
    %2359 = vmatpush1.msra.mxu0 0.0
    %2360 = vmatprep.subr.mxu0 0.0
    %2361 = vmatpush1.msra.mxu0 0.0
    %2362 = vmatprep.subr.mxu0 0.0
    %2363 = vmatpush1.msra.mxu0 %v2335
    %2364 = vmatprep.subr.mxu0 0.0
    %2365 = vmatpush1.msra.mxu0 %v2334
    %2366 = vmatprep.subr.mxu0 0.0
    %2367 = vmatpush1.msra.mxu0 %v2333
    %2368 = vmatprep.subr.mxu0 0.0
    %2369 = vmatpush1.msra.mxu0 %v2332
    %2370 = vmatprep.subr.mxu0 0.0
    %2371 = vmatpush1.msra.mxu0 %v2331
    %2372 = vmatprep.subr.mxu0 0.0
    %2373 = vmatpush1.msra.mxu0 %v2330
    %2374 = vmatprep.subr.mxu0 0.0
    %2375 = vmatpush2.msra.mxu0 0.0
    %2376 = vmatprep.subr.mxu0 0.0
    %2377 = vmatpush2.msra.mxu0 0.0
    %2378 = vmatprep.subr.mxu0 0.0
    %2379 = vmatpush2.msra.mxu0 0.0
    %2380 = vmatprep.subr.mxu0 0.0
    %2381 = vmatpush2.msra.mxu0 0.0
    %2382 = vmatprep.subr.mxu0 0.0
    %2383 = vmatpush2.msra.mxu0 0.0
    %2384 = vmatprep.subr.mxu0 0.0
    %2385 = vmatpush2.msra.mxu0 0.0
    %2386 = vmatprep.subr.mxu0 0.0
    %2387 = vmatpush2.msra.mxu0 0.0
    %2388 = vmatprep.subr.mxu0 0.0
    %2389 = vmatpush2.msra.mxu0 0.0
    %2390 = vmatprep.subr.mxu0 0.0
    %2391 = vmatpush2.msra.mxu0 0.0
    %2392 = vmatprep.subr.mxu0 0.0
    %2393 = vmatpush2.msra.mxu0 0.0
    %2394 = vmatprep.subr.mxu0 0.0
    %2395 = vmatpush2.msra.mxu0 0.0
    %2396 = vmatprep.subr.mxu0 0.0
    %2397 = vmatpush2.msra.mxu0 0.0
    %2398 = vmatprep.subr.mxu0 0.0
    %2399 = vmatpush2.msra.mxu0 0.0
    %2400 = vmatprep.subr.mxu0 0.0
    %2401 = vmatpush2.msra.mxu0 0.0
    %2402 = vmatprep.subr.mxu0 0.0
    %2403 = vmatpush2.msra.mxu0 0.0
    %2404 = vmatprep.subr.mxu0 0.0
    %2405 = vmatpush2.msra.mxu0 0.0
    %2406 = vmatprep.mubr.f32.mxu0 0.0
    %2407 = vmatmul.mubr.f32.gmra.mxu0 %v2337
    %v2408 = vpop.f32.mrf.mxu0
    %v2409 = vadd.f32 0.0, %v2408
    %v2410 = vpop.f32.mrf.mxu0
    %2411 = vmatprep.mubr.f32.mxu0 0.0
    %2412 = vmatmul.mubr.f32.gmra.mxu0 %v2340
    %v2413 = vpop.f32.mrf.mxu0
    %v2414 = vadd.f32 0.0, %v2413
    %v2415 = vpop.f32.mrf.mxu0
    %2416 = vdwg.mxu0
    %2417 = vmatprep.subr.mxu0 0.0
    %2418 = vmatpush1.msra.mxu0 0.0
    %2419 = vmatprep.subr.mxu0 0.0
    %2420 = vmatpush1.msra.mxu0 0.0
    %2421 = vmatprep.subr.mxu0 0.0
    %2422 = vmatpush1.msra.mxu0 0.0
    %2423 = vmatprep.subr.mxu0 0.0
    %2424 = vmatpush1.msra.mxu0 0.0
    %2425 = vmatprep.subr.mxu0 0.0
    %2426 = vmatpush1.msra.mxu0 0.0
    %2427 = vmatprep.subr.mxu0 0.0
    %2428 = vmatpush1.msra.mxu0 0.0
    %2429 = vmatprep.subr.mxu0 0.0
    %2430 = vmatpush1.msra.mxu0 0.0
    %2431 = vmatprep.subr.mxu0 0.0
    %2432 = vmatpush1.msra.mxu0 0.0
    %2433 = vmatprep.subr.mxu0 0.0
    %2434 = vmatpush1.msra.mxu0 0.0
    %2435 = vmatprep.subr.mxu0 0.0
    %2436 = vmatpush1.msra.mxu0 0.0
    %2437 = vmatprep.subr.mxu0 0.0
    %2438 = vmatpush1.msra.mxu0 %v2329
    %2439 = vmatprep.subr.mxu0 0.0
    %2440 = vmatpush1.msra.mxu0 %v2328
    %2441 = vmatprep.subr.mxu0 0.0
    %2442 = vmatpush1.msra.mxu0 %v2327
    %2443 = vmatprep.subr.mxu0 0.0
    %2444 = vmatpush1.msra.mxu0 %v2326
    %2445 = vmatprep.subr.mxu0 0.0
    %2446 = vmatpush1.msra.mxu0 %v2325
    %2447 = vmatprep.subr.mxu0 0.0
    %2448 = vmatpush1.msra.mxu0 %v2324
    %2449 = vmatprep.subr.mxu0 0.0
    %2450 = vmatpush2.msra.mxu0 0.0
    %2451 = vmatprep.subr.mxu0 0.0
    %2452 = vmatpush2.msra.mxu0 0.0
    %2453 = vmatprep.subr.mxu0 0.0
    %2454 = vmatpush2.msra.mxu0 0.0
    %2455 = vmatprep.subr.mxu0 0.0
    %2456 = vmatpush2.msra.mxu0 0.0
    %2457 = vmatprep.subr.mxu0 0.0
    %2458 = vmatpush2.msra.mxu0 0.0
    %2459 = vmatprep.subr.mxu0 0.0
    %2460 = vmatpush2.msra.mxu0 0.0
    %2461 = vmatprep.subr.mxu0 0.0
    %2462 = vmatpush2.msra.mxu0 0.0
    %2463 = vmatprep.subr.mxu0 0.0
    %2464 = vmatpush2.msra.mxu0 0.0
    %2465 = vmatprep.subr.mxu0 0.0
    %2466 = vmatpush2.msra.mxu0 0.0
    %2467 = vmatprep.subr.mxu0 0.0
    %2468 = vmatpush2.msra.mxu0 0.0
    %2469 = vmatprep.subr.mxu0 0.0
    %2470 = vmatpush2.msra.mxu0 0.0
    %2471 = vmatprep.subr.mxu0 0.0
    %2472 = vmatpush2.msra.mxu0 0.0
    %2473 = vmatprep.subr.mxu0 0.0
    %2474 = vmatpush2.msra.mxu0 0.0
    %2475 = vmatprep.subr.mxu0 0.0
    %2476 = vmatpush2.msra.mxu0 0.0
    %2477 = vmatprep.subr.mxu0 0.0
    %2478 = vmatpush2.msra.mxu0 0.0
    %2479 = vmatprep.subr.mxu0 0.0
    %2480 = vmatpush2.msra.mxu0 0.0
    %2481 = vmatprep.mubr.f32.mxu0 0.0
    %2482 = vmatmul.mubr.f32.gmra.mxu0 %v2088
    %v2483 = vpop.f32.mrf.mxu0
    %v2484 = vadd.f32 %v2409, %v2483
    %v2485 = vpop.f32.mrf.mxu0
    %2486 = vmatprep.mubr.f32.mxu0 0.0
    %2487 = vmatmul.mubr.f32.gmra.mxu0 %v2091
    %v2488 = vpop.f32.mrf.mxu0
    %v2489 = vadd.f32 %v2414, %v2488
    %v2490 = vpop.f32.mrf.mxu0
    %2491 = vdwg.mxu0
    %v2492 = vld [vmem:[#allocation2 + $0x6d8] sm:$0xff]
    %v2493 = vld [vmem:[#allocation2 + $0x6e0] sm:$0xff]
    %v2494 = vld [vmem:[#allocation2 + $0x6e8] sm:$0xff]
    %v2495 = vld [vmem:[#allocation2 + $0x6f0] sm:$0xff]
    %v2496 = vld [vmem:[#allocation2 + $0x6f8] sm:$0xff]
    %v2497 = vld [vmem:[#allocation2 + $0x700] sm:$0xff]
    %v2499 = vsel %vm2086, %v2316, 0
    %v2502 = vsel %vm2086, %v2321, 0
    %2504 = vmatprep.subr.mxu0 0.0
    %2505 = vmatpush1.msra.mxu0 0.0
    %2506 = vmatprep.subr.mxu0 0.0
    %2507 = vmatpush1.msra.mxu0 0.0
    %2508 = vmatprep.subr.mxu0 0.0
    %2509 = vmatpush1.msra.mxu0 0.0
    %2510 = vmatprep.subr.mxu0 0.0
    %2511 = vmatpush1.msra.mxu0 0.0
    %2512 = vmatprep.subr.mxu0 0.0
    %2513 = vmatpush1.msra.mxu0 0.0
    %2514 = vmatprep.subr.mxu0 0.0
    %2515 = vmatpush1.msra.mxu0 0.0
    %2516 = vmatprep.subr.mxu0 0.0
    %2517 = vmatpush1.msra.mxu0 0.0
    %2518 = vmatprep.subr.mxu0 0.0
    %2519 = vmatpush1.msra.mxu0 0.0
    %2520 = vmatprep.subr.mxu0 0.0
    %2521 = vmatpush1.msra.mxu0 0.0
    %2522 = vmatprep.subr.mxu0 0.0
    %2523 = vmatpush1.msra.mxu0 0.0
    %2524 = vmatprep.subr.mxu0 0.0
    %2525 = vmatpush1.msra.mxu0 %v2497
    %2526 = vmatprep.subr.mxu0 0.0
    %2527 = vmatpush1.msra.mxu0 %v2496
    %2528 = vmatprep.subr.mxu0 0.0
    %2529 = vmatpush1.msra.mxu0 %v2495
    %2530 = vmatprep.subr.mxu0 0.0
    %2531 = vmatpush1.msra.mxu0 %v2494
    %2532 = vmatprep.subr.mxu0 0.0
    %2533 = vmatpush1.msra.mxu0 %v2493
    %2534 = vmatprep.subr.mxu0 0.0
    %2535 = vmatpush1.msra.mxu0 %v2492
    %2536 = vmatprep.subr.mxu0 0.0
    %2537 = vmatpush2.msra.mxu0 0.0
    %2538 = vmatprep.subr.mxu0 0.0
    %2539 = vmatpush2.msra.mxu0 0.0
    %2540 = vmatprep.subr.mxu0 0.0
    %2541 = vmatpush2.msra.mxu0 0.0
    %2542 = vmatprep.subr.mxu0 0.0
    %2543 = vmatpush2.msra.mxu0 0.0
    %2544 = vmatprep.subr.mxu0 0.0
    %2545 = vmatpush2.msra.mxu0 0.0
    %2546 = vmatprep.subr.mxu0 0.0
    %2547 = vmatpush2.msra.mxu0 0.0
    %2548 = vmatprep.subr.mxu0 0.0
    %2549 = vmatpush2.msra.mxu0 0.0
    %2550 = vmatprep.subr.mxu0 0.0
    %2551 = vmatpush2.msra.mxu0 0.0
    %2552 = vmatprep.subr.mxu0 0.0
    %2553 = vmatpush2.msra.mxu0 0.0
    %2554 = vmatprep.subr.mxu0 0.0
    %2555 = vmatpush2.msra.mxu0 0.0
    %2556 = vmatprep.subr.mxu0 0.0
    %2557 = vmatpush2.msra.mxu0 0.0
    %2558 = vmatprep.subr.mxu0 0.0
    %2559 = vmatpush2.msra.mxu0 0.0
    %2560 = vmatprep.subr.mxu0 0.0
    %2561 = vmatpush2.msra.mxu0 0.0
    %2562 = vmatprep.subr.mxu0 0.0
    %2563 = vmatpush2.msra.mxu0 0.0
    %2564 = vmatprep.subr.mxu0 0.0
    %2565 = vmatpush2.msra.mxu0 0.0
    %2566 = vmatprep.subr.mxu0 0.0
    %2567 = vmatpush2.msra.mxu0 0.0
    %2568 = vmatprep.mubr.f32.mxu0 0.0
    %2569 = vmatmul.mubr.f32.gmra.mxu0 %v2499
    %v2570 = vpop.f32.mrf.mxu0
    %v2571 = vadd.f32 0.0, %v2570
    %v2572 = vpop.f32.mrf.mxu0
    %2573 = vmatprep.mubr.f32.mxu0 0.0
    %2574 = vmatmul.mubr.f32.gmra.mxu0 %v2502
    %v2575 = vpop.f32.mrf.mxu0
    %v2576 = vadd.f32 0.0, %v2575
    %v2577 = vpop.f32.mrf.mxu0
    %2578 = vdwg.mxu0
    %v2579 = vadd.f32 %v2484, %v2571
    %v2580 = vadd.f32 %v2489, %v2576
    %v2581 = vld [vmem:[#allocation2 + $0x708] sm:$0xff]
    %v2582 = vld [vmem:[#allocation2 + $0x710] sm:$0xff]
    %v2583 = vld [vmem:[#allocation2 + $0x718] sm:$0xff]
    %v2584 = vld [vmem:[#allocation2 + $0x720] sm:$0xff]
    %v2585 = vld [vmem:[#allocation2 + $0x728] sm:$0xff]
    %v2586 = vld [vmem:[#allocation2 + $0x730] sm:$0xff]
    %v2587 = vld [vmem:[#allocation2 + $0x738] sm:$0xff]
    %v2588 = vld [vmem:[#allocation2 + $0x740] sm:$0xff]
    %2589 = vmatprep.subr.mxu0 0.0
    %2590 = vmatpush1.msra.mxu0 0.0
    %2591 = vmatprep.subr.mxu0 0.0
    %2592 = vmatpush1.msra.mxu0 0.0
    %2593 = vmatprep.subr.mxu0 0.0
    %2594 = vmatpush1.msra.mxu0 0.0
    %2595 = vmatprep.subr.mxu0 0.0
    %2596 = vmatpush1.msra.mxu0 0.0
    %2597 = vmatprep.subr.mxu0 0.0
    %2598 = vmatpush1.msra.mxu0 0.0
    %2599 = vmatprep.subr.mxu0 0.0
    %2600 = vmatpush1.msra.mxu0 0.0
    %2601 = vmatprep.subr.mxu0 0.0
    %2602 = vmatpush1.msra.mxu0 0.0
    %2603 = vmatprep.subr.mxu0 0.0
    %2604 = vmatpush1.msra.mxu0 0.0
    %2605 = vmatprep.subr.mxu0 0.0
    %2606 = vmatpush1.msra.mxu0 %v2588
    %2607 = vmatprep.subr.mxu0 0.0
    %2608 = vmatpush1.msra.mxu0 %v2587
    %2609 = vmatprep.subr.mxu0 0.0
    %2610 = vmatpush1.msra.mxu0 %v2586
    %2611 = vmatprep.subr.mxu0 0.0
    %2612 = vmatpush1.msra.mxu0 %v2585
    %2613 = vmatprep.subr.mxu0 0.0
    %2614 = vmatpush1.msra.mxu0 %v2584
    %2615 = vmatprep.subr.mxu0 0.0
    %2616 = vmatpush1.msra.mxu0 %v2583
    %2617 = vmatprep.subr.mxu0 0.0
    %2618 = vmatpush1.msra.mxu0 %v2582
    %2619 = vmatprep.subr.mxu0 0.0
    %2620 = vmatpush1.msra.mxu0 %v2581
    %2621 = vmatprep.subr.mxu0 0.0
    %2622 = vmatpush2.msra.mxu0 0.0
    %2623 = vmatprep.subr.mxu0 0.0
    %2624 = vmatpush2.msra.mxu0 0.0
    %2625 = vmatprep.subr.mxu0 0.0
    %2626 = vmatpush2.msra.mxu0 0.0
    %2627 = vmatprep.subr.mxu0 0.0
    %2628 = vmatpush2.msra.mxu0 0.0
    %2629 = vmatprep.subr.mxu0 0.0
    %2630 = vmatpush2.msra.mxu0 0.0
    %2631 = vmatprep.subr.mxu0 0.0
    %2632 = vmatpush2.msra.mxu0 0.0
    %2633 = vmatprep.subr.mxu0 0.0
    %2634 = vmatpush2.msra.mxu0 0.0
    %2635 = vmatprep.subr.mxu0 0.0
    %2636 = vmatpush2.msra.mxu0 0.0
    %2637 = vmatprep.subr.mxu0 0.0
    %2638 = vmatpush2.msra.mxu0 0.0
    %2639 = vmatprep.subr.mxu0 0.0
    %2640 = vmatpush2.msra.mxu0 0.0
    %2641 = vmatprep.subr.mxu0 0.0
    %2642 = vmatpush2.msra.mxu0 0.0
    %2643 = vmatprep.subr.mxu0 0.0
    %2644 = vmatpush2.msra.mxu0 0.0
    %2645 = vmatprep.subr.mxu0 0.0
    %2646 = vmatpush2.msra.mxu0 0.0
    %2647 = vmatprep.subr.mxu0 0.0
    %2648 = vmatpush2.msra.mxu0 0.0
    %2649 = vmatprep.subr.mxu0 0.0
    %2650 = vmatpush2.msra.mxu0 0.0
    %2651 = vmatprep.subr.mxu0 0.0
    %2652 = vmatpush2.msra.mxu0 0.0
    %2653 = vmatprep.mubr.f32.mxu0 0.0
    %2654 = vmatmul.mubr.f32.gmra.mxu0 %v1901
    %v2655 = vpop.f32.mrf.mxu0
    %v2656 = vadd.f32 0.0, %v2655
    %v2657 = vpop.f32.mrf.mxu0
    %2658 = vmatprep.mubr.f32.mxu0 0.0
    %2659 = vmatmul.mubr.f32.gmra.mxu0 %v1904
    %v2660 = vpop.f32.mrf.mxu0
    %v2661 = vadd.f32 0.0, %v2660
    %v2662 = vpop.f32.mrf.mxu0
    %2663 = vdwg.mxu0
    %v2664 = vadd.f32 %v2579, %v2656
    %v2665 = vadd.f32 %v2580, %v2661
    %v2666 = vld [vmem:[#allocation2 + $0x748] sm:$0xff]
    %v2667 = vld [vmem:[#allocation2 + $0x750] sm:$0xff]
    %v2668 = vadd.f32 %v2664, %v2666
    %v2669 = vadd.f32 %v2665, %v2667
    %v2670 = vld [vmem:[#allocation2 + $0x758] sm:$0xff]
    %v2671 = vld [vmem:[#allocation2 + $0x760] sm:$0xff]
    %v2672 = vld [vmem:[#allocation2 + $0x768] sm:$0xff]
    %v2673 = vld [vmem:[#allocation2 + $0x770] sm:$0xff]
    %v2674 = vld [vmem:[#allocation2 + $0x778] sm:$0xff]
    %v2675 = vld [vmem:[#allocation2 + $0x780] sm:$0xff]
    %v2676 = vld [vmem:[#allocation2 + $0x7b8] sm:$0xff]
    %v2677 = vld [vmem:[#allocation2 + $0x7c0] sm:$0xff]
    %v2679 = vsel %vm2086, %v2668, 0
    %v2682 = vsel %vm2086, %v2669, 0
    %2684 = vmatprep.subr.mxu0 0.0
    %2685 = vmatpush1.msra.mxu0 0.0
    %2686 = vmatprep.subr.mxu0 0.0
    %2687 = vmatpush1.msra.mxu0 0.0
    %2688 = vmatprep.subr.mxu0 0.0
    %2689 = vmatpush1.msra.mxu0 0.0
    %2690 = vmatprep.subr.mxu0 0.0
    %2691 = vmatpush1.msra.mxu0 0.0
    %2692 = vmatprep.subr.mxu0 0.0
    %2693 = vmatpush1.msra.mxu0 0.0
    %2694 = vmatprep.subr.mxu0 0.0
    %2695 = vmatpush1.msra.mxu0 0.0
    %2696 = vmatprep.subr.mxu0 0.0
    %2697 = vmatpush1.msra.mxu0 0.0
    %2698 = vmatprep.subr.mxu0 0.0
    %2699 = vmatpush1.msra.mxu0 0.0
    %2700 = vmatprep.subr.mxu0 0.0
    %2701 = vmatpush1.msra.mxu0 0.0
    %2702 = vmatprep.subr.mxu0 0.0
    %2703 = vmatpush1.msra.mxu0 0.0
    %2704 = vmatprep.subr.mxu0 0.0
    %2705 = vmatpush1.msra.mxu0 %v2675
    %2706 = vmatprep.subr.mxu0 0.0
    %2707 = vmatpush1.msra.mxu0 %v2674
    %2708 = vmatprep.subr.mxu0 0.0
    %2709 = vmatpush1.msra.mxu0 %v2673
    %2710 = vmatprep.subr.mxu0 0.0
    %2711 = vmatpush1.msra.mxu0 %v2672
    %2712 = vmatprep.subr.mxu0 0.0
    %2713 = vmatpush1.msra.mxu0 %v2671
    %2714 = vmatprep.subr.mxu0 0.0
    %2715 = vmatpush1.msra.mxu0 %v2670
    %2716 = vmatprep.subr.mxu0 0.0
    %2717 = vmatpush2.msra.mxu0 0.0
    %2718 = vmatprep.subr.mxu0 0.0
    %2719 = vmatpush2.msra.mxu0 0.0
    %2720 = vmatprep.subr.mxu0 0.0
    %2721 = vmatpush2.msra.mxu0 0.0
    %2722 = vmatprep.subr.mxu0 0.0
    %2723 = vmatpush2.msra.mxu0 0.0
    %2724 = vmatprep.subr.mxu0 0.0
    %2725 = vmatpush2.msra.mxu0 0.0
    %2726 = vmatprep.subr.mxu0 0.0
    %2727 = vmatpush2.msra.mxu0 0.0
    %2728 = vmatprep.subr.mxu0 0.0
    %2729 = vmatpush2.msra.mxu0 0.0
    %2730 = vmatprep.subr.mxu0 0.0
    %2731 = vmatpush2.msra.mxu0 0.0
    %2732 = vmatprep.subr.mxu0 0.0
    %2733 = vmatpush2.msra.mxu0 0.0
    %2734 = vmatprep.subr.mxu0 0.0
    %2735 = vmatpush2.msra.mxu0 0.0
    %2736 = vmatprep.subr.mxu0 0.0
    %2737 = vmatpush2.msra.mxu0 0.0
    %2738 = vmatprep.subr.mxu0 0.0
    %2739 = vmatpush2.msra.mxu0 0.0
    %2740 = vmatprep.subr.mxu0 0.0
    %2741 = vmatpush2.msra.mxu0 0.0
    %2742 = vmatprep.subr.mxu0 0.0
    %2743 = vmatpush2.msra.mxu0 0.0
    %2744 = vmatprep.subr.mxu0 0.0
    %2745 = vmatpush2.msra.mxu0 0.0
    %2746 = vmatprep.subr.mxu0 0.0
    %2747 = vmatpush2.msra.mxu0 0.0
    %2748 = vmatprep.mubr.f32.mxu0 0.0
    %2749 = vmatmul.mubr.f32.gmra.mxu0 %v2679
    %v2750 = vpop.f32.mrf.mxu0
    %v2751 = vadd.f32 %v2676, %v2750
    %v2752 = vpop.f32.mrf.mxu0
    %2753 = vmatprep.mubr.f32.mxu0 0.0
    %2754 = vmatmul.mubr.f32.gmra.mxu0 %v2682
    %v2755 = vpop.f32.mrf.mxu0
    %v2756 = vadd.f32 %v2677, %v2755
    %v2757 = vpop.f32.mrf.mxu0
    %2758 = vdwg.mxu0
    %v2759 = vld [vmem:[#allocation2 + $0x788] sm:$0xff]
    %v2760 = vld [vmem:[#allocation2 + $0x790] sm:$0xff]
    %v2761 = vld [vmem:[#allocation2 + $0x798] sm:$0xff]
    %v2762 = vld [vmem:[#allocation2 + $0x7a0] sm:$0xff]
    %v2763 = vld [vmem:[#allocation2 + $0x7a8] sm:$0xff]
    %v2764 = vld [vmem:[#allocation2 + $0x7b0] sm:$0xff]
    %v2765 = vld [vmem:[#allocation2 + $0x7c8] sm:$0xff]
    %v2766 = vld [vmem:[#allocation2 + $0x7d0] sm:$0xff]
    %2767 = vmatprep.subr.mxu0 0.0
    %2768 = vmatpush1.msra.mxu0 0.0
    %2769 = vmatprep.subr.mxu0 0.0
    %2770 = vmatpush1.msra.mxu0 0.0
    %2771 = vmatprep.subr.mxu0 0.0
    %2772 = vmatpush1.msra.mxu0 0.0
    %2773 = vmatprep.subr.mxu0 0.0
    %2774 = vmatpush1.msra.mxu0 0.0
    %2775 = vmatprep.subr.mxu0 0.0
    %2776 = vmatpush1.msra.mxu0 0.0
    %2777 = vmatprep.subr.mxu0 0.0
    %2778 = vmatpush1.msra.mxu0 0.0
    %2779 = vmatprep.subr.mxu0 0.0
    %2780 = vmatpush1.msra.mxu0 0.0
    %2781 = vmatprep.subr.mxu0 0.0
    %2782 = vmatpush1.msra.mxu0 0.0
    %2783 = vmatprep.subr.mxu0 0.0
    %2784 = vmatpush1.msra.mxu0 0.0
    %2785 = vmatprep.subr.mxu0 0.0
    %2786 = vmatpush1.msra.mxu0 0.0
    %2787 = vmatprep.subr.mxu0 0.0
    %2788 = vmatpush1.msra.mxu0 %v2764
    %2789 = vmatprep.subr.mxu0 0.0
    %2790 = vmatpush1.msra.mxu0 %v2763
    %2791 = vmatprep.subr.mxu0 0.0
    %2792 = vmatpush1.msra.mxu0 %v2762
    %2793 = vmatprep.subr.mxu0 0.0
    %2794 = vmatpush1.msra.mxu0 %v2761
    %2795 = vmatprep.subr.mxu0 0.0
    %2796 = vmatpush1.msra.mxu0 %v2760
    %2797 = vmatprep.subr.mxu0 0.0
    %2798 = vmatpush1.msra.mxu0 %v2759
    %2799 = vmatprep.subr.mxu0 0.0
    %2800 = vmatpush2.msra.mxu0 0.0
    %2801 = vmatprep.subr.mxu0 0.0
    %2802 = vmatpush2.msra.mxu0 0.0
    %2803 = vmatprep.subr.mxu0 0.0
    %2804 = vmatpush2.msra.mxu0 0.0
    %2805 = vmatprep.subr.mxu0 0.0
    %2806 = vmatpush2.msra.mxu0 0.0
    %2807 = vmatprep.subr.mxu0 0.0
    %2808 = vmatpush2.msra.mxu0 0.0
    %2809 = vmatprep.subr.mxu0 0.0
    %2810 = vmatpush2.msra.mxu0 0.0
    %2811 = vmatprep.subr.mxu0 0.0
    %2812 = vmatpush2.msra.mxu0 0.0
    %2813 = vmatprep.subr.mxu0 0.0
    %2814 = vmatpush2.msra.mxu0 0.0
    %2815 = vmatprep.subr.mxu0 0.0
    %2816 = vmatpush2.msra.mxu0 0.0
    %2817 = vmatprep.subr.mxu0 0.0
    %2818 = vmatpush2.msra.mxu0 0.0
    %2819 = vmatprep.subr.mxu0 0.0
    %2820 = vmatpush2.msra.mxu0 0.0
    %2821 = vmatprep.subr.mxu0 0.0
    %2822 = vmatpush2.msra.mxu0 0.0
    %2823 = vmatprep.subr.mxu0 0.0
    %2824 = vmatpush2.msra.mxu0 0.0
    %2825 = vmatprep.subr.mxu0 0.0
    %2826 = vmatpush2.msra.mxu0 0.0
    %2827 = vmatprep.subr.mxu0 0.0
    %2828 = vmatpush2.msra.mxu0 0.0
    %2829 = vmatprep.subr.mxu0 0.0
    %2830 = vmatpush2.msra.mxu0 0.0
    %2831 = vmatprep.mubr.f32.mxu0 0.0
    %2832 = vmatmul.mubr.f32.gmra.mxu0 %v2679
    %v2833 = vpop.f32.mrf.mxu0
    %v2834 = vadd.f32 %v2765, %v2833
    %v2835 = vpop.f32.mrf.mxu0
    %2836 = vmatprep.mubr.f32.mxu0 0.0
    %2837 = vmatmul.mubr.f32.gmra.mxu0 %v2682
    %v2838 = vpop.f32.mrf.mxu0
    %v2839 = vadd.f32 %v2766, %v2838
    %v2840 = vpop.f32.mrf.mxu0
    %2841 = vdwg.mxu0
    %v2842 = vtanh.pop %v2751
    %v2843 = vtanh.pop %v2756
    %v2844 = vsub.f32 0.0, %v2834
    %v2845 = vsub.f32 0.0, %v2839
    %v2846 = vmul.f32 %v2844, 1.442695
    %v2847 = vpow.pop %v2846
    %v2848 = vmul.f32 %v2845, 1.442695
    %v2849 = vpow.pop %v2848
    %v2850 = vadd.f32 %v2847, 1.0
    %v2851 = vadd.f32 %v2849, 1.0
    %v2852 = vrcp.pop %v2850
    %v2853 = vrcp.pop %v2851
    %v2854 = vmul.f32 %v2842, %v2852
    %v2855 = vmul.f32 %v2843, %v2853
    %v2856 = vld [vmem:[#allocation2 + $0x7d8] sm:$0xff]
    %v2857 = vld [vmem:[#allocation2 + $0x7e0] sm:$0xff]
    %v2859 = vsel %vm563, %v2854, 0
    %v2862 = vsel %vm563, %v2855, 0
    %2864 = vmatprep.subr.mxu0 0.0
    %2865 = vmatpush1.msra.mxu0 0.0
    %2866 = vmatprep.subr.mxu0 0.0
    %2867 = vmatpush1.msra.mxu0 0.0
    %2868 = vmatprep.subr.mxu0 0.0
    %2869 = vmatpush1.msra.mxu0 0.0
    %2870 = vmatprep.subr.mxu0 0.0
    %2871 = vmatpush1.msra.mxu0 0.0
    %2872 = vmatprep.subr.mxu0 0.0
    %2873 = vmatpush1.msra.mxu0 0.0
    %2874 = vmatprep.subr.mxu0 0.0
    %2875 = vmatpush1.msra.mxu0 0.0
    %2876 = vmatprep.subr.mxu0 0.0
    %2877 = vmatpush1.msra.mxu0 0.0
    %2878 = vmatprep.subr.mxu0 0.0
    %2879 = vmatpush1.msra.mxu0 0.0
    %2880 = vmatprep.subr.mxu0 0.0
    %2881 = vmatpush1.msra.mxu0 0.0
    %2882 = vmatprep.subr.mxu0 0.0
    %2883 = vmatpush1.msra.mxu0 0.0
    %2884 = vmatprep.subr.mxu0 0.0
    %2885 = vmatpush1.msra.mxu0 0.0
    %2886 = vmatprep.subr.mxu0 0.0
    %2887 = vmatpush1.msra.mxu0 0.0
    %2888 = vmatprep.subr.mxu0 0.0
    %2889 = vmatpush1.msra.mxu0 0.0
    %2890 = vmatprep.subr.mxu0 0.0
    %2891 = vmatpush1.msra.mxu0 0.0
    %2892 = vmatprep.subr.mxu0 0.0
    %2893 = vmatpush1.msra.mxu0 %v2857
    %2894 = vmatprep.subr.mxu0 0.0
    %2895 = vmatpush1.msra.mxu0 %v2856
    %2896 = vmatprep.subr.mxu0 0.0
    %2897 = vmatpush2.msra.mxu0 0.0
    %2898 = vmatprep.subr.mxu0 0.0
    %2899 = vmatpush2.msra.mxu0 0.0
    %2900 = vmatprep.subr.mxu0 0.0
    %2901 = vmatpush2.msra.mxu0 0.0
    %2902 = vmatprep.subr.mxu0 0.0
    %2903 = vmatpush2.msra.mxu0 0.0
    %2904 = vmatprep.subr.mxu0 0.0
    %2905 = vmatpush2.msra.mxu0 0.0
    %2906 = vmatprep.subr.mxu0 0.0
    %2907 = vmatpush2.msra.mxu0 0.0
    %2908 = vmatprep.subr.mxu0 0.0
    %2909 = vmatpush2.msra.mxu0 0.0
    %2910 = vmatprep.subr.mxu0 0.0
    %2911 = vmatpush2.msra.mxu0 0.0
    %2912 = vmatprep.subr.mxu0 0.0
    %2913 = vmatpush2.msra.mxu0 0.0
    %2914 = vmatprep.subr.mxu0 0.0
    %2915 = vmatpush2.msra.mxu0 0.0
    %2916 = vmatprep.subr.mxu0 0.0
    %2917 = vmatpush2.msra.mxu0 0.0
    %2918 = vmatprep.subr.mxu0 0.0
    %2919 = vmatpush2.msra.mxu0 0.0
    %2920 = vmatprep.subr.mxu0 0.0
    %2921 = vmatpush2.msra.mxu0 0.0
    %2922 = vmatprep.subr.mxu0 0.0
    %2923 = vmatpush2.msra.mxu0 0.0
    %2924 = vmatprep.subr.mxu0 0.0
    %2925 = vmatpush2.msra.mxu0 0.0
    %2926 = vmatprep.subr.mxu0 0.0
    %2927 = vmatpush2.msra.mxu0 0.0
    %2928 = vmatprep.mubr.f32.mxu0 0.0
    %2929 = vmatmul.mubr.f32.gmra.mxu0 %v2859
    %v2930 = vpop.f32.mrf.mxu0
    %v2931 = vadd.f32 0.0, %v2930
    %v2932 = vpop.f32.mrf.mxu0
    %2933 = vmatprep.mubr.f32.mxu0 0.0
    %2934 = vmatmul.mubr.f32.gmra.mxu0 %v2862
    %v2935 = vpop.f32.mrf.mxu0
    %v2936 = vadd.f32 0.0, %v2935
    %v2937 = vpop.f32.mrf.mxu0
    %2938 = vdwg.mxu0
    %v2939 = vadd.f32 %v2172, %v2931
    %v2940 = vadd.f32 %v2173, %v2936
    %v2941 = vld [vmem:[#allocation2 + $0x7e8] sm:$0xff]
    %v2942 = vld [vmem:[#allocation2 + $0x7f0] sm:$0xff]
    %v2943 = vadd.f32 %v2939, %v2941
    %v2944 = vadd.f32 %v2940, %v2942
    %v2945 = vmax.f32 %v2943, 0.0
    %v2946 = vmax.f32 %v2944, 0.0
    %v2947 = vld [vmem:[#allocation2 + $0x7f8] sm:$0xff]
    %v2948 = vld [vmem:[#allocation2 + $0x800] sm:$0xff]
    %v2949 = vld [vmem:[#allocation2 + $0x808] sm:$0xff]
    %v2950 = vld [vmem:[#allocation2 + $0x810] sm:$0xff]
    %v2951 = vld [vmem:[#allocation2 + $0x818] sm:$0xff]
    %v2952 = vld [vmem:[#allocation2 + $0x820] sm:$0xff]
    %vm2953 = vcmask 261120
    %v2955 = vsel %vm2953, %v2945, 0
    %v2958 = vsel %vm2953, %v2946, 0
    %2960 = vmatprep.subr.mxu0 0.0
    %2961 = vmatpush1.msra.mxu0 0.0
    %2962 = vmatprep.subr.mxu0 0.0
    %2963 = vmatpush1.msra.mxu0 0.0
    %2964 = vmatprep.subr.mxu0 0.0
    %2965 = vmatpush1.msra.mxu0 0.0
    %2966 = vmatprep.subr.mxu0 0.0
    %2967 = vmatpush1.msra.mxu0 0.0
    %2968 = vmatprep.subr.mxu0 0.0
    %2969 = vmatpush1.msra.mxu0 0.0
    %2970 = vmatprep.subr.mxu0 0.0
    %2971 = vmatpush1.msra.mxu0 0.0
    %2972 = vmatprep.subr.mxu0 0.0
    %2973 = vmatpush1.msra.mxu0 0.0
    %2974 = vmatprep.subr.mxu0 0.0
    %2975 = vmatpush1.msra.mxu0 0.0
    %2976 = vmatprep.subr.mxu0 0.0
    %2977 = vmatpush1.msra.mxu0 0.0
    %2978 = vmatprep.subr.mxu0 0.0
    %2979 = vmatpush1.msra.mxu0 0.0
    %2980 = vmatprep.subr.mxu0 0.0
    %2981 = vmatpush1.msra.mxu0 0.0
    %2982 = vmatprep.subr.mxu0 0.0
    %2983 = vmatpush1.msra.mxu0 0.0
    %2984 = vmatprep.subr.mxu0 0.0
    %2985 = vmatpush1.msra.mxu0 %v2950
    %2986 = vmatprep.subr.mxu0 0.0
    %2987 = vmatpush1.msra.mxu0 %v2949
    %2988 = vmatprep.subr.mxu0 0.0
    %2989 = vmatpush1.msra.mxu0 %v2948
    %2990 = vmatprep.subr.mxu0 0.0
    %2991 = vmatpush1.msra.mxu0 %v2947
    %2992 = vmatprep.subr.mxu0 0.0
    %2993 = vmatpush2.msra.mxu0 0.0
    %2994 = vmatprep.subr.mxu0 0.0
    %2995 = vmatpush2.msra.mxu0 0.0
    %2996 = vmatprep.subr.mxu0 0.0
    %2997 = vmatpush2.msra.mxu0 0.0
    %2998 = vmatprep.subr.mxu0 0.0
    %2999 = vmatpush2.msra.mxu0 0.0
    %3000 = vmatprep.subr.mxu0 0.0
    %3001 = vmatpush2.msra.mxu0 0.0
    %3002 = vmatprep.subr.mxu0 0.0
    %3003 = vmatpush2.msra.mxu0 0.0
    %3004 = vmatprep.subr.mxu0 0.0
    %3005 = vmatpush2.msra.mxu0 0.0
    %3006 = vmatprep.subr.mxu0 0.0
    %3007 = vmatpush2.msra.mxu0 0.0
    %3008 = vmatprep.subr.mxu0 0.0
    %3009 = vmatpush2.msra.mxu0 0.0
    %3010 = vmatprep.subr.mxu0 0.0
    %3011 = vmatpush2.msra.mxu0 0.0
    %3012 = vmatprep.subr.mxu0 0.0
    %3013 = vmatpush2.msra.mxu0 0.0
    %3014 = vmatprep.subr.mxu0 0.0
    %3015 = vmatpush2.msra.mxu0 0.0
    %3016 = vmatprep.subr.mxu0 0.0
    %3017 = vmatpush2.msra.mxu0 0.0
    %3018 = vmatprep.subr.mxu0 0.0
    %3019 = vmatpush2.msra.mxu0 0.0
    %3020 = vmatprep.subr.mxu0 0.0
    %3021 = vmatpush2.msra.mxu0 0.0
    %3022 = vmatprep.subr.mxu0 0.0
    %3023 = vmatpush2.msra.mxu0 0.0
    %3024 = vmatprep.mubr.f32.mxu0 0.0
    %3025 = vmatmul.mubr.f32.gmra.mxu0 %v2955
    %v3026 = vpop.f32.mrf.mxu0
    %v3027 = vadd.f32 %v2951, %v3026
    %v3028 = vpop.f32.mrf.mxu0
    %3029 = vmatprep.mubr.f32.mxu0 0.0
    %3030 = vmatmul.mubr.f32.gmra.mxu0 %v2958
    %v3031 = vpop.f32.mrf.mxu0
    %v3032 = vadd.f32 %v2952, %v3031
    %v3033 = vpop.f32.mrf.mxu0
    %3034 = vdwg.mxu0
    %v3035 = vmax.f32 %v3027, 0.0
    %v3036 = vmax.f32 %v3032, 0.0
    %v3037 = vld [vmem:[#allocation2 + $0x828] sm:$0xff]
    %v3038 = vld [vmem:[#allocation2 + $0x830] sm:$0xff]
    %v3039 = vld [vmem:[#allocation2 + $0x838] sm:$0xff]
    %v3040 = vld [vmem:[#allocation2 + $0x840] sm:$0xff]
    %v3041 = vld [vmem:[#allocation2 + $0x848] sm:$0xff]
    %v3042 = vld [vmem:[#allocation2 + $0x850] sm:$0xff]
    %v3044 = vsel %vm2953, %v3035, 0
    %v3047 = vsel %vm2953, %v3036, 0
    %3049 = vmatprep.subr.mxu0 0.0
    %3050 = vmatpush1.msra.mxu0 0.0
    %3051 = vmatprep.subr.mxu0 0.0
    %3052 = vmatpush1.msra.mxu0 0.0
    %3053 = vmatprep.subr.mxu0 0.0
    %3054 = vmatpush1.msra.mxu0 0.0
    %3055 = vmatprep.subr.mxu0 0.0
    %3056 = vmatpush1.msra.mxu0 0.0
    %3057 = vmatprep.subr.mxu0 0.0
    %3058 = vmatpush1.msra.mxu0 0.0
    %3059 = vmatprep.subr.mxu0 0.0
    %3060 = vmatpush1.msra.mxu0 0.0
    %3061 = vmatprep.subr.mxu0 0.0
    %3062 = vmatpush1.msra.mxu0 0.0
    %3063 = vmatprep.subr.mxu0 0.0
    %3064 = vmatpush1.msra.mxu0 0.0
    %3065 = vmatprep.subr.mxu0 0.0
    %3066 = vmatpush1.msra.mxu0 0.0
    %3067 = vmatprep.subr.mxu0 0.0
    %3068 = vmatpush1.msra.mxu0 0.0
    %3069 = vmatprep.subr.mxu0 0.0
    %3070 = vmatpush1.msra.mxu0 0.0
    %3071 = vmatprep.subr.mxu0 0.0
    %3072 = vmatpush1.msra.mxu0 0.0
    %3073 = vmatprep.subr.mxu0 0.0
    %3074 = vmatpush1.msra.mxu0 %v3040
    %3075 = vmatprep.subr.mxu0 0.0
    %3076 = vmatpush1.msra.mxu0 %v3039
    %3077 = vmatprep.subr.mxu0 0.0
    %3078 = vmatpush1.msra.mxu0 %v3038
    %3079 = vmatprep.subr.mxu0 0.0
    %3080 = vmatpush1.msra.mxu0 %v3037
    %3081 = vmatprep.subr.mxu0 0.0
    %3082 = vmatpush2.msra.mxu0 0.0
    %3083 = vmatprep.subr.mxu0 0.0
    %3084 = vmatpush2.msra.mxu0 0.0
    %3085 = vmatprep.subr.mxu0 0.0
    %3086 = vmatpush2.msra.mxu0 0.0
    %3087 = vmatprep.subr.mxu0 0.0
    %3088 = vmatpush2.msra.mxu0 0.0
    %3089 = vmatprep.subr.mxu0 0.0
    %3090 = vmatpush2.msra.mxu0 0.0
    %3091 = vmatprep.subr.mxu0 0.0
    %3092 = vmatpush2.msra.mxu0 0.0
    %3093 = vmatprep.subr.mxu0 0.0
    %3094 = vmatpush2.msra.mxu0 0.0
    %3095 = vmatprep.subr.mxu0 0.0
    %3096 = vmatpush2.msra.mxu0 0.0
    %3097 = vmatprep.subr.mxu0 0.0
    %3098 = vmatpush2.msra.mxu0 0.0
    %3099 = vmatprep.subr.mxu0 0.0
    %3100 = vmatpush2.msra.mxu0 0.0
    %3101 = vmatprep.subr.mxu0 0.0
    %3102 = vmatpush2.msra.mxu0 0.0
    %3103 = vmatprep.subr.mxu0 0.0
    %3104 = vmatpush2.msra.mxu0 0.0
    %3105 = vmatprep.subr.mxu0 0.0
    %3106 = vmatpush2.msra.mxu0 0.0
    %3107 = vmatprep.subr.mxu0 0.0
    %3108 = vmatpush2.msra.mxu0 0.0
    %3109 = vmatprep.subr.mxu0 0.0
    %3110 = vmatpush2.msra.mxu0 0.0
    %3111 = vmatprep.subr.mxu0 0.0
    %3112 = vmatpush2.msra.mxu0 0.0
    %3113 = vmatprep.mubr.f32.mxu0 0.0
    %3114 = vmatmul.mubr.f32.gmra.mxu0 %v3044
    %v3115 = vpop.f32.mrf.mxu0
    %v3116 = vadd.f32 %v3041, %v3115
    %v3117 = vpop.f32.mrf.mxu0
    %3118 = vmatprep.mubr.f32.mxu0 0.0
    %3119 = vmatmul.mubr.f32.gmra.mxu0 %v3047
    %v3120 = vpop.f32.mrf.mxu0
    %v3121 = vadd.f32 %v3042, %v3120
    %v3122 = vpop.f32.mrf.mxu0
    %3123 = vdwg.mxu0
    %v3124 = vmul.f32 %v3116, %v164
    %v3125 = vmul.f32 %v3121, %v171
    %v3126 = vadd.f32 %v3124, %v142
    %v3127 = vadd.f32 %v3125, %v143
    %3128 = vst.msk [vmem:[%s2] sm:$0xff] %vm27, %v3126
    %3129 = vst.msk [vmem:[%s2 + $0x8] sm:$0xff] %vm27, %v3127
    // Predicated region
    $region14: #{gwnet_forward.1} parent=1 // pred_check
      _
    $region15: #{gwnet_forward.1} parent=1 // pred_check_branch
      %3131 = sbr.rel (0) target = $region17
    $region16: #{gwnet_forward.1} parent=1 // pred_region
      _
    $region17: #{gwnet_forward.1} parent=1 // pred_fallthru
      _
    // Predicated region
    $region18: #{gwnet_forward.1} parent=1 // pred_check
      _
    $region19: #{gwnet_forward.1} parent=1 // pred_check_branch
      %3133 = sbr.rel (0) target = $region21
    $region20: #{gwnet_forward.1} parent=1 // pred_region
      _
    $region21: #{gwnet_forward.1} parent=1 // pred_fallthru
      _
    %3134 = vsyncpa [#allocation3], 1

</llo_original>
